<compile_context>
chip_gen: v6e
topology: v6e:2x2x1
jax: 0.10.0
libtpu: 0.0.40
codegen_flags: <defaults>
</compile_context>

<pallas_src>
import jax
import jax.numpy as jnp
from jax.experimental import pallas as pl
from jax.experimental.pallas import tpu as pltpu


def _attention_kernel(xq_ref, xkv_ref, wq_ref, wk_ref, wv_ref, wo_ref, bo_ref,
                      o_ref, q_sc, m_sc, l_sc, acc_sc):
    # xq_ref : (TQ, C)   query rows of the current (batch, q-tile)
    # xkv_ref: (TK, C)   key/value rows of the current kv tile
    # wq_ref, wk_ref, wv_ref: (H, C, hd)  per-head projection weights (bf16,
    #                                     scale already folded into wq)
    # wo_ref : (H, hd, C) per-head output-projection weights (bf16)
    # bo_ref : (1, C)     output-projection bias (f32)
    # o_ref  : (TQ, C)
    # scratch: q_sc (H,TQ,hd) bf16, m_sc/l_sc (H,TQ,1) f32, acc_sc (H,TQ,hd) f32
    H, C, hd = wq_ref.shape
    TQ = xq_ref.shape[0]
    TK = xkv_ref.shape[0]

    ki = pl.program_id(2)
    nk = pl.num_programs(2)

    @pl.when(ki == 0)
    def _init():
        # q projection once per (b, q-tile); scale pre-folded into wq.
        xq = xq_ref[...].astype(jnp.bfloat16)                       # (TQ, C)
        xq_b = jnp.broadcast_to(xq[None], (H, TQ, C))               # (H, TQ, C)
        q = jnp.einsum('hqc,hcd->hqd', xq_b, wq_ref[...],
                       preferred_element_type=jnp.float32)          # (H, TQ, hd)
        q_sc[...] = q.astype(jnp.bfloat16)
        m_sc[...] = jnp.full(m_sc.shape, -jnp.inf, jnp.float32)
        l_sc[...] = jnp.zeros(l_sc.shape, jnp.float32)
        acc_sc[...] = jnp.zeros(acc_sc.shape, jnp.float32)

    # k / v projection for this kv tile (bf16 matmul, f32 accumulate).
    xkv = xkv_ref[...].astype(jnp.bfloat16)                         # (TK, C)
    xkv_b = jnp.broadcast_to(xkv[None], (H, TK, C))                 # (H, TK, C)
    k = jnp.einsum('hkc,hcd->hkd', xkv_b, wk_ref[...],
                   preferred_element_type=jnp.float32).astype(jnp.bfloat16)
    v = jnp.einsum('hkc,hcd->hkd', xkv_b, wv_ref[...],
                   preferred_element_type=jnp.float32).astype(jnp.bfloat16)

    # scores for this (q-tile, kv-tile): batched over heads.
    s = jnp.einsum('hqd,hkd->hqk', q_sc[...], k,
                   preferred_element_type=jnp.float32)              # (H, TQ, TK)

    # online softmax update (f32 statistics).
    m_prev = m_sc[...]
    m_new = jnp.maximum(m_prev, s.max(axis=-1, keepdims=True))
    alpha = jnp.exp(m_prev - m_new)
    p = jnp.exp(s - m_new)
    l_sc[...] = alpha * l_sc[...] + p.sum(axis=-1, keepdims=True)
    acc_sc[...] = alpha * acc_sc[...] + jnp.einsum(
        'hqk,hkd->hqd', p.astype(jnp.bfloat16), v,
        preferred_element_type=jnp.float32)
    m_sc[...] = m_new

    @pl.when(ki == nk - 1)
    def _finish():
        # normalize once per q row, then output projection done per head and
        # summed over heads (no (TQ, H, hd)->(TQ, C) relayout needed).
        o_h = acc_sc[...] * pl.reciprocal(l_sc[...], approx=True)   # (H, TQ, hd)
        out_ph = jnp.einsum('hqd,hdc->hqc', o_h.astype(jnp.bfloat16),
                            wo_ref[...],
                            preferred_element_type=jnp.float32)     # (H, TQ, C)
        out = out_ph.sum(axis=0) + bo_ref[...]                      # (TQ, C)
        o_ref[...] = out.astype(o_ref.dtype)


def attention_forward(x, wqkv, wproj, bproj, *, num_heads,
                      q_tile=None, kv_tile=None):
    B, N, C = x.shape
    assert C % num_heads == 0
    H = num_heads
    hd = C // H
    scale = hd ** -0.5

    # ---- tile selection ----------------------------------------------------
    # 256-wide tiles feed the 256-wide v6e/v7x MXU; short sequences just use
    # full rows.  (On v5e, 128 already saturates the 4x128x128 MXU.)
    if q_tile is None:
        q_tile = N if N <= 256 else 256
    if kv_tile is None:
        kv_tile = N if N <= 256 else 256
    assert N % q_tile == 0 and N % kv_tile == 0
    assert q_tile == N or q_tile % 8 == 0
    assert kv_tile == N or kv_tile % 8 == 0

    # ---- host-side weight re-layout (one-time cost) ------------------------
    # wqkv columns are ordered [q | k | v] and, inside each, per head — this
    # matches reshape(B, N, 3, H, hd) in the PyTorch module.
    w3 = wqkv.reshape(C, 3, H, hd)
    wq = (jnp.transpose(w3[:, 0], (1, 0, 2)) * scale).astype(jnp.bfloat16)  # (H,C,hd)
    wk = jnp.transpose(w3[:, 1], (1, 0, 2)).astype(jnp.bfloat16)            # (H,C,hd)
    wv = jnp.transpose(w3[:, 2], (1, 0, 2)).astype(jnp.bfloat16)            # (H,C,hd)
    wo = wproj.reshape(H, hd, C).astype(jnp.bfloat16)                       # (H,hd,C)
    bo = bproj.reshape(1, C).astype(jnp.float32)                            # (1,C)

    grid = (B, N // q_tile, N // kv_tile)

    # advisory cost estimate for the XLA scheduler
    flops = 2 * B * N * (4 * C * C + 2 * N * C)
    transcendentals = B * H * N * N
    bytes_accessed = (3 * B * N * C * x.dtype.itemsize   # x (q + kv streams) + out
                      + 4 * C * C * 2 + 4 * C)           # bf16 weights + f32 bias
    cost = pl.CostEstimate(flops=flops, transcendentals=transcendentals,
                           bytes_accessed=bytes_accessed)

    return pl.pallas_call(
        _attention_kernel,
        out_shape=jax.ShapeDtypeStruct((B, N, C), x.dtype),
        grid_spec=pltpu.PrefetchScalarGridSpec(
            num_scalar_prefetch=0,
            grid=grid,
            in_specs=[
                # x rows for the current q tile (leading batch dim squeezed)
                pl.BlockSpec((None, q_tile, C), lambda b, qi, ki: (b, qi, 0)),
                # x rows for the current kv tile
                pl.BlockSpec((None, kv_tile, C), lambda b, qi, ki: (b, ki, 0)),
                # weights: constant block index -> resident, not re-DMA'd
                pl.BlockSpec((H, C, hd), lambda b, qi, ki: (0, 0, 0)),
                pl.BlockSpec((H, C, hd), lambda b, qi, ki: (0, 0, 0)),
                pl.BlockSpec((H, C, hd), lambda b, qi, ki: (0, 0, 0)),
                pl.BlockSpec((H, hd, C), lambda b, qi, ki: (0, 0, 0)),
                pl.BlockSpec((1, C), lambda b, qi, ki: (0, 0)),
            ],
            out_specs=pl.BlockSpec((None, q_tile, C), lambda b, qi, ki: (b, qi, 0)),
            scratch_shapes=[
                pltpu.VMEM((H, q_tile, hd), jnp.bfloat16),   # q (scaled)
                pltpu.VMEM((H, q_tile, 1), jnp.float32),     # running max
                pltpu.VMEM((H, q_tile, 1), jnp.float32),     # running sum
                pltpu.VMEM((H, q_tile, hd), jnp.float32),    # output accumulator
            ],
        ),
        compiler_params=pltpu.CompilerParams(
            dimension_semantics=("parallel", "parallel", "arbitrary"),
            vmem_limit_bytes=32 * 1024 * 1024,
        ),
        cost_estimate=cost,
    )(x, x, wq, wk, wv, wo, bo)


def attention_reference(x, wqkv, wproj, bproj, *, num_heads):
    """Pure-JAX f32 reference matching the PyTorch forward."""
    B, N, C = x.shape
    head_dim = C // num_heads
    scale = head_dim ** -0.5
    qkv = jnp.einsum('bnc,cd->bnd', x, wqkv)                    # (B, N, 3C)
    qkv = qkv.reshape(B, N, 3, num_heads, head_dim)
    qkv = jnp.transpose(qkv, (2, 0, 3, 1, 4))                   # (3, B, H, N, hd)
    q, k, v = qkv[0], qkv[1], qkv[2]
    s = jnp.einsum('bhqd,bhkd->bhqk', q, k) * scale
    p = jax.nn.softmax(s, axis=-1)
    o = jnp.einsum('bhqk,bhkd->bhqd', p, v)                     # (B, H, N, hd)
    o = jnp.transpose(o, (0, 2, 1, 3)).reshape(B, N, C)
    return jnp.einsum('bnc,cd->bnd', o, wproj) + bproj[None, None, :]


if __name__ == "__main__":
    B, N, C = 2, 16, 128     # lane-dense C (multiple of 128), small N
    NUM_HEADS = 8            # head_dim = 16

    key = jax.random.PRNGKey(0)
    kx, kqkv, kproj, kb = jax.random.split(key, 4)

    x = jax.random.normal(kx, (B, N, C), dtype=jnp.float32)
    # nn.Linear(dim, 3*dim) / nn.Linear(dim, dim) weights, stored transposed
    # for right-multiplication.
    wqkv = jax.random.normal(kqkv, (C, 3 * C), dtype=jnp.float32) * 0.02
    wproj = jax.random.normal(kproj, (C, C), dtype=jnp.float32) * 0.02
    bproj = jax.random.normal(kb, (C,), dtype=jnp.float32) * 0.02

    # small tiles force multiple q- and kv-grid steps so the online-softmax
    # accumulation path is exercised even at this tiny sequence length.
    out = attention_forward(x, wqkv, wproj, bproj, num_heads=NUM_HEADS,
                            q_tile=8, kv_tile=8)
    out = jax.block_until_ready(out)

    ref = attention_reference(x, wqkv, wproj, bproj, num_heads=NUM_HEADS)
    assert out.shape == (B, N, C)
    err = float(jnp.max(jnp.abs(out - ref)))
    assert err < 1e-2, f"mismatch vs reference: {err}"   # bf16-matmul tolerance

    print("KERNEL_OK")
</pallas_src>

<mosaic_0001>
module attributes {stable_mosaic.version = 11 : i64} {
  func.func @_attention_kernel(%arg0: i32, %arg1: i32, %arg2: i32, %arg3: memref<1x8x128xf32, #tpu.memory_space<vmem>>, %arg4: memref<1x8x128xf32, #tpu.memory_space<vmem>>, %arg5: memref<8x128x16xbf16, #tpu.memory_space<vmem>>, %arg6: memref<8x128x16xbf16, #tpu.memory_space<vmem>>, %arg7: memref<8x128x16xbf16, #tpu.memory_space<vmem>>, %arg8: memref<8x16x128xbf16, #tpu.memory_space<vmem>>, %arg9: memref<1x128xf32, #tpu.memory_space<vmem>>, %arg10: memref<1x8x128xf32, #tpu.memory_space<vmem>>, %arg11: memref<8x8x16xbf16, #tpu.memory_space<vmem>>, %arg12: memref<8x8x1xf32, #tpu.memory_space<vmem>>, %arg13: memref<8x8x1xf32, #tpu.memory_space<vmem>>, %arg14: memref<8x8x16xf32, #tpu.memory_space<vmem>>) attributes {dimension_semantics = [#tpu.dimension_semantics<parallel>, #tpu.dimension_semantics<parallel>, #tpu.dimension_semantics<arbitrary>], iteration_bounds = array<i64: 2, 2, 2>, scalar_prefetch = 0 : i64, scratch_operands = 4 : i64, tpu.core_type = #tpu.core_type<tc>, window_params = [{transform_indices = @transform_0, window_bounds = array<i64: 1, 8, 128>}, {transform_indices = @transform_1, window_bounds = array<i64: 1, 8, 128>}, {pipeline_mode = #tpu.pipeline_mode<synchronous>, transform_indices = @transform_2, window_bounds = array<i64: 8, 128, 16>}, {pipeline_mode = #tpu.pipeline_mode<synchronous>, transform_indices = @transform_3, window_bounds = array<i64: 8, 128, 16>}, {pipeline_mode = #tpu.pipeline_mode<synchronous>, transform_indices = @transform_4, window_bounds = array<i64: 8, 128, 16>}, {pipeline_mode = #tpu.pipeline_mode<synchronous>, transform_indices = @transform_5, window_bounds = array<i64: 8, 16, 128>}, {pipeline_mode = #tpu.pipeline_mode<synchronous>, transform_indices = @transform_6, window_bounds = array<i64: 1, 128>}, {transform_indices = @transform_7, window_bounds = array<i64: 1, 8, 128>}]} {
    %c0_i32 = arith.constant 0 : i32
    %0 = arith.cmpi eq, %arg2, %c0_i32 : i32
    %1 = arith.extui %0 : i1 to i32
    %c0_i32_0 = arith.constant 0 : i32
    %2 = arith.cmpi ne, %1, %c0_i32_0 : i32
    scf.if %2 {
      %c0_36 = arith.constant 0 : index
      %c0_37 = arith.constant 0 : index
      %c0_38 = arith.constant 0 : index
      %43 = vector.load %arg3[%c0_36, %c0_37, %c0_38] : memref<1x8x128xf32, #tpu.memory_space<vmem>>, vector<1x8x128xf32>
      %44 = vector.shape_cast %43 : vector<1x8x128xf32> to vector<8x128xf32>
      %45 = arith.truncf %44 : vector<8x128xf32> to vector<8x128xbf16>
      %46 = vector.shape_cast %45 : vector<8x128xbf16> to vector<1x8x128xbf16>
      %47 = vector.shape_cast %46 : vector<1x8x128xbf16> to vector<1x8x128xbf16>
      %48 = vector.broadcast %47 : vector<1x8x128xbf16> to vector<8x8x128xbf16>
      %c0_39 = arith.constant 0 : index
      %c0_40 = arith.constant 0 : index
      %c0_41 = arith.constant 0 : index
      %49 = vector.load %arg5[%c0_39, %c0_40, %c0_41] : memref<8x128x16xbf16, #tpu.memory_space<vmem>>, vector<8x128x16xbf16>
      "tpu.trace_start"() <{level = 10 : i32, message = "hqc,hcd->hqd"}> : () -> ()
      %cst_42 = arith.constant dense<0.000000e+00> : vector<8x8x16xf32>
      %50 = tpu.matmul %48, %49, %cst_42 {dimension_numbers = #tpu.dot_dimension_numbers<[2], [1], [1], [2], [0, 0, 0, 1, 1, 2], [0], [0]>} : vector<8x8x128xbf16>, vector<8x128x16xbf16>, vector<8x8x16xf32> -> vector<8x8x16xf32>
      "tpu.trace_stop"() : () -> ()
      %51 = arith.truncf %50 : vector<8x8x16xf32> to vector<8x8x16xbf16>
      %c0_43 = arith.constant 0 : index
      %c0_44 = arith.constant 0 : index
      %c0_45 = arith.constant 0 : index
      %52 = vector.load %arg11[%c0_43, %c0_44, %c0_45] : memref<8x8x16xbf16, #tpu.memory_space<vmem>>, vector<8x8x16xbf16>
      tpu.vector_store %arg11[%c0_43, %c0_44, %c0_45], %51 {strides = array<i32>} : memref<8x8x16xbf16, #tpu.memory_space<vmem>>, vector<8x8x16xbf16>,
      %cst_46 = arith.constant 0xFF800000 : f32
      %53 = vector.broadcast %cst_46 : f32 to vector<8x8x1xf32>
      %c0_47 = arith.constant 0 : index
      %c0_48 = arith.constant 0 : index
      %c0_49 = arith.constant 0 : index
      %54 = vector.load %arg12[%c0_47, %c0_48, %c0_49] : memref<8x8x1xf32, #tpu.memory_space<vmem>>, vector<8x8x1xf32>
      tpu.vector_store %arg12[%c0_47, %c0_48, %c0_49], %53 {strides = array<i32>} : memref<8x8x1xf32, #tpu.memory_space<vmem>>, vector<8x8x1xf32>,
      %cst_50 = arith.constant 0.000000e+00 : f32
      %55 = vector.broadcast %cst_50 : f32 to vector<8x8x1xf32>
      %c0_51 = arith.constant 0 : index
      %c0_52 = arith.constant 0 : index
      %c0_53 = arith.constant 0 : index
      %56 = vector.load %arg13[%c0_51, %c0_52, %c0_53] : memref<8x8x1xf32, #tpu.memory_space<vmem>>, vector<8x8x1xf32>
      tpu.vector_store %arg13[%c0_51, %c0_52, %c0_53], %55 {strides = array<i32>} : memref<8x8x1xf32, #tpu.memory_space<vmem>>, vector<8x8x1xf32>,
      %cst_54 = arith.constant 0.000000e+00 : f32
      %57 = vector.broadcast %cst_54 : f32 to vector<8x8x16xf32>
      %c0_55 = arith.constant 0 : index
      %c0_56 = arith.constant 0 : index
      %c0_57 = arith.constant 0 : index
      %58 = vector.load %arg14[%c0_55, %c0_56, %c0_57] : memref<8x8x16xf32, #tpu.memory_space<vmem>>, vector<8x8x16xf32>
      tpu.vector_store %arg14[%c0_55, %c0_56, %c0_57], %57 {strides = array<i32>} : memref<8x8x16xf32, #tpu.memory_space<vmem>>, vector<8x8x16xf32>,
    } else {
    }
    %c0 = arith.constant 0 : index
    %c0_1 = arith.constant 0 : index
    %c0_2 = arith.constant 0 : index
    %3 = vector.load %arg4[%c0, %c0_1, %c0_2] : memref<1x8x128xf32, #tpu.memory_space<vmem>>, vector<1x8x128xf32>
    %4 = vector.shape_cast %3 : vector<1x8x128xf32> to vector<8x128xf32>
    %5 = arith.truncf %4 : vector<8x128xf32> to vector<8x128xbf16>
    %6 = vector.shape_cast %5 : vector<8x128xbf16> to vector<1x8x128xbf16>
    %7 = vector.shape_cast %6 : vector<1x8x128xbf16> to vector<1x8x128xbf16>
    %8 = vector.broadcast %7 : vector<1x8x128xbf16> to vector<8x8x128xbf16>
    %c0_3 = arith.constant 0 : index
    %c0_4 = arith.constant 0 : index
    %c0_5 = arith.constant 0 : index
    %9 = vector.load %arg6[%c0_3, %c0_4, %c0_5] : memref<8x128x16xbf16, #tpu.memory_space<vmem>>, vector<8x128x16xbf16>
    "tpu.trace_start"() <{level = 10 : i32, message = "hkc,hcd->hkd"}> : () -> ()
    %cst = arith.constant dense<0.000000e+00> : vector<8x8x16xf32>
    %10 = tpu.matmul %8, %9, %cst {dimension_numbers = #tpu.dot_dimension_numbers<[2], [1], [1], [2], [0, 0, 0, 1, 1, 2], [0], [0]>} : vector<8x8x128xbf16>, vector<8x128x16xbf16>, vector<8x8x16xf32> -> vector<8x8x16xf32>
    "tpu.trace_stop"() : () -> ()
    %11 = arith.truncf %10 : vector<8x8x16xf32> to vector<8x8x16xbf16>
    %c0_6 = arith.constant 0 : index
    %c0_7 = arith.constant 0 : index
    %c0_8 = arith.constant 0 : index
    %12 = vector.load %arg7[%c0_6, %c0_7, %c0_8] : memref<8x128x16xbf16, #tpu.memory_space<vmem>>, vector<8x128x16xbf16>
    "tpu.trace_start"() <{level = 10 : i32, message = "hkc,hcd->hkd"}> : () -> ()
    %cst_9 = arith.constant dense<0.000000e+00> : vector<8x8x16xf32>
    %13 = tpu.matmul %8, %12, %cst_9 {dimension_numbers = #tpu.dot_dimension_numbers<[2], [1], [1], [2], [0, 0, 0, 1, 1, 2], [0], [0]>} : vector<8x8x128xbf16>, vector<8x128x16xbf16>, vector<8x8x16xf32> -> vector<8x8x16xf32>
    "tpu.trace_stop"() : () -> ()
    %14 = arith.truncf %13 : vector<8x8x16xf32> to vector<8x8x16xbf16>
    %c0_10 = arith.constant 0 : index
    %c0_11 = arith.constant 0 : index
    %c0_12 = arith.constant 0 : index
    %15 = vector.load %arg11[%c0_10, %c0_11, %c0_12] : memref<8x8x16xbf16, #tpu.memory_space<vmem>>, vector<8x8x16xbf16>
    "tpu.trace_start"() <{level = 10 : i32, message = "hqd,hkd->hqk"}> : () -> ()
    %cst_13 = arith.constant dense<0.000000e+00> : vector<8x8x8xf32>
    %16 = tpu.matmul %15, %11, %cst_13 {dimension_numbers = #tpu.dot_dimension_numbers<[2], [2], [1], [1], [0, 0, 0, 1, 1, 1], [0], [0]>} : vector<8x8x16xbf16>, vector<8x8x16xbf16>, vector<8x8x8xf32> -> vector<8x8x8xf32>
    "tpu.trace_stop"() : () -> ()
    %c0_14 = arith.constant 0 : index
    %c0_15 = arith.constant 0 : index
    %c0_16 = arith.constant 0 : index
    %17 = vector.load %arg12[%c0_14, %c0_15, %c0_16] : memref<8x8x1xf32, #tpu.memory_space<vmem>>, vector<8x8x1xf32>
    %cst_17 = arith.constant dense<0xFF800000> : vector<8x8xf32>
    %18 = vector.multi_reduction <maximumf>, %16, %cst_17 [2] : vector<8x8x8xf32> to vector<8x8xf32>
    %19 = vector.shape_cast %18 : vector<8x8xf32> to vector<8x8x1xf32>
    %20 = arith.maximumf %17, %19 : vector<8x8x1xf32>
    %21 = arith.subf %17, %20 : vector<8x8x1xf32>
    %22 = math.exp %21 : vector<8x8x1xf32>
    %23 = vector.broadcast %20 : vector<8x8x1xf32> to vector<8x8x8xf32>
    %24 = arith.subf %16, %23 : vector<8x8x8xf32>
    %25 = math.exp %24 : vector<8x8x8xf32>
    %c0_18 = arith.constant 0 : index
    %c0_19 = arith.constant 0 : index
    %c0_20 = arith.constant 0 : index
    %26 = vector.load %arg13[%c0_18, %c0_19, %c0_20] : memref<8x8x1xf32, #tpu.memory_space<vmem>>, vector<8x8x1xf32>
    %27 = arith.mulf %22, %26 : vector<8x8x1xf32>
    %cst_21 = arith.constant dense<0.000000e+00> : vector<8x8xf32>
    %28 = vector.multi_reduction <add>, %25, %cst_21 [2] : vector<8x8x8xf32> to vector<8x8xf32>
    %29 = vector.shape_cast %28 : vector<8x8xf32> to vector<8x8x1xf32>
    %30 = arith.addf %27, %29 : vector<8x8x1xf32>
    %c0_22 = arith.constant 0 : index
    %c0_23 = arith.constant 0 : index
    %c0_24 = arith.constant 0 : index
    %31 = vector.load %arg13[%c0_22, %c0_23, %c0_24] : memref<8x8x1xf32, #tpu.memory_space<vmem>>, vector<8x8x1xf32>
    tpu.vector_store %arg13[%c0_22, %c0_23, %c0_24], %30 {strides = array<i32>} : memref<8x8x1xf32, #tpu.memory_space<vmem>>, vector<8x8x1xf32>,
    %c0_25 = arith.constant 0 : index
    %c0_26 = arith.constant 0 : index
    %c0_27 = arith.constant 0 : index
    %32 = vector.load %arg14[%c0_25, %c0_26, %c0_27] : memref<8x8x16xf32, #tpu.memory_space<vmem>>, vector<8x8x16xf32>
    %33 = vector.broadcast %22 : vector<8x8x1xf32> to vector<8x8x16xf32>
    %34 = arith.mulf %33, %32 : vector<8x8x16xf32>
    %35 = arith.truncf %25 : vector<8x8x8xf32> to vector<8x8x8xbf16>
    "tpu.trace_start"() <{level = 10 : i32, message = "hqk,hkd->hqd"}> : () -> ()
    %cst_28 = arith.constant dense<0.000000e+00> : vector<8x8x16xf32>
    %36 = tpu.matmul %35, %14, %cst_28 {dimension_numbers = #tpu.dot_dimension_numbers<[2], [1], [1], [2], [0, 0, 0, 1, 1, 2], [0], [0]>} : vector<8x8x8xbf16>, vector<8x8x16xbf16>, vector<8x8x16xf32> -> vector<8x8x16xf32>
    "tpu.trace_stop"() : () -> ()
    %37 = arith.addf %34, %36 : vector<8x8x16xf32>
    %c0_29 = arith.constant 0 : index
    %c0_30 = arith.constant 0 : index
    %c0_31 = arith.constant 0 : index
    %38 = vector.load %arg14[%c0_29, %c0_30, %c0_31] : memref<8x8x16xf32, #tpu.memory_space<vmem>>, vector<8x8x16xf32>
    tpu.vector_store %arg14[%c0_29, %c0_30, %c0_31], %37 {strides = array<i32>} : memref<8x8x16xf32, #tpu.memory_space<vmem>>, vector<8x8x16xf32>,
    %c0_32 = arith.constant 0 : index
    %c0_33 = arith.constant 0 : index
    %c0_34 = arith.constant 0 : index
    %39 = vector.load %arg12[%c0_32, %c0_33, %c0_34] : memref<8x8x1xf32, #tpu.memory_space<vmem>>, vector<8x8x1xf32>
    tpu.vector_store %arg12[%c0_32, %c0_33, %c0_34], %20 {strides = array<i32>} : memref<8x8x1xf32, #tpu.memory_space<vmem>>, vector<8x8x1xf32>,
    %c1_i32 = arith.constant 1 : i32
    %40 = arith.cmpi eq, %arg2, %c1_i32 : i32
    %41 = arith.extui %40 : i1 to i32
    %c0_i32_35 = arith.constant 0 : i32
    %42 = arith.cmpi ne, %41, %c0_i32_35 : i32
    scf.if %42 {
      %c0_36 = arith.constant 0 : index
      %c0_37 = arith.constant 0 : index
      %c0_38 = arith.constant 0 : index
      %43 = vector.load %arg14[%c0_36, %c0_37, %c0_38] : memref<8x8x16xf32, #tpu.memory_space<vmem>>, vector<8x8x16xf32>
      %c0_39 = arith.constant 0 : index
      %c0_40 = arith.constant 0 : index
      %c0_41 = arith.constant 0 : index
      %44 = vector.load %arg13[%c0_39, %c0_40, %c0_41] : memref<8x8x1xf32, #tpu.memory_space<vmem>>, vector<8x8x1xf32>
      %45 = tpu.reciprocal %44 {approx = true} : vector<8x8x1xf32> -> vector<8x8x1xf32>
      %46 = vector.broadcast %45 : vector<8x8x1xf32> to vector<8x8x16xf32>
      %47 = arith.mulf %43, %46 : vector<8x8x16xf32>
      %48 = arith.truncf %47 : vector<8x8x16xf32> to vector<8x8x16xbf16>
      %c0_42 = arith.constant 0 : index
      %c0_43 = arith.constant 0 : index
      %c0_44 = arith.constant 0 : index
      %49 = vector.load %arg8[%c0_42, %c0_43, %c0_44] : memref<8x16x128xbf16, #tpu.memory_space<vmem>>, vector<8x16x128xbf16>
      "tpu.trace_start"() <{level = 10 : i32, message = "hqd,hdc->hqc"}> : () -> ()
      %cst_45 = arith.constant dense<0.000000e+00> : vector<8x8x128xf32>
      %50 = tpu.matmul %48, %49, %cst_45 {dimension_numbers = #tpu.dot_dimension_numbers<[2], [1], [1], [2], [0, 0, 0, 1, 1, 2], [0], [0]>} : vector<8x8x16xbf16>, vector<8x16x128xbf16>, vector<8x8x128xf32> -> vector<8x8x128xf32>
      "tpu.trace_stop"() : () -> ()
      %cst_46 = arith.constant dense<0.000000e+00> : vector<8x128xf32>
      %51 = vector.multi_reduction <add>, %50, %cst_46 [0] : vector<8x8x128xf32> to vector<8x128xf32>
      %c0_47 = arith.constant 0 : index
      %c0_48 = arith.constant 0 : index
      %52 = vector.load %arg9[%c0_47, %c0_48] : memref<1x128xf32, #tpu.memory_space<vmem>>, vector<1x128xf32>
      %53 = vector.broadcast %52 : vector<1x128xf32> to vector<8x128xf32>
      %54 = arith.addf %51, %53 : vector<8x128xf32>
      %c0_49 = arith.constant 0 : index
      %c0_50 = arith.constant 0 : index
      %c0_51 = arith.constant 0 : index
      %55 = vector.load %arg10[%c0_49, %c0_50, %c0_51] : memref<1x8x128xf32, #tpu.memory_space<vmem>>, vector<1x8x128xf32>
      %56 = vector.shape_cast %55 : vector<1x8x128xf32> to vector<8x128xf32>
      %57 = vector.shape_cast %54 : vector<8x128xf32> to vector<1x8x128xf32>
      tpu.vector_store %arg10[%c0_49, %c0_50, %c0_51], %57 {strides = array<i32>} : memref<1x8x128xf32, #tpu.memory_space<vmem>>, vector<1x8x128xf32>,
    } else {
    }
    return
  }
  func.func @transform_0(%arg0: i32, %arg1: i32, %arg2: i32) -> (i32, i32, i32) {
    %c0_i32 = arith.constant 0 : i32
    %c0_i32_0 = arith.constant 0 : i32
    return %arg0, %arg1, %c0_i32 : i32, i32, i32
  }
  func.func @transform_1(%arg0: i32, %arg1: i32, %arg2: i32) -> (i32, i32, i32) {
    %c0_i32 = arith.constant 0 : i32
    %c0_i32_0 = arith.constant 0 : i32
    return %arg0, %arg2, %c0_i32 : i32, i32, i32
  }
  func.func @transform_2(%arg0: i32, %arg1: i32, %arg2: i32) -> (i32, i32, i32) {
    %c0_i32 = arith.constant 0 : i32
    %c0_i32_0 = arith.constant 0 : i32
    %c0_i32_1 = arith.constant 0 : i32
    %c0_i32_2 = arith.constant 0 : i32
    return %c0_i32, %c0_i32_0, %c0_i32_1 : i32, i32, i32
  }
  func.func @transform_3(%arg0: i32, %arg1: i32, %arg2: i32) -> (i32, i32, i32) {
    %c0_i32 = arith.constant 0 : i32
    %c0_i32_0 = arith.constant 0 : i32
    %c0_i32_1 = arith.constant 0 : i32
    %c0_i32_2 = arith.constant 0 : i32
    return %c0_i32, %c0_i32_0, %c0_i32_1 : i32, i32, i32
  }
  func.func @transform_4(%arg0: i32, %arg1: i32, %arg2: i32) -> (i32, i32, i32) {
    %c0_i32 = arith.constant 0 : i32
    %c0_i32_0 = arith.constant 0 : i32
    %c0_i32_1 = arith.constant 0 : i32
    %c0_i32_2 = arith.constant 0 : i32
    return %c0_i32, %c0_i32_0, %c0_i32_1 : i32, i32, i32
  }
  func.func @transform_5(%arg0: i32, %arg1: i32, %arg2: i32) -> (i32, i32, i32) {
    %c0_i32 = arith.constant 0 : i32
    %c0_i32_0 = arith.constant 0 : i32
    %c0_i32_1 = arith.constant 0 : i32
    %c0_i32_2 = arith.constant 0 : i32
    return %c0_i32, %c0_i32_0, %c0_i32_1 : i32, i32, i32
  }
  func.func @transform_6(%arg0: i32, %arg1: i32, %arg2: i32) -> (i32, i32) {
    %c0_i32 = arith.constant 0 : i32
    %c0_i32_0 = arith.constant 0 : i32
    %c0_i32_1 = arith.constant 0 : i32
    return %c0_i32, %c0_i32_0 : i32, i32
  }
  func.func @transform_7(%arg0: i32, %arg1: i32, %arg2: i32) -> (i32, i32, i32) {
    %c0_i32 = arith.constant 0 : i32
    %c0_i32_0 = arith.constant 0 : i32
    return %arg0, %arg1, %c0_i32 : i32, i32, i32
  }
}

</mosaic_0001>

<llo_original>
// kernel: tpu_custom_call.1
$region0: #{tpu_custom_call.1}
  #allocation0 [shape = 'u32[]', space=smem, size = 0x4, offset = 0x4, fixed_abs, tag = 'smem constant byte address 0x4 - core index']
  #allocation1 [shape = 'u32[144,128]{1,0:T(1,128)}', space=vmem, size = 0x12000, scoped, tag = 'internal scratch']
  #allocation2 [shape = 'bf16[8,8,16]{2,1,0:T(8,128)(2,1)}', space=vmem, size = 0x4000, scoped, tag = 'scratch operand']
  #allocation3 [shape = 'f32[8,8,1]{2,1,0:T(8,128)}', space=vmem, size = 0x8000, scoped, tag = 'scratch operand']
  #allocation4 [shape = 'f32[8,8,1]{2,1,0:T(8,128)}', space=vmem, size = 0x8000, scoped, tag = 'scratch operand']
  #allocation5 [shape = 'f32[8,8,16]{2,1,0:T(8,128)}', space=vmem, size = 0x8000, scoped, tag = 'scratch operand']
  %s0 = inlined_call_operand.vmem [shape: f32[2,16,128], index: 0, kind: input, shape index: {}]
  %s1 = inlined_call_operand.vmem [shape: f32[2,16,128], index: 1, kind: input, shape index: {}]
  %s2 = inlined_call_operand.vmem [shape: bf16[8,128,16], index: 2, kind: input, shape index: {}]
  %s3 = inlined_call_operand.vmem [shape: bf16[8,128,16], index: 3, kind: input, shape index: {}]
  %s4 = inlined_call_operand.vmem [shape: bf16[8,128,16], index: 4, kind: input, shape index: {}]
  %s5 = inlined_call_operand.vmem [shape: bf16[8,16,128], index: 5, kind: input, shape index: {}]
  %s6 = inlined_call_operand.vmem [shape: f32[1,128], index: 6, kind: input, shape index: {}]
  %s7 = inlined_call_operand.hbm [shape: f32[2,16,128], index: 7, kind: output, shape index: {}]
  %s8 = sld [smem:[#allocation0]]
  $region69: #{tpu_custom_call.1} parent=0
    _
  %s10 = ssub.s32 1, %s8
  %s11 = scalar_select 0, %s10, %s8
  $region1: #{tpu_custom_call.1} parent=0
    #allocation6 [shape = 'u8[8192]{0}', space=vmem, size = 0x2000, scoped, tag = 'output window, operand 0']
    #allocation7 [shape = 's32[2]{0}', space=sflag, size = 0x8, scoped, tag = 'scoped memory for tpu_custom_call.1']
    %12 = vsyncpa [#allocation7], 0
    %s13 = scalar_lea.sflag [#allocation7], 1
    %14 = vsyncpa %s13, 0
    loop: start=0, step=1, limit=10
    $region2: #{tpu_custom_call.1} parent=1 // loop_pre_header
      _
    $region3: #{tpu_custom_call.1} parent=1 // loop_header
      %s16 = sphi 0, %s20
      %p17 = scmp.ge.s32.totalorder %s16, 10
      %s23 = sphi 0, %s42
      %s24 = sphi 0, %s38
      %s25 = sphi 0, %s34
      %s26 = sphi 0, %s23
      %s27 = sphi 0, %s24
      %s28 = sphi 0, %s25
      %s29 = sphi 0, %s26
      %s30 = sphi 0, %s27
      %s31 = sphi 0, %s28
      %s47 = sphi 0, %s49
      %s50 = sphi 0, %s47
      %s51 = sphi 0, %s50
      %s67 = sphi 0, %s51
      %s75 = sphi 0, %s77
      %s78 = sphi 0, %s75
      %s79 = sphi 0, %s78
      %s95 = sphi 0, %s79
      %s99 = sphi 0, %s99
      %s101 = sphi 0, %s99
      %s102 = sphi 0, %s101
      %s116 = sphi 0, %s102
      %s120 = sphi 0, %s120
      %s122 = sphi 0, %s120
      %s123 = sphi 0, %s122
      %s137 = sphi 0, %s123
      %s141 = sphi 0, %s141
      %s143 = sphi 0, %s141
      %s144 = sphi 0, %s143
      %s158 = sphi 0, %s144
      %s162 = sphi 0, %s162
      %s164 = sphi 0, %s162
      %s165 = sphi 0, %s164
      %s179 = sphi 0, %s165
      %s183 = sphi 0, %s183
      %s185 = sphi 0, %s183
      %s186 = sphi 0, %s185
      %s200 = sphi 0, %s186
      %s208 = sphi 0, %s210
      %s211 = sphi 0, %s208
      %s212 = sphi 0, %s211
      %s228 = sphi 0, %s212
    $region4: #{tpu_custom_call.1} parent=1 // loop_header_branch
      %19 = sbr.rel (%p17) target = $region8
    $region5: #{tpu_custom_call.1} parent=1 // loop_body
      %s21 = ssub.s32 %s16, 1
      %s22 = ssub.s32 %s16, 2
      %s32 = sadd.s32 1, %s25
      %p33 = scmp.ge.s32.totalorder %s32, 2
      %s34 = scalar_select %p33, 0, %s32
      %s35 = sadd.s32 1, %s24
      %s36 = scalar_select %p33, %s35, %s24
      %p37 = scmp.ge.s32.totalorder %s36, 2
      %s38 = scalar_select %p37, 0, %s36
      %s39 = sadd.s32 1, %s23
      %s40 = scalar_select %p37, %s39, %s23
      %p41 = scmp.ge.s32.totalorder %s40, 2
      %s42 = scalar_select %p41, 0, %s40
      %s43 = ssub.s32 %s23, %s42
      %s44 = ssub.s32 %s24, %s38
      %s45 = sor.u32 %s43, %s44
      %p46 = scmp.eq.s32.totalorder %s45, 0
      %s48 = sadd.s32 %s47, 1
      %s49 = scalar_select %p46, %s47, %s48
      %p52 = pneg %p46
      %p53 = scmp.eq.s32.totalorder %s16, 7
      %p54 = por %p52, %p53
      %p55 = scmp.ne.s32.totalorder %s47, %s50
      %p56 = scmp.eq.s32.totalorder %s16, 0
      %p57 = por %p55, %p56
      %p58 = scmp.ne.s32.totalorder %s47, %s50
      %p59 = scmp.eq.s32.totalorder %s21, 7
      %p60 = por %p58, %p59
      %p61 = scmp.ne.s32.totalorder %s50, %s51
      %p62 = scmp.eq.s32.totalorder %s21, 0
      %p63 = por %p61, %p62
      %p64 = scmp.ne.s32.totalorder %s50, %s51
      %p65 = scmp.eq.s32.totalorder %s22, 7
      %p66 = por %p64, %p65
      %p68 = scmp.ne.s32.totalorder %s51, %s67
      %p69 = scmp.eq.s32.totalorder %s22, 0
      %p70 = por %p68, %p69
      %s71 = ssub.s32 %s23, %s42
      %s72 = ssub.s32 %s25, %s34
      %s73 = sor.u32 %s71, %s72
      %p74 = scmp.eq.s32.totalorder %s73, 0
      %s76 = sadd.s32 %s75, 1
      %s77 = scalar_select %p74, %s75, %s76
      %p80 = pneg %p74
      %p81 = scmp.eq.s32.totalorder %s16, 7
      %p82 = por %p80, %p81
      %p83 = scmp.ne.s32.totalorder %s75, %s78
      %p84 = scmp.eq.s32.totalorder %s16, 0
      %p85 = por %p83, %p84
      %p86 = scmp.ne.s32.totalorder %s75, %s78
      %p87 = scmp.eq.s32.totalorder %s21, 7
      %p88 = por %p86, %p87
      %p89 = scmp.ne.s32.totalorder %s78, %s79
      %p90 = scmp.eq.s32.totalorder %s21, 0
      %p91 = por %p89, %p90
      %p92 = scmp.ne.s32.totalorder %s78, %s79
      %p93 = scmp.eq.s32.totalorder %s22, 7
      %p94 = por %p92, %p93
      %p96 = scmp.ne.s32.totalorder %s79, %s95
      %p97 = scmp.eq.s32.totalorder %s22, 0
      %p98 = por %p96, %p97
      %s100 = sadd.s32 %s99, 1
      %p103 = scmp.eq.s32.totalorder %s16, 7
      %p104 = scmp.ne.s32.totalorder %s99, %s101
      %p105 = scmp.eq.s32.totalorder %s16, 0
      %p106 = por %p104, %p105
      %p107 = scmp.ne.s32.totalorder %s99, %s101
      %p108 = scmp.eq.s32.totalorder %s21, 7
      %p109 = por %p107, %p108
      %p110 = scmp.ne.s32.totalorder %s101, %s102
      %p111 = scmp.eq.s32.totalorder %s21, 0
      %p112 = por %p110, %p111
      %p113 = scmp.ne.s32.totalorder %s101, %s102
      %p114 = scmp.eq.s32.totalorder %s22, 7
      %p115 = por %p113, %p114
      %p117 = scmp.ne.s32.totalorder %s102, %s116
      %p118 = scmp.eq.s32.totalorder %s22, 0
      %p119 = por %p117, %p118
      %s121 = sadd.s32 %s120, 1
      %p124 = scmp.eq.s32.totalorder %s16, 7
      %p125 = scmp.ne.s32.totalorder %s120, %s122
      %p126 = scmp.eq.s32.totalorder %s16, 0
      %p127 = por %p125, %p126
      %p128 = scmp.ne.s32.totalorder %s120, %s122
      %p129 = scmp.eq.s32.totalorder %s21, 7
      %p130 = por %p128, %p129
      %p131 = scmp.ne.s32.totalorder %s122, %s123
      %p132 = scmp.eq.s32.totalorder %s21, 0
      %p133 = por %p131, %p132
      %p134 = scmp.ne.s32.totalorder %s122, %s123
      %p135 = scmp.eq.s32.totalorder %s22, 7
      %p136 = por %p134, %p135
      %p138 = scmp.ne.s32.totalorder %s123, %s137
      %p139 = scmp.eq.s32.totalorder %s22, 0
      %p140 = por %p138, %p139
      %s142 = sadd.s32 %s141, 1
      %p145 = scmp.eq.s32.totalorder %s16, 7
      %p146 = scmp.ne.s32.totalorder %s141, %s143
      %p147 = scmp.eq.s32.totalorder %s16, 0
      %p148 = por %p146, %p147
      %p149 = scmp.ne.s32.totalorder %s141, %s143
      %p150 = scmp.eq.s32.totalorder %s21, 7
      %p151 = por %p149, %p150
      %p152 = scmp.ne.s32.totalorder %s143, %s144
      %p153 = scmp.eq.s32.totalorder %s21, 0
      %p154 = por %p152, %p153
      %p155 = scmp.ne.s32.totalorder %s143, %s144
      %p156 = scmp.eq.s32.totalorder %s22, 7
      %p157 = por %p155, %p156
      %p159 = scmp.ne.s32.totalorder %s144, %s158
      %p160 = scmp.eq.s32.totalorder %s22, 0
      %p161 = por %p159, %p160
      %s163 = sadd.s32 %s162, 1
      %p166 = scmp.eq.s32.totalorder %s16, 7
      %p167 = scmp.ne.s32.totalorder %s162, %s164
      %p168 = scmp.eq.s32.totalorder %s16, 0
      %p169 = por %p167, %p168
      %p170 = scmp.ne.s32.totalorder %s162, %s164
      %p171 = scmp.eq.s32.totalorder %s21, 7
      %p172 = por %p170, %p171
      %p173 = scmp.ne.s32.totalorder %s164, %s165
      %p174 = scmp.eq.s32.totalorder %s21, 0
      %p175 = por %p173, %p174
      %p176 = scmp.ne.s32.totalorder %s164, %s165
      %p177 = scmp.eq.s32.totalorder %s22, 7
      %p178 = por %p176, %p177
      %p180 = scmp.ne.s32.totalorder %s165, %s179
      %p181 = scmp.eq.s32.totalorder %s22, 0
      %p182 = por %p180, %p181
      %s184 = sadd.s32 %s183, 1
      %p187 = scmp.eq.s32.totalorder %s16, 7
      %p188 = scmp.ne.s32.totalorder %s183, %s185
      %p189 = scmp.eq.s32.totalorder %s16, 0
      %p190 = por %p188, %p189
      %p191 = scmp.ne.s32.totalorder %s183, %s185
      %p192 = scmp.eq.s32.totalorder %s21, 7
      %p193 = por %p191, %p192
      %p194 = scmp.ne.s32.totalorder %s185, %s186
      %p195 = scmp.eq.s32.totalorder %s21, 0
      %p196 = por %p194, %p195
      %p197 = scmp.ne.s32.totalorder %s185, %s186
      %p198 = scmp.eq.s32.totalorder %s22, 7
      %p199 = por %p197, %p198
      %p201 = scmp.ne.s32.totalorder %s186, %s200
      %p202 = scmp.eq.s32.totalorder %s22, 0
      %p203 = por %p201, %p202
      %s204 = ssub.s32 %s23, %s42
      %s205 = ssub.s32 %s24, %s38
      %s206 = sor.u32 %s204, %s205
      %p207 = scmp.eq.s32.totalorder %s206, 0
      %s209 = sadd.s32 %s208, 1
      %s210 = scalar_select %p207, %s208, %s209
      %p213 = pneg %p207
      %p214 = scmp.eq.s32.totalorder %s16, 7
      %p215 = por %p213, %p214
      %p216 = scmp.ne.s32.totalorder %s208, %s211
      %p217 = scmp.eq.s32.totalorder %s16, 0
      %p218 = por %p216, %p217
      %p219 = scmp.ne.s32.totalorder %s208, %s211
      %p220 = scmp.eq.s32.totalorder %s21, 7
      %p221 = por %p219, %p220
      %p222 = scmp.ne.s32.totalorder %s211, %s212
      %p223 = scmp.eq.s32.totalorder %s21, 0
      %p224 = por %p222, %p223
      %p225 = scmp.ne.s32.totalorder %s211, %s212
      %p226 = scmp.eq.s32.totalorder %s22, 7
      %p227 = por %p225, %p226
      %p229 = scmp.ne.s32.totalorder %s212, %s228
      %p230 = scmp.eq.s32.totalorder %s22, 0
      %p231 = por %p229, %p230
      %p232 = scmp.le.s32.totalorder 1, %s16
      %p233 = scmp.lt.s32.totalorder %s16, 9
      %p234 = pnand %p232, %p233
      %p235 = pneg %p234
      // Predicated region
      $region9: #{tpu_custom_call.1} parent=5 // pred_check
        _
      $region10: #{tpu_custom_call.1} parent=5 // pred_check_branch
        %237 = sbr.rel (%p234) target = $region12
      $region11: #{tpu_custom_call.1} parent=5 // pred_region
        %s238 = ssub.s32 %s16, 1
        // Predicated region
        $region13: #{tpu_custom_call.1} parent=11 // pred_check
          %p239 = pneg %p112
        $region14: #{tpu_custom_call.1} parent=11 // pred_check_branch
          %241 = sbr.rel (%p239) target = $region16
        $region15: #{tpu_custom_call.1} parent=11 // pred_region
          _
        $region16: #{tpu_custom_call.1} parent=11 // pred_fallthru
          _
        // Predicated region
        $region17: #{tpu_custom_call.1} parent=11 // pred_check
          %p242 = pneg %p133
        $region18: #{tpu_custom_call.1} parent=11 // pred_check_branch
          %244 = sbr.rel (%p242) target = $region20
        $region19: #{tpu_custom_call.1} parent=11 // pred_region
          _
        $region20: #{tpu_custom_call.1} parent=11 // pred_fallthru
          _
        // Predicated region
        $region21: #{tpu_custom_call.1} parent=11 // pred_check
          %p245 = pneg %p154
        $region22: #{tpu_custom_call.1} parent=11 // pred_check_branch
          %247 = sbr.rel (%p245) target = $region24
        $region23: #{tpu_custom_call.1} parent=11 // pred_region
          _
        $region24: #{tpu_custom_call.1} parent=11 // pred_fallthru
          _
        // Predicated region
        $region25: #{tpu_custom_call.1} parent=11 // pred_check
          %p248 = pneg %p175
        $region26: #{tpu_custom_call.1} parent=11 // pred_check_branch
          %250 = sbr.rel (%p248) target = $region28
        $region27: #{tpu_custom_call.1} parent=11 // pred_region
          _
        $region28: #{tpu_custom_call.1} parent=11 // pred_fallthru
          _
        // Predicated region
        $region29: #{tpu_custom_call.1} parent=11 // pred_check
          %p251 = pneg %p196
        $region30: #{tpu_custom_call.1} parent=11 // pred_check_branch
          %253 = sbr.rel (%p251) target = $region32
        $region31: #{tpu_custom_call.1} parent=11 // pred_region
          _
        $region32: #{tpu_custom_call.1} parent=11 // pred_fallthru
          _
      $region12: #{tpu_custom_call.1} parent=5 // pred_fallthru
        _
      %p254 = scmp.lt.s32.totalorder %s16, 8
      // Predicated region
      $region33: #{tpu_custom_call.1} parent=5 // pred_check
        %p255 = pneg %p254
      $region34: #{tpu_custom_call.1} parent=5 // pred_check_branch
        %257 = sbr.rel (%p255) target = $region36
      $region35: #{tpu_custom_call.1} parent=5 // pred_region
        // Predicated region
        $region37: #{tpu_custom_call.1} parent=35 // pred_check
          %p258 = pneg %p57
        $region38: #{tpu_custom_call.1} parent=35 // pred_check_branch
          %260 = sbr.rel (%p258) target = $region40
        $region39: #{tpu_custom_call.1} parent=35 // pred_region
          %p261 = scmp.lt.s32.totalorder %s23, 1
          %s262 = scalar_select %p261, %s23, 1
          %p263 = scmp.lt.s32.totalorder %s24, 1
          %s264 = scalar_select %p263, %s24, 1
          %s265 = smul.addr %s262, 2
          %s266 = sadd.s32 %s264, %s265
          %s267 = smul.addr %s266, 8
          %s268 = scalar_lea.vmem %s0, %s267
        $region40: #{tpu_custom_call.1} parent=35 // pred_fallthru
          _
        // Predicated region
        $region41: #{tpu_custom_call.1} parent=35 // pred_check
          %p269 = pneg %p85
        $region42: #{tpu_custom_call.1} parent=35 // pred_check_branch
          %271 = sbr.rel (%p269) target = $region44
        $region43: #{tpu_custom_call.1} parent=35 // pred_region
          %p272 = scmp.lt.s32.totalorder %s23, 1
          %s273 = scalar_select %p272, %s23, 1
          %p274 = scmp.lt.s32.totalorder %s25, 1
          %s275 = scalar_select %p274, %s25, 1
          %s276 = smul.addr %s273, 2
          %s277 = sadd.s32 %s275, %s276
          %s278 = smul.addr %s277, 8
          %s279 = scalar_lea.vmem %s1, %s278
        $region44: #{tpu_custom_call.1} parent=35 // pred_fallthru
          _
      $region36: #{tpu_custom_call.1} parent=5 // pred_fallthru
        _
      %p280 = scmp.le.s32.totalorder 1, %s16
      %p281 = scmp.lt.s32.totalorder %s16, 9
      %p282 = pnand %p280, %p281
      %p283 = pneg %p282
      // Predicated region
      $region45: #{tpu_custom_call.1} parent=5 // pred_check
        _
      $region46: #{tpu_custom_call.1} parent=5 // pred_check_branch
        %285 = sbr.rel (%p282) target = $region48
      $region47: #{tpu_custom_call.1} parent=5 // pred_region
        %s286 = ssub.s32 %s16, 1
        %p287 = scmp.lt.s32.totalorder %s26, 1
        %s288 = scalar_select %p287, %s26, 1
        %p289 = scmp.lt.s32.totalorder %s27, 1
        %s290 = scalar_select %p289, %s27, 1
        %s291 = smul.addr %s288, 2
        %s292 = sadd.s32 %s290, %s291
        %s293 = smul.addr %s292, 8
        %s294 = scalar_lea.vmem %s0, %s293
        %p295 = pneg %p63
        %p296 = pneg %p60
        %p297 = scmp.lt.s32.totalorder %s26, 1
        %s298 = scalar_select %p297, %s26, 1
        %p299 = scmp.lt.s32.totalorder %s28, 1
        %s300 = scalar_select %p299, %s28, 1
        %s301 = smul.addr %s298, 2
        %s302 = sadd.s32 %s300, %s301
        %s303 = smul.addr %s302, 8
        %s304 = scalar_lea.vmem %s1, %s303
        %p305 = pneg %p91
        %p306 = pneg %p88
        %p307 = pneg %p112
        %p308 = pneg %p109
        %p309 = pneg %p133
        %p310 = pneg %p130
        %p311 = pneg %p154
        %p312 = pneg %p151
        %p313 = pneg %p175
        %p314 = pneg %p172
        %p315 = pneg %p196
        %p316 = pneg %p193
        %p317 = pneg %p224
        %p318 = pneg %p221
        %s319 = sand.u32 %s211, 1
        %s320 = scalar_lea.sflag [#allocation7], %s319
        %s321 = sand.u32 %s211, 1
        %s322 = smul.addr %s321, 8
        %s323 = scalar_lea.vmem [#allocation6], %s322
        %p324 = scmp.lt.s32.totalorder %s26, 1
        %s325 = scalar_select %p324, %s26, 1
        %p326 = scmp.lt.s32.totalorder %s27, 1
        %s327 = scalar_select %p326, %s27, 1
        %s328 = smul.addr %s325, 2
        %s329 = sadd.s32 %s327, %s328
        %s330 = smul.addr %s329, 8
        %s331 = scalar_lea.vmem %s0, %s330
        %p332 = scmp.lt.s32.totalorder %s26, 1
        %s333 = scalar_select %p332, %s26, 1
        %p334 = scmp.lt.s32.totalorder %s28, 1
        %s335 = scalar_select %p334, %s28, 1
        %s336 = smul.addr %s333, 2
        %s337 = sadd.s32 %s335, %s336
        %s338 = smul.addr %s337, 8
        %s339 = scalar_lea.vmem %s1, %s338
        %p341 = scmp.eq.s32.totalorder %s28, 0
        // Predicated region
        $region49: #{tpu_custom_call.1} parent=47 // pred_check
          %p342 = pneg %p341
        $region50: #{tpu_custom_call.1} parent=47 // pred_check_branch
          %344 = sbr.rel (%p342) target = $region52
        $region51: #{tpu_custom_call.1} parent=47 // pred_region
          %v345 = vld [vmem:[%s331] sm:$0xff]
          %v346 = vpack.c.bf16 %v345, %v345
          %v347 = vld [vmem:[%s2] sm:$0xf]
          %v348 = vld [vmem:[%s2 + $0x4] sm:$0xf]
          %v349 = vld [vmem:[%s2 + $0x8] sm:$0xf]
          %v350 = vld [vmem:[%s2 + $0xc] sm:$0xf]
          %v351 = vld [vmem:[%s2 + $0x10] sm:$0xf]
          %v352 = vld [vmem:[%s2 + $0x14] sm:$0xf]
          %v353 = vld [vmem:[%s2 + $0x18] sm:$0xf]
          %v354 = vld [vmem:[%s2 + $0x1c] sm:$0xf]
          %v355 = vld [vmem:[%s2 + $0x20] sm:$0xf]
          %v356 = vld [vmem:[%s2 + $0x24] sm:$0xf]
          %v357 = vld [vmem:[%s2 + $0x28] sm:$0xf]
          %v358 = vld [vmem:[%s2 + $0x2c] sm:$0xf]
          %v359 = vld [vmem:[%s2 + $0x30] sm:$0xf]
          %v360 = vld [vmem:[%s2 + $0x34] sm:$0xf]
          %v361 = vld [vmem:[%s2 + $0x38] sm:$0xf]
          %v362 = vld [vmem:[%s2 + $0x3c] sm:$0xf]
          %v363 = vld [vmem:[%s2 + $0x40] sm:$0xf]
          %v364 = vld [vmem:[%s2 + $0x44] sm:$0xf]
          %v365 = vld [vmem:[%s2 + $0x48] sm:$0xf]
          %v366 = vld [vmem:[%s2 + $0x4c] sm:$0xf]
          %v367 = vld [vmem:[%s2 + $0x50] sm:$0xf]
          %v368 = vld [vmem:[%s2 + $0x54] sm:$0xf]
          %v369 = vld [vmem:[%s2 + $0x58] sm:$0xf]
          %v370 = vld [vmem:[%s2 + $0x5c] sm:$0xf]
          %v371 = vld [vmem:[%s2 + $0x60] sm:$0xf]
          %v372 = vld [vmem:[%s2 + $0x64] sm:$0xf]
          %v373 = vld [vmem:[%s2 + $0x68] sm:$0xf]
          %v374 = vld [vmem:[%s2 + $0x6c] sm:$0xf]
          %v375 = vld [vmem:[%s2 + $0x70] sm:$0xf]
          %v376 = vld [vmem:[%s2 + $0x74] sm:$0xf]
          %v377 = vld [vmem:[%s2 + $0x78] sm:$0xf]
          %v378 = vld [vmem:[%s2 + $0x7c] sm:$0xf]
          %v379 = vld [vmem:[%s2 + $0x80] sm:$0xf]
          %v380 = vld [vmem:[%s2 + $0x84] sm:$0xf]
          %v381 = vld [vmem:[%s2 + $0x88] sm:$0xf]
          %v382 = vld [vmem:[%s2 + $0x8c] sm:$0xf]
          %v383 = vld [vmem:[%s2 + $0x90] sm:$0xf]
          %v384 = vld [vmem:[%s2 + $0x94] sm:$0xf]
          %v385 = vld [vmem:[%s2 + $0x98] sm:$0xf]
          %v386 = vld [vmem:[%s2 + $0x9c] sm:$0xf]
          %v387 = vld [vmem:[%s2 + $0xa0] sm:$0xf]
          %v388 = vld [vmem:[%s2 + $0xa4] sm:$0xf]
          %v389 = vld [vmem:[%s2 + $0xa8] sm:$0xf]
          %v390 = vld [vmem:[%s2 + $0xac] sm:$0xf]
          %v391 = vld [vmem:[%s2 + $0xb0] sm:$0xf]
          %v392 = vld [vmem:[%s2 + $0xb4] sm:$0xf]
          %v393 = vld [vmem:[%s2 + $0xb8] sm:$0xf]
          %v394 = vld [vmem:[%s2 + $0xbc] sm:$0xf]
          %v395 = vld [vmem:[%s2 + $0xc0] sm:$0xf]
          %v396 = vld [vmem:[%s2 + $0xc4] sm:$0xf]
          %v397 = vld [vmem:[%s2 + $0xc8] sm:$0xf]
          %v398 = vld [vmem:[%s2 + $0xcc] sm:$0xf]
          %v399 = vld [vmem:[%s2 + $0xd0] sm:$0xf]
          %v400 = vld [vmem:[%s2 + $0xd4] sm:$0xf]
          %v401 = vld [vmem:[%s2 + $0xd8] sm:$0xf]
          %v402 = vld [vmem:[%s2 + $0xdc] sm:$0xf]
          %v403 = vld [vmem:[%s2 + $0xe0] sm:$0xf]
          %v404 = vld [vmem:[%s2 + $0xe4] sm:$0xf]
          %v405 = vld [vmem:[%s2 + $0xe8] sm:$0xf]
          %v406 = vld [vmem:[%s2 + $0xec] sm:$0xf]
          %v407 = vld [vmem:[%s2 + $0xf0] sm:$0xf]
          %v408 = vld [vmem:[%s2 + $0xf4] sm:$0xf]
          %v409 = vld [vmem:[%s2 + $0xf8] sm:$0xf]
          %v410 = vld [vmem:[%s2 + $0xfc] sm:$0xf]
          %v411 = vld [vmem:[%s2 + $0x100] sm:$0xf]
          %v412 = vld [vmem:[%s2 + $0x104] sm:$0xf]
          %v413 = vld [vmem:[%s2 + $0x108] sm:$0xf]
          %v414 = vld [vmem:[%s2 + $0x10c] sm:$0xf]
          %v415 = vld [vmem:[%s2 + $0x110] sm:$0xf]
          %v416 = vld [vmem:[%s2 + $0x114] sm:$0xf]
          %v417 = vld [vmem:[%s2 + $0x118] sm:$0xf]
          %v418 = vld [vmem:[%s2 + $0x11c] sm:$0xf]
          %v419 = vld [vmem:[%s2 + $0x120] sm:$0xf]
          %v420 = vld [vmem:[%s2 + $0x124] sm:$0xf]
          %v421 = vld [vmem:[%s2 + $0x128] sm:$0xf]
          %v422 = vld [vmem:[%s2 + $0x12c] sm:$0xf]
          %v423 = vld [vmem:[%s2 + $0x130] sm:$0xf]
          %v424 = vld [vmem:[%s2 + $0x134] sm:$0xf]
          %v425 = vld [vmem:[%s2 + $0x138] sm:$0xf]
          %v426 = vld [vmem:[%s2 + $0x13c] sm:$0xf]
          %v427 = vld [vmem:[%s2 + $0x140] sm:$0xf]
          %v428 = vld [vmem:[%s2 + $0x144] sm:$0xf]
          %v429 = vld [vmem:[%s2 + $0x148] sm:$0xf]
          %v430 = vld [vmem:[%s2 + $0x14c] sm:$0xf]
          %v431 = vld [vmem:[%s2 + $0x150] sm:$0xf]
          %v432 = vld [vmem:[%s2 + $0x154] sm:$0xf]
          %v433 = vld [vmem:[%s2 + $0x158] sm:$0xf]
          %v434 = vld [vmem:[%s2 + $0x15c] sm:$0xf]
          %v435 = vld [vmem:[%s2 + $0x160] sm:$0xf]
          %v436 = vld [vmem:[%s2 + $0x164] sm:$0xf]
          %v437 = vld [vmem:[%s2 + $0x168] sm:$0xf]
          %v438 = vld [vmem:[%s2 + $0x16c] sm:$0xf]
          %v439 = vld [vmem:[%s2 + $0x170] sm:$0xf]
          %v440 = vld [vmem:[%s2 + $0x174] sm:$0xf]
          %v441 = vld [vmem:[%s2 + $0x178] sm:$0xf]
          %v442 = vld [vmem:[%s2 + $0x17c] sm:$0xf]
          %v443 = vld [vmem:[%s2 + $0x180] sm:$0xf]
          %v444 = vld [vmem:[%s2 + $0x184] sm:$0xf]
          %v445 = vld [vmem:[%s2 + $0x188] sm:$0xf]
          %v446 = vld [vmem:[%s2 + $0x18c] sm:$0xf]
          %v447 = vld [vmem:[%s2 + $0x190] sm:$0xf]
          %v448 = vld [vmem:[%s2 + $0x194] sm:$0xf]
          %v449 = vld [vmem:[%s2 + $0x198] sm:$0xf]
          %v450 = vld [vmem:[%s2 + $0x19c] sm:$0xf]
          %v451 = vld [vmem:[%s2 + $0x1a0] sm:$0xf]
          %v452 = vld [vmem:[%s2 + $0x1a4] sm:$0xf]
          %v453 = vld [vmem:[%s2 + $0x1a8] sm:$0xf]
          %v454 = vld [vmem:[%s2 + $0x1ac] sm:$0xf]
          %v455 = vld [vmem:[%s2 + $0x1b0] sm:$0xf]
          %v456 = vld [vmem:[%s2 + $0x1b4] sm:$0xf]
          %v457 = vld [vmem:[%s2 + $0x1b8] sm:$0xf]
          %v458 = vld [vmem:[%s2 + $0x1bc] sm:$0xf]
          %v459 = vld [vmem:[%s2 + $0x1c0] sm:$0xf]
          %v460 = vld [vmem:[%s2 + $0x1c4] sm:$0xf]
          %v461 = vld [vmem:[%s2 + $0x1c8] sm:$0xf]
          %v462 = vld [vmem:[%s2 + $0x1cc] sm:$0xf]
          %v463 = vld [vmem:[%s2 + $0x1d0] sm:$0xf]
          %v464 = vld [vmem:[%s2 + $0x1d4] sm:$0xf]
          %v465 = vld [vmem:[%s2 + $0x1d8] sm:$0xf]
          %v466 = vld [vmem:[%s2 + $0x1dc] sm:$0xf]
          %v467 = vld [vmem:[%s2 + $0x1e0] sm:$0xf]
          %v468 = vld [vmem:[%s2 + $0x1e4] sm:$0xf]
          %v469 = vld [vmem:[%s2 + $0x1e8] sm:$0xf]
          %v470 = vld [vmem:[%s2 + $0x1ec] sm:$0xf]
          %v471 = vld [vmem:[%s2 + $0x1f0] sm:$0xf]
          %v472 = vld [vmem:[%s2 + $0x1f4] sm:$0xf]
          %v473 = vld [vmem:[%s2 + $0x1f8] sm:$0xf]
          %v474 = vld [vmem:[%s2 + $0x1fc] sm:$0xf]
          %v491 = vunpack.c.l.b16 %v347
          %v492 = vunpack.c.l.b16 %v348
          %v493 = vunpack.c.l.b16 %v349
          %v494 = vunpack.c.l.b16 %v350
          %v495 = vunpack.c.l.b16 %v351
          %v496 = vunpack.c.l.b16 %v352
          %v497 = vunpack.c.l.b16 %v353
          %v498 = vunpack.c.l.b16 %v354
          %v499 = vunpack.c.l.b16 %v355
          %v500 = vunpack.c.l.b16 %v356
          %v501 = vunpack.c.l.b16 %v357
          %v502 = vunpack.c.l.b16 %v358
          %v503 = vunpack.c.l.b16 %v359
          %v504 = vunpack.c.l.b16 %v360
          %v505 = vunpack.c.l.b16 %v361
          %v506 = vunpack.c.l.b16 %v362
          %v507 = vpack.c.b16 %v492, %v491
          %v508 = vpack.c.b16 %v494, %v493
          %v509 = vpack.c.b16 %v496, %v495
          %v510 = vpack.c.b16 %v498, %v497
          %v511 = vpack.c.b16 %v500, %v499
          %v512 = vpack.c.b16 %v502, %v501
          %v513 = vpack.c.b16 %v504, %v503
          %v514 = vpack.c.b16 %v506, %v505
          %523 = vmatprep.subr.bf16.mxu0 0
          %524 = vmatpush1.bf16.msra.mxu0 %v514
          %525 = vmatprep.subr.bf16.mxu0 0
          %526 = vmatpush1.bf16.msra.mxu0 %v513
          %527 = vmatprep.subr.bf16.mxu0 0
          %528 = vmatpush1.bf16.msra.mxu0 %v512
          %529 = vmatprep.subr.bf16.mxu0 0
          %530 = vmatpush1.bf16.msra.mxu0 %v511
          %531 = vmatprep.subr.bf16.mxu0 0
          %532 = vmatpush1.bf16.msra.mxu0 %v510
          %533 = vmatprep.subr.bf16.mxu0 0
          %534 = vmatpush1.bf16.msra.mxu0 %v509
          %535 = vmatprep.subr.bf16.mxu0 0
          %536 = vmatpush1.bf16.msra.mxu0 %v508
          %537 = vmatprep.subr.bf16.mxu0 0
          %538 = vmatpush1.bf16.msra.mxu0 %v507
          %539 = vmatprep.subr.bf16.mxu0 0
          %540 = vmatpush2.bf16.msra.mxu0 0
          %541 = vmatprep.subr.bf16.mxu0 0
          %542 = vmatpush2.bf16.msra.mxu0 0
          %543 = vmatprep.subr.bf16.mxu0 0
          %544 = vmatpush2.bf16.msra.mxu0 0
          %545 = vmatprep.subr.bf16.mxu0 0
          %546 = vmatpush2.bf16.msra.mxu0 0
          %547 = vmatprep.subr.bf16.mxu0 0
          %548 = vmatpush2.bf16.msra.mxu0 0
          %549 = vmatprep.subr.bf16.mxu0 0
          %550 = vmatpush2.bf16.msra.mxu0 0
          %551 = vmatprep.subr.bf16.mxu0 0
          %552 = vmatpush2.bf16.msra.mxu0 0
          %553 = vmatprep.subr.bf16.mxu0 0
          %554 = vmatpush2.bf16.msra.mxu0 0
          %555 = vmatprep.mubr.bf16.mxu0 0
          %556 = vmatmul.mubr.bf16.gmra.mxu0 %v346
          %v557 = vpop.f32.mrf.mxu0
          %v558 = vadd.f32 0.0, %v557
          %v559 = vpop.f32.mrf.mxu0
          %v560 = vpop.f32.mrf.mxu0
          %v561 = vpop.f32.mrf.mxu0
          %562 = vdwg.mxu0
          %v579 = vunpack.c.l.b16 %v363
          %v580 = vunpack.c.l.b16 %v364
          %v581 = vunpack.c.l.b16 %v365
          %v582 = vunpack.c.l.b16 %v366
          %v583 = vunpack.c.l.b16 %v367
          %v584 = vunpack.c.l.b16 %v368
          %v585 = vunpack.c.l.b16 %v369
          %v586 = vunpack.c.l.b16 %v370
          %v587 = vunpack.c.l.b16 %v371
          %v588 = vunpack.c.l.b16 %v372
          %v589 = vunpack.c.l.b16 %v373
          %v590 = vunpack.c.l.b16 %v374
          %v591 = vunpack.c.l.b16 %v375
          %v592 = vunpack.c.l.b16 %v376
          %v593 = vunpack.c.l.b16 %v377
          %v594 = vunpack.c.l.b16 %v378
          %v595 = vpack.c.b16 %v580, %v579
          %v596 = vpack.c.b16 %v582, %v581
          %v597 = vpack.c.b16 %v584, %v583
          %v598 = vpack.c.b16 %v586, %v585
          %v599 = vpack.c.b16 %v588, %v587
          %v600 = vpack.c.b16 %v590, %v589
          %v601 = vpack.c.b16 %v592, %v591
          %v602 = vpack.c.b16 %v594, %v593
          %611 = vmatprep.subr.bf16.mxu0 0
          %612 = vmatpush1.bf16.msra.mxu0 %v602
          %613 = vmatprep.subr.bf16.mxu0 0
          %614 = vmatpush1.bf16.msra.mxu0 %v601
          %615 = vmatprep.subr.bf16.mxu0 0
          %616 = vmatpush1.bf16.msra.mxu0 %v600
          %617 = vmatprep.subr.bf16.mxu0 0
          %618 = vmatpush1.bf16.msra.mxu0 %v599
          %619 = vmatprep.subr.bf16.mxu0 0
          %620 = vmatpush1.bf16.msra.mxu0 %v598
          %621 = vmatprep.subr.bf16.mxu0 0
          %622 = vmatpush1.bf16.msra.mxu0 %v597
          %623 = vmatprep.subr.bf16.mxu0 0
          %624 = vmatpush1.bf16.msra.mxu0 %v596
          %625 = vmatprep.subr.bf16.mxu0 0
          %626 = vmatpush1.bf16.msra.mxu0 %v595
          %627 = vmatprep.subr.bf16.mxu0 0
          %628 = vmatpush2.bf16.msra.mxu0 0
          %629 = vmatprep.subr.bf16.mxu0 0
          %630 = vmatpush2.bf16.msra.mxu0 0
          %631 = vmatprep.subr.bf16.mxu0 0
          %632 = vmatpush2.bf16.msra.mxu0 0
          %633 = vmatprep.subr.bf16.mxu0 0
          %634 = vmatpush2.bf16.msra.mxu0 0
          %635 = vmatprep.subr.bf16.mxu0 0
          %636 = vmatpush2.bf16.msra.mxu0 0
          %637 = vmatprep.subr.bf16.mxu0 0
          %638 = vmatpush2.bf16.msra.mxu0 0
          %639 = vmatprep.subr.bf16.mxu0 0
          %640 = vmatpush2.bf16.msra.mxu0 0
          %641 = vmatprep.subr.bf16.mxu0 0
          %642 = vmatpush2.bf16.msra.mxu0 0
          %643 = vmatprep.mubr.bf16.mxu0 0
          %644 = vmatmul.mubr.bf16.gmra.mxu0 %v346
          %v645 = vpop.f32.mrf.mxu0
          %v646 = vadd.f32 0.0, %v645
          %v647 = vpop.f32.mrf.mxu0
          %v648 = vpop.f32.mrf.mxu0
          %v649 = vpop.f32.mrf.mxu0
          %650 = vdwg.mxu0
          %v667 = vunpack.c.l.b16 %v379
          %v668 = vunpack.c.l.b16 %v380
          %v669 = vunpack.c.l.b16 %v381
          %v670 = vunpack.c.l.b16 %v382
          %v671 = vunpack.c.l.b16 %v383
          %v672 = vunpack.c.l.b16 %v384
          %v673 = vunpack.c.l.b16 %v385
          %v674 = vunpack.c.l.b16 %v386
          %v675 = vunpack.c.l.b16 %v387
          %v676 = vunpack.c.l.b16 %v388
          %v677 = vunpack.c.l.b16 %v389
          %v678 = vunpack.c.l.b16 %v390
          %v679 = vunpack.c.l.b16 %v391
          %v680 = vunpack.c.l.b16 %v392
          %v681 = vunpack.c.l.b16 %v393
          %v682 = vunpack.c.l.b16 %v394
          %v683 = vpack.c.b16 %v668, %v667
          %v684 = vpack.c.b16 %v670, %v669
          %v685 = vpack.c.b16 %v672, %v671
          %v686 = vpack.c.b16 %v674, %v673
          %v687 = vpack.c.b16 %v676, %v675
          %v688 = vpack.c.b16 %v678, %v677
          %v689 = vpack.c.b16 %v680, %v679
          %v690 = vpack.c.b16 %v682, %v681
          %699 = vmatprep.subr.bf16.mxu0 0
          %700 = vmatpush1.bf16.msra.mxu0 %v690
          %701 = vmatprep.subr.bf16.mxu0 0
          %702 = vmatpush1.bf16.msra.mxu0 %v689
          %703 = vmatprep.subr.bf16.mxu0 0
          %704 = vmatpush1.bf16.msra.mxu0 %v688
          %705 = vmatprep.subr.bf16.mxu0 0
          %706 = vmatpush1.bf16.msra.mxu0 %v687
          %707 = vmatprep.subr.bf16.mxu0 0
          %708 = vmatpush1.bf16.msra.mxu0 %v686
          %709 = vmatprep.subr.bf16.mxu0 0
          %710 = vmatpush1.bf16.msra.mxu0 %v685
          %711 = vmatprep.subr.bf16.mxu0 0
          %712 = vmatpush1.bf16.msra.mxu0 %v684
          %713 = vmatprep.subr.bf16.mxu0 0
          %714 = vmatpush1.bf16.msra.mxu0 %v683
          %715 = vmatprep.subr.bf16.mxu0 0
          %716 = vmatpush2.bf16.msra.mxu0 0
          %717 = vmatprep.subr.bf16.mxu0 0
          %718 = vmatpush2.bf16.msra.mxu0 0
          %719 = vmatprep.subr.bf16.mxu0 0
          %720 = vmatpush2.bf16.msra.mxu0 0
          %721 = vmatprep.subr.bf16.mxu0 0
          %722 = vmatpush2.bf16.msra.mxu0 0
          %723 = vmatprep.subr.bf16.mxu0 0
          %724 = vmatpush2.bf16.msra.mxu0 0
          %725 = vmatprep.subr.bf16.mxu0 0
          %726 = vmatpush2.bf16.msra.mxu0 0
          %727 = vmatprep.subr.bf16.mxu0 0
          %728 = vmatpush2.bf16.msra.mxu0 0
          %729 = vmatprep.subr.bf16.mxu0 0
          %730 = vmatpush2.bf16.msra.mxu0 0
          %731 = vmatprep.mubr.bf16.mxu0 0
          %732 = vmatmul.mubr.bf16.gmra.mxu0 %v346
          %v733 = vpop.f32.mrf.mxu0
          %v734 = vadd.f32 0.0, %v733
          %v735 = vpop.f32.mrf.mxu0
          %v736 = vpop.f32.mrf.mxu0
          %v737 = vpop.f32.mrf.mxu0
          %738 = vdwg.mxu0
          %v755 = vunpack.c.l.b16 %v395
          %v756 = vunpack.c.l.b16 %v396
          %v757 = vunpack.c.l.b16 %v397
          %v758 = vunpack.c.l.b16 %v398
          %v759 = vunpack.c.l.b16 %v399
          %v760 = vunpack.c.l.b16 %v400
          %v761 = vunpack.c.l.b16 %v401
          %v762 = vunpack.c.l.b16 %v402
          %v763 = vunpack.c.l.b16 %v403
          %v764 = vunpack.c.l.b16 %v404
          %v765 = vunpack.c.l.b16 %v405
          %v766 = vunpack.c.l.b16 %v406
          %v767 = vunpack.c.l.b16 %v407
          %v768 = vunpack.c.l.b16 %v408
          %v769 = vunpack.c.l.b16 %v409
          %v770 = vunpack.c.l.b16 %v410
          %v771 = vpack.c.b16 %v756, %v755
          %v772 = vpack.c.b16 %v758, %v757
          %v773 = vpack.c.b16 %v760, %v759
          %v774 = vpack.c.b16 %v762, %v761
          %v775 = vpack.c.b16 %v764, %v763
          %v776 = vpack.c.b16 %v766, %v765
          %v777 = vpack.c.b16 %v768, %v767
          %v778 = vpack.c.b16 %v770, %v769
          %787 = vmatprep.subr.bf16.mxu0 0
          %788 = vmatpush1.bf16.msra.mxu0 %v778
          %789 = vmatprep.subr.bf16.mxu0 0
          %790 = vmatpush1.bf16.msra.mxu0 %v777
          %791 = vmatprep.subr.bf16.mxu0 0
          %792 = vmatpush1.bf16.msra.mxu0 %v776
          %793 = vmatprep.subr.bf16.mxu0 0
          %794 = vmatpush1.bf16.msra.mxu0 %v775
          %795 = vmatprep.subr.bf16.mxu0 0
          %796 = vmatpush1.bf16.msra.mxu0 %v774
          %797 = vmatprep.subr.bf16.mxu0 0
          %798 = vmatpush1.bf16.msra.mxu0 %v773
          %799 = vmatprep.subr.bf16.mxu0 0
          %800 = vmatpush1.bf16.msra.mxu0 %v772
          %801 = vmatprep.subr.bf16.mxu0 0
          %802 = vmatpush1.bf16.msra.mxu0 %v771
          %803 = vmatprep.subr.bf16.mxu0 0
          %804 = vmatpush2.bf16.msra.mxu0 0
          %805 = vmatprep.subr.bf16.mxu0 0
          %806 = vmatpush2.bf16.msra.mxu0 0
          %807 = vmatprep.subr.bf16.mxu0 0
          %808 = vmatpush2.bf16.msra.mxu0 0
          %809 = vmatprep.subr.bf16.mxu0 0
          %810 = vmatpush2.bf16.msra.mxu0 0
          %811 = vmatprep.subr.bf16.mxu0 0
          %812 = vmatpush2.bf16.msra.mxu0 0
          %813 = vmatprep.subr.bf16.mxu0 0
          %814 = vmatpush2.bf16.msra.mxu0 0
          %815 = vmatprep.subr.bf16.mxu0 0
          %816 = vmatpush2.bf16.msra.mxu0 0
          %817 = vmatprep.subr.bf16.mxu0 0
          %818 = vmatpush2.bf16.msra.mxu0 0
          %819 = vmatprep.mubr.bf16.mxu0 0
          %820 = vmatmul.mubr.bf16.gmra.mxu0 %v346
          %v821 = vpop.f32.mrf.mxu0
          %v822 = vadd.f32 0.0, %v821
          %v823 = vpop.f32.mrf.mxu0
          %v824 = vpop.f32.mrf.mxu0
          %v825 = vpop.f32.mrf.mxu0
          %826 = vdwg.mxu0
          %v843 = vunpack.c.l.b16 %v411
          %v844 = vunpack.c.l.b16 %v412
          %v845 = vunpack.c.l.b16 %v413
          %v846 = vunpack.c.l.b16 %v414
          %v847 = vunpack.c.l.b16 %v415
          %v848 = vunpack.c.l.b16 %v416
          %v849 = vunpack.c.l.b16 %v417
          %v850 = vunpack.c.l.b16 %v418
          %v851 = vunpack.c.l.b16 %v419
          %v852 = vunpack.c.l.b16 %v420
          %v853 = vunpack.c.l.b16 %v421
          %v854 = vunpack.c.l.b16 %v422
          %v855 = vunpack.c.l.b16 %v423
          %v856 = vunpack.c.l.b16 %v424
          %v857 = vunpack.c.l.b16 %v425
          %v858 = vunpack.c.l.b16 %v426
          %v859 = vpack.c.b16 %v844, %v843
          %v860 = vpack.c.b16 %v846, %v845
          %v861 = vpack.c.b16 %v848, %v847
          %v862 = vpack.c.b16 %v850, %v849
          %v863 = vpack.c.b16 %v852, %v851
          %v864 = vpack.c.b16 %v854, %v853
          %v865 = vpack.c.b16 %v856, %v855
          %v866 = vpack.c.b16 %v858, %v857
          %875 = vmatprep.subr.bf16.mxu0 0
          %876 = vmatpush1.bf16.msra.mxu0 %v866
          %877 = vmatprep.subr.bf16.mxu0 0
          %878 = vmatpush1.bf16.msra.mxu0 %v865
          %879 = vmatprep.subr.bf16.mxu0 0
          %880 = vmatpush1.bf16.msra.mxu0 %v864
          %881 = vmatprep.subr.bf16.mxu0 0
          %882 = vmatpush1.bf16.msra.mxu0 %v863
          %883 = vmatprep.subr.bf16.mxu0 0
          %884 = vmatpush1.bf16.msra.mxu0 %v862
          %885 = vmatprep.subr.bf16.mxu0 0
          %886 = vmatpush1.bf16.msra.mxu0 %v861
          %887 = vmatprep.subr.bf16.mxu0 0
          %888 = vmatpush1.bf16.msra.mxu0 %v860
          %889 = vmatprep.subr.bf16.mxu0 0
          %890 = vmatpush1.bf16.msra.mxu0 %v859
          %891 = vmatprep.subr.bf16.mxu0 0
          %892 = vmatpush2.bf16.msra.mxu0 0
          %893 = vmatprep.subr.bf16.mxu0 0
          %894 = vmatpush2.bf16.msra.mxu0 0
          %895 = vmatprep.subr.bf16.mxu0 0
          %896 = vmatpush2.bf16.msra.mxu0 0
          %897 = vmatprep.subr.bf16.mxu0 0
          %898 = vmatpush2.bf16.msra.mxu0 0
          %899 = vmatprep.subr.bf16.mxu0 0
          %900 = vmatpush2.bf16.msra.mxu0 0
          %901 = vmatprep.subr.bf16.mxu0 0
          %902 = vmatpush2.bf16.msra.mxu0 0
          %903 = vmatprep.subr.bf16.mxu0 0
          %904 = vmatpush2.bf16.msra.mxu0 0
          %905 = vmatprep.subr.bf16.mxu0 0
          %906 = vmatpush2.bf16.msra.mxu0 0
          %907 = vmatprep.mubr.bf16.mxu0 0
          %908 = vmatmul.mubr.bf16.gmra.mxu0 %v346
          %v909 = vpop.f32.mrf.mxu0
          %v910 = vadd.f32 0.0, %v909
          %v911 = vpop.f32.mrf.mxu0
          %v912 = vpop.f32.mrf.mxu0
          %v913 = vpop.f32.mrf.mxu0
          %914 = vdwg.mxu0
          %v931 = vunpack.c.l.b16 %v427
          %v932 = vunpack.c.l.b16 %v428
          %v933 = vunpack.c.l.b16 %v429
          %v934 = vunpack.c.l.b16 %v430
          %v935 = vunpack.c.l.b16 %v431
          %v936 = vunpack.c.l.b16 %v432
          %v937 = vunpack.c.l.b16 %v433
          %v938 = vunpack.c.l.b16 %v434
          %v939 = vunpack.c.l.b16 %v435
          %v940 = vunpack.c.l.b16 %v436
          %v941 = vunpack.c.l.b16 %v437
          %v942 = vunpack.c.l.b16 %v438
          %v943 = vunpack.c.l.b16 %v439
          %v944 = vunpack.c.l.b16 %v440
          %v945 = vunpack.c.l.b16 %v441
          %v946 = vunpack.c.l.b16 %v442
          %v947 = vpack.c.b16 %v932, %v931
          %v948 = vpack.c.b16 %v934, %v933
          %v949 = vpack.c.b16 %v936, %v935
          %v950 = vpack.c.b16 %v938, %v937
          %v951 = vpack.c.b16 %v940, %v939
          %v952 = vpack.c.b16 %v942, %v941
          %v953 = vpack.c.b16 %v944, %v943
          %v954 = vpack.c.b16 %v946, %v945
          %963 = vmatprep.subr.bf16.mxu0 0
          %964 = vmatpush1.bf16.msra.mxu0 %v954
          %965 = vmatprep.subr.bf16.mxu0 0
          %966 = vmatpush1.bf16.msra.mxu0 %v953
          %967 = vmatprep.subr.bf16.mxu0 0
          %968 = vmatpush1.bf16.msra.mxu0 %v952
          %969 = vmatprep.subr.bf16.mxu0 0
          %970 = vmatpush1.bf16.msra.mxu0 %v951
          %971 = vmatprep.subr.bf16.mxu0 0
          %972 = vmatpush1.bf16.msra.mxu0 %v950
          %973 = vmatprep.subr.bf16.mxu0 0
          %974 = vmatpush1.bf16.msra.mxu0 %v949
          %975 = vmatprep.subr.bf16.mxu0 0
          %976 = vmatpush1.bf16.msra.mxu0 %v948
          %977 = vmatprep.subr.bf16.mxu0 0
          %978 = vmatpush1.bf16.msra.mxu0 %v947
          %979 = vmatprep.subr.bf16.mxu0 0
          %980 = vmatpush2.bf16.msra.mxu0 0
          %981 = vmatprep.subr.bf16.mxu0 0
          %982 = vmatpush2.bf16.msra.mxu0 0
          %983 = vmatprep.subr.bf16.mxu0 0
          %984 = vmatpush2.bf16.msra.mxu0 0
          %985 = vmatprep.subr.bf16.mxu0 0
          %986 = vmatpush2.bf16.msra.mxu0 0
          %987 = vmatprep.subr.bf16.mxu0 0
          %988 = vmatpush2.bf16.msra.mxu0 0
          %989 = vmatprep.subr.bf16.mxu0 0
          %990 = vmatpush2.bf16.msra.mxu0 0
          %991 = vmatprep.subr.bf16.mxu0 0
          %992 = vmatpush2.bf16.msra.mxu0 0
          %993 = vmatprep.subr.bf16.mxu0 0
          %994 = vmatpush2.bf16.msra.mxu0 0
          %995 = vmatprep.mubr.bf16.mxu0 0
          %996 = vmatmul.mubr.bf16.gmra.mxu0 %v346
          %v997 = vpop.f32.mrf.mxu0
          %v998 = vadd.f32 0.0, %v997
          %v999 = vpop.f32.mrf.mxu0
          %v1000 = vpop.f32.mrf.mxu0
          %v1001 = vpop.f32.mrf.mxu0
          %1002 = vdwg.mxu0
          %v1019 = vunpack.c.l.b16 %v443
          %v1020 = vunpack.c.l.b16 %v444
          %v1021 = vunpack.c.l.b16 %v445
          %v1022 = vunpack.c.l.b16 %v446
          %v1023 = vunpack.c.l.b16 %v447
          %v1024 = vunpack.c.l.b16 %v448
          %v1025 = vunpack.c.l.b16 %v449
          %v1026 = vunpack.c.l.b16 %v450
          %v1027 = vunpack.c.l.b16 %v451
          %v1028 = vunpack.c.l.b16 %v452
          %v1029 = vunpack.c.l.b16 %v453
          %v1030 = vunpack.c.l.b16 %v454
          %v1031 = vunpack.c.l.b16 %v455
          %v1032 = vunpack.c.l.b16 %v456
          %v1033 = vunpack.c.l.b16 %v457
          %v1034 = vunpack.c.l.b16 %v458
          %v1035 = vpack.c.b16 %v1020, %v1019
          %v1036 = vpack.c.b16 %v1022, %v1021
          %v1037 = vpack.c.b16 %v1024, %v1023
          %v1038 = vpack.c.b16 %v1026, %v1025
          %v1039 = vpack.c.b16 %v1028, %v1027
          %v1040 = vpack.c.b16 %v1030, %v1029
          %v1041 = vpack.c.b16 %v1032, %v1031
          %v1042 = vpack.c.b16 %v1034, %v1033
          %1051 = vmatprep.subr.bf16.mxu0 0
          %1052 = vmatpush1.bf16.msra.mxu0 %v1042
          %1053 = vmatprep.subr.bf16.mxu0 0
          %1054 = vmatpush1.bf16.msra.mxu0 %v1041
          %1055 = vmatprep.subr.bf16.mxu0 0
          %1056 = vmatpush1.bf16.msra.mxu0 %v1040
          %1057 = vmatprep.subr.bf16.mxu0 0
          %1058 = vmatpush1.bf16.msra.mxu0 %v1039
          %1059 = vmatprep.subr.bf16.mxu0 0
          %1060 = vmatpush1.bf16.msra.mxu0 %v1038
          %1061 = vmatprep.subr.bf16.mxu0 0
          %1062 = vmatpush1.bf16.msra.mxu0 %v1037
          %1063 = vmatprep.subr.bf16.mxu0 0
          %1064 = vmatpush1.bf16.msra.mxu0 %v1036
          %1065 = vmatprep.subr.bf16.mxu0 0
          %1066 = vmatpush1.bf16.msra.mxu0 %v1035
          %1067 = vmatprep.subr.bf16.mxu0 0
          %1068 = vmatpush2.bf16.msra.mxu0 0
          %1069 = vmatprep.subr.bf16.mxu0 0
          %1070 = vmatpush2.bf16.msra.mxu0 0
          %1071 = vmatprep.subr.bf16.mxu0 0
          %1072 = vmatpush2.bf16.msra.mxu0 0
          %1073 = vmatprep.subr.bf16.mxu0 0
          %1074 = vmatpush2.bf16.msra.mxu0 0
          %1075 = vmatprep.subr.bf16.mxu0 0
          %1076 = vmatpush2.bf16.msra.mxu0 0
          %1077 = vmatprep.subr.bf16.mxu0 0
          %1078 = vmatpush2.bf16.msra.mxu0 0
          %1079 = vmatprep.subr.bf16.mxu0 0
          %1080 = vmatpush2.bf16.msra.mxu0 0
          %1081 = vmatprep.subr.bf16.mxu0 0
          %1082 = vmatpush2.bf16.msra.mxu0 0
          %1083 = vmatprep.mubr.bf16.mxu0 0
          %1084 = vmatmul.mubr.bf16.gmra.mxu0 %v346
          %v1085 = vpop.f32.mrf.mxu0
          %v1086 = vadd.f32 0.0, %v1085
          %v1087 = vpop.f32.mrf.mxu0
          %v1088 = vpop.f32.mrf.mxu0
          %v1089 = vpop.f32.mrf.mxu0
          %1090 = vdwg.mxu0
          %v1107 = vunpack.c.l.b16 %v459
          %v1108 = vunpack.c.l.b16 %v460
          %v1109 = vunpack.c.l.b16 %v461
          %v1110 = vunpack.c.l.b16 %v462
          %v1111 = vunpack.c.l.b16 %v463
          %v1112 = vunpack.c.l.b16 %v464
          %v1113 = vunpack.c.l.b16 %v465
          %v1114 = vunpack.c.l.b16 %v466
          %v1115 = vunpack.c.l.b16 %v467
          %v1116 = vunpack.c.l.b16 %v468
          %v1117 = vunpack.c.l.b16 %v469
          %v1118 = vunpack.c.l.b16 %v470
          %v1119 = vunpack.c.l.b16 %v471
          %v1120 = vunpack.c.l.b16 %v472
          %v1121 = vunpack.c.l.b16 %v473
          %v1122 = vunpack.c.l.b16 %v474
          %v1123 = vpack.c.b16 %v1108, %v1107
          %v1124 = vpack.c.b16 %v1110, %v1109
          %v1125 = vpack.c.b16 %v1112, %v1111
          %v1126 = vpack.c.b16 %v1114, %v1113
          %v1127 = vpack.c.b16 %v1116, %v1115
          %v1128 = vpack.c.b16 %v1118, %v1117
          %v1129 = vpack.c.b16 %v1120, %v1119
          %v1130 = vpack.c.b16 %v1122, %v1121
          %1139 = vmatprep.subr.bf16.mxu0 0
          %1140 = vmatpush1.bf16.msra.mxu0 %v1130
          %1141 = vmatprep.subr.bf16.mxu0 0
          %1142 = vmatpush1.bf16.msra.mxu0 %v1129
          %1143 = vmatprep.subr.bf16.mxu0 0
          %1144 = vmatpush1.bf16.msra.mxu0 %v1128
          %1145 = vmatprep.subr.bf16.mxu0 0
          %1146 = vmatpush1.bf16.msra.mxu0 %v1127
          %1147 = vmatprep.subr.bf16.mxu0 0
          %1148 = vmatpush1.bf16.msra.mxu0 %v1126
          %1149 = vmatprep.subr.bf16.mxu0 0
          %1150 = vmatpush1.bf16.msra.mxu0 %v1125
          %1151 = vmatprep.subr.bf16.mxu0 0
          %1152 = vmatpush1.bf16.msra.mxu0 %v1124
          %1153 = vmatprep.subr.bf16.mxu0 0
          %1154 = vmatpush1.bf16.msra.mxu0 %v1123
          %1155 = vmatprep.subr.bf16.mxu0 0
          %1156 = vmatpush2.bf16.msra.mxu0 0
          %1157 = vmatprep.subr.bf16.mxu0 0
          %1158 = vmatpush2.bf16.msra.mxu0 0
          %1159 = vmatprep.subr.bf16.mxu0 0
          %1160 = vmatpush2.bf16.msra.mxu0 0
          %1161 = vmatprep.subr.bf16.mxu0 0
          %1162 = vmatpush2.bf16.msra.mxu0 0
          %1163 = vmatprep.subr.bf16.mxu0 0
          %1164 = vmatpush2.bf16.msra.mxu0 0
          %1165 = vmatprep.subr.bf16.mxu0 0
          %1166 = vmatpush2.bf16.msra.mxu0 0
          %1167 = vmatprep.subr.bf16.mxu0 0
          %1168 = vmatpush2.bf16.msra.mxu0 0
          %1169 = vmatprep.subr.bf16.mxu0 0
          %1170 = vmatpush2.bf16.msra.mxu0 0
          %1171 = vmatprep.mubr.bf16.mxu0 0
          %1172 = vmatmul.mubr.bf16.gmra.mxu0 %v346
          %v1173 = vpop.f32.mrf.mxu0
          %v1174 = vadd.f32 0.0, %v1173
          %v1175 = vpop.f32.mrf.mxu0
          %v1176 = vpop.f32.mrf.mxu0
          %v1177 = vpop.f32.mrf.mxu0
          %1178 = vdwg.mxu0
          %v1179 = vpack.c.bf16 %v558, %v558
          %v1180 = vpack.c.bf16 %v646, %v646
          %v1181 = vpack.c.bf16 %v734, %v734
          %v1182 = vpack.c.bf16 %v822, %v822
          %v1183 = vpack.c.bf16 %v910, %v910
          %v1184 = vpack.c.bf16 %v998, %v998
          %v1185 = vpack.c.bf16 %v1086, %v1086
          %v1186 = vpack.c.bf16 %v1174, %v1174
          %vm1187 = vcmask 125952
          %1188 = vst.msk [vmem:[#allocation2] sm:$0xf] %vm1187, %v1179
          %1189 = vst.msk [vmem:[#allocation2 + $0x4] sm:$0xf] %vm1187, %v1180
          %1190 = vst.msk [vmem:[#allocation2 + $0x8] sm:$0xf] %vm1187, %v1181
          %1191 = vst.msk [vmem:[#allocation2 + $0xc] sm:$0xf] %vm1187, %v1182
          %1192 = vst.msk [vmem:[#allocation2 + $0x10] sm:$0xf] %vm1187, %v1183
          %1193 = vst.msk [vmem:[#allocation2 + $0x14] sm:$0xf] %vm1187, %v1184
          %1194 = vst.msk [vmem:[#allocation2 + $0x18] sm:$0xf] %vm1187, %v1185
          %1195 = vst.msk [vmem:[#allocation2 + $0x1c] sm:$0xf] %vm1187, %v1186
          %vm1196 = vcmask 7168
          %1197 = vst.msk [vmem:[#allocation3] sm:$0xff] %vm1196, -inf
          %1198 = vst.msk [vmem:[#allocation3 + $0x8] sm:$0xff] %vm1196, -inf
          %1199 = vst.msk [vmem:[#allocation3 + $0x10] sm:$0xff] %vm1196, -inf
          %1200 = vst.msk [vmem:[#allocation3 + $0x18] sm:$0xff] %vm1196, -inf
          %1201 = vst.msk [vmem:[#allocation3 + $0x20] sm:$0xff] %vm1196, -inf
          %1202 = vst.msk [vmem:[#allocation3 + $0x28] sm:$0xff] %vm1196, -inf
          %1203 = vst.msk [vmem:[#allocation3 + $0x30] sm:$0xff] %vm1196, -inf
          %1204 = vst.msk [vmem:[#allocation3 + $0x38] sm:$0xff] %vm1196, -inf
          %1205 = vst.msk [vmem:[#allocation4] sm:$0xff] %vm1196, 0.0
          %1206 = vst.msk [vmem:[#allocation4 + $0x8] sm:$0xff] %vm1196, 0.0
          %1207 = vst.msk [vmem:[#allocation4 + $0x10] sm:$0xff] %vm1196, 0.0
          %1208 = vst.msk [vmem:[#allocation4 + $0x18] sm:$0xff] %vm1196, 0.0
          %1209 = vst.msk [vmem:[#allocation4 + $0x20] sm:$0xff] %vm1196, 0.0
          %1210 = vst.msk [vmem:[#allocation4 + $0x28] sm:$0xff] %vm1196, 0.0
          %1211 = vst.msk [vmem:[#allocation4 + $0x30] sm:$0xff] %vm1196, 0.0
          %1212 = vst.msk [vmem:[#allocation4 + $0x38] sm:$0xff] %vm1196, 0.0
          %vm1213 = vcmask 130048
          %1214 = vst.msk [vmem:[#allocation5] sm:$0xff] %vm1213, 0.0
          %1215 = vst.msk [vmem:[#allocation5 + $0x8] sm:$0xff] %vm1213, 0.0
          %1216 = vst.msk [vmem:[#allocation5 + $0x10] sm:$0xff] %vm1213, 0.0
          %1217 = vst.msk [vmem:[#allocation5 + $0x18] sm:$0xff] %vm1213, 0.0
          %1218 = vst.msk [vmem:[#allocation5 + $0x20] sm:$0xff] %vm1213, 0.0
          %1219 = vst.msk [vmem:[#allocation5 + $0x28] sm:$0xff] %vm1213, 0.0
          %1220 = vst.msk [vmem:[#allocation5 + $0x30] sm:$0xff] %vm1213, 0.0
          %1221 = vst.msk [vmem:[#allocation5 + $0x38] sm:$0xff] %vm1213, 0.0
        $region52: #{tpu_custom_call.1} parent=47 // pred_fallthru
          _
        %v1222 = vld [vmem:[%s339] sm:$0xff]
        %v1223 = vpack.c.bf16 %v1222, %v1222
        %v1224 = vld [vmem:[%s3] sm:$0xf]
        %v1225 = vld [vmem:[%s3 + $0x4] sm:$0xf]
        %v1226 = vld [vmem:[%s3 + $0x8] sm:$0xf]
        %v1227 = vld [vmem:[%s3 + $0xc] sm:$0xf]
        %v1228 = vld [vmem:[%s3 + $0x10] sm:$0xf]
        %v1229 = vld [vmem:[%s3 + $0x14] sm:$0xf]
        %v1230 = vld [vmem:[%s3 + $0x18] sm:$0xf]
        %v1231 = vld [vmem:[%s3 + $0x1c] sm:$0xf]
        %v1232 = vld [vmem:[%s3 + $0x20] sm:$0xf]
        %v1233 = vld [vmem:[%s3 + $0x24] sm:$0xf]
        %v1234 = vld [vmem:[%s3 + $0x28] sm:$0xf]
        %v1235 = vld [vmem:[%s3 + $0x2c] sm:$0xf]
        %v1236 = vld [vmem:[%s3 + $0x30] sm:$0xf]
        %v1237 = vld [vmem:[%s3 + $0x34] sm:$0xf]
        %v1238 = vld [vmem:[%s3 + $0x38] sm:$0xf]
        %v1239 = vld [vmem:[%s3 + $0x3c] sm:$0xf]
        %v1240 = vld [vmem:[%s3 + $0x40] sm:$0xf]
        %v1241 = vld [vmem:[%s3 + $0x44] sm:$0xf]
        %v1242 = vld [vmem:[%s3 + $0x48] sm:$0xf]
        %v1243 = vld [vmem:[%s3 + $0x4c] sm:$0xf]
        %v1244 = vld [vmem:[%s3 + $0x50] sm:$0xf]
        %v1245 = vld [vmem:[%s3 + $0x54] sm:$0xf]
        %v1246 = vld [vmem:[%s3 + $0x58] sm:$0xf]
        %v1247 = vld [vmem:[%s3 + $0x5c] sm:$0xf]
        %v1248 = vld [vmem:[%s3 + $0x60] sm:$0xf]
        %v1249 = vld [vmem:[%s3 + $0x64] sm:$0xf]
        %v1250 = vld [vmem:[%s3 + $0x68] sm:$0xf]
        %v1251 = vld [vmem:[%s3 + $0x6c] sm:$0xf]
        %v1252 = vld [vmem:[%s3 + $0x70] sm:$0xf]
        %v1253 = vld [vmem:[%s3 + $0x74] sm:$0xf]
        %v1254 = vld [vmem:[%s3 + $0x78] sm:$0xf]
        %v1255 = vld [vmem:[%s3 + $0x7c] sm:$0xf]
        %v1256 = vld [vmem:[%s3 + $0x80] sm:$0xf]
        %v1257 = vld [vmem:[%s3 + $0x84] sm:$0xf]
        %v1258 = vld [vmem:[%s3 + $0x88] sm:$0xf]
        %v1259 = vld [vmem:[%s3 + $0x8c] sm:$0xf]
        %v1260 = vld [vmem:[%s3 + $0x90] sm:$0xf]
        %v1261 = vld [vmem:[%s3 + $0x94] sm:$0xf]
        %v1262 = vld [vmem:[%s3 + $0x98] sm:$0xf]
        %v1263 = vld [vmem:[%s3 + $0x9c] sm:$0xf]
        %v1264 = vld [vmem:[%s3 + $0xa0] sm:$0xf]
        %v1265 = vld [vmem:[%s3 + $0xa4] sm:$0xf]
        %v1266 = vld [vmem:[%s3 + $0xa8] sm:$0xf]
        %v1267 = vld [vmem:[%s3 + $0xac] sm:$0xf]
        %v1268 = vld [vmem:[%s3 + $0xb0] sm:$0xf]
        %v1269 = vld [vmem:[%s3 + $0xb4] sm:$0xf]
        %v1270 = vld [vmem:[%s3 + $0xb8] sm:$0xf]
        %v1271 = vld [vmem:[%s3 + $0xbc] sm:$0xf]
        %v1272 = vld [vmem:[%s3 + $0xc0] sm:$0xf]
        %v1273 = vld [vmem:[%s3 + $0xc4] sm:$0xf]
        %v1274 = vld [vmem:[%s3 + $0xc8] sm:$0xf]
        %v1275 = vld [vmem:[%s3 + $0xcc] sm:$0xf]
        %v1276 = vld [vmem:[%s3 + $0xd0] sm:$0xf]
        %v1277 = vld [vmem:[%s3 + $0xd4] sm:$0xf]
        %v1278 = vld [vmem:[%s3 + $0xd8] sm:$0xf]
        %v1279 = vld [vmem:[%s3 + $0xdc] sm:$0xf]
        %v1280 = vld [vmem:[%s3 + $0xe0] sm:$0xf]
        %v1281 = vld [vmem:[%s3 + $0xe4] sm:$0xf]
        %v1282 = vld [vmem:[%s3 + $0xe8] sm:$0xf]
        %v1283 = vld [vmem:[%s3 + $0xec] sm:$0xf]
        %v1284 = vld [vmem:[%s3 + $0xf0] sm:$0xf]
        %v1285 = vld [vmem:[%s3 + $0xf4] sm:$0xf]
        %v1286 = vld [vmem:[%s3 + $0xf8] sm:$0xf]
        %v1287 = vld [vmem:[%s3 + $0xfc] sm:$0xf]
        %v1288 = vld [vmem:[%s3 + $0x100] sm:$0xf]
        %v1289 = vld [vmem:[%s3 + $0x104] sm:$0xf]
        %v1290 = vld [vmem:[%s3 + $0x108] sm:$0xf]
        %v1291 = vld [vmem:[%s3 + $0x10c] sm:$0xf]
        %v1292 = vld [vmem:[%s3 + $0x110] sm:$0xf]
        %v1293 = vld [vmem:[%s3 + $0x114] sm:$0xf]
        %v1294 = vld [vmem:[%s3 + $0x118] sm:$0xf]
        %v1295 = vld [vmem:[%s3 + $0x11c] sm:$0xf]
        %v1296 = vld [vmem:[%s3 + $0x120] sm:$0xf]
        %v1297 = vld [vmem:[%s3 + $0x124] sm:$0xf]
        %v1298 = vld [vmem:[%s3 + $0x128] sm:$0xf]
        %v1299 = vld [vmem:[%s3 + $0x12c] sm:$0xf]
        %v1300 = vld [vmem:[%s3 + $0x130] sm:$0xf]
        %v1301 = vld [vmem:[%s3 + $0x134] sm:$0xf]
        %v1302 = vld [vmem:[%s3 + $0x138] sm:$0xf]
        %v1303 = vld [vmem:[%s3 + $0x13c] sm:$0xf]
        %v1304 = vld [vmem:[%s3 + $0x140] sm:$0xf]
        %v1305 = vld [vmem:[%s3 + $0x144] sm:$0xf]
        %v1306 = vld [vmem:[%s3 + $0x148] sm:$0xf]
        %v1307 = vld [vmem:[%s3 + $0x14c] sm:$0xf]
        %v1308 = vld [vmem:[%s3 + $0x150] sm:$0xf]
        %v1309 = vld [vmem:[%s3 + $0x154] sm:$0xf]
        %v1310 = vld [vmem:[%s3 + $0x158] sm:$0xf]
        %v1311 = vld [vmem:[%s3 + $0x15c] sm:$0xf]
        %v1312 = vld [vmem:[%s3 + $0x160] sm:$0xf]
        %v1313 = vld [vmem:[%s3 + $0x164] sm:$0xf]
        %v1314 = vld [vmem:[%s3 + $0x168] sm:$0xf]
        %v1315 = vld [vmem:[%s3 + $0x16c] sm:$0xf]
        %v1316 = vld [vmem:[%s3 + $0x170] sm:$0xf]
        %v1317 = vld [vmem:[%s3 + $0x174] sm:$0xf]
        %v1318 = vld [vmem:[%s3 + $0x178] sm:$0xf]
        %v1319 = vld [vmem:[%s3 + $0x17c] sm:$0xf]
        %v1320 = vld [vmem:[%s3 + $0x180] sm:$0xf]
        %v1321 = vld [vmem:[%s3 + $0x184] sm:$0xf]
        %v1322 = vld [vmem:[%s3 + $0x188] sm:$0xf]
        %v1323 = vld [vmem:[%s3 + $0x18c] sm:$0xf]
        %v1324 = vld [vmem:[%s3 + $0x190] sm:$0xf]
        %v1325 = vld [vmem:[%s3 + $0x194] sm:$0xf]
        %v1326 = vld [vmem:[%s3 + $0x198] sm:$0xf]
        %v1327 = vld [vmem:[%s3 + $0x19c] sm:$0xf]
        %v1328 = vld [vmem:[%s3 + $0x1a0] sm:$0xf]
        %v1329 = vld [vmem:[%s3 + $0x1a4] sm:$0xf]
        %v1330 = vld [vmem:[%s3 + $0x1a8] sm:$0xf]
        %v1331 = vld [vmem:[%s3 + $0x1ac] sm:$0xf]
        %v1332 = vld [vmem:[%s3 + $0x1b0] sm:$0xf]
        %v1333 = vld [vmem:[%s3 + $0x1b4] sm:$0xf]
        %v1334 = vld [vmem:[%s3 + $0x1b8] sm:$0xf]
        %v1335 = vld [vmem:[%s3 + $0x1bc] sm:$0xf]
        %v1336 = vld [vmem:[%s3 + $0x1c0] sm:$0xf]
        %v1337 = vld [vmem:[%s3 + $0x1c4] sm:$0xf]
        %v1338 = vld [vmem:[%s3 + $0x1c8] sm:$0xf]
        %v1339 = vld [vmem:[%s3 + $0x1cc] sm:$0xf]
        %v1340 = vld [vmem:[%s3 + $0x1d0] sm:$0xf]
        %v1341 = vld [vmem:[%s3 + $0x1d4] sm:$0xf]
        %v1342 = vld [vmem:[%s3 + $0x1d8] sm:$0xf]
        %v1343 = vld [vmem:[%s3 + $0x1dc] sm:$0xf]
        %v1344 = vld [vmem:[%s3 + $0x1e0] sm:$0xf]
        %v1345 = vld [vmem:[%s3 + $0x1e4] sm:$0xf]
        %v1346 = vld [vmem:[%s3 + $0x1e8] sm:$0xf]
        %v1347 = vld [vmem:[%s3 + $0x1ec] sm:$0xf]
        %v1348 = vld [vmem:[%s3 + $0x1f0] sm:$0xf]
        %v1349 = vld [vmem:[%s3 + $0x1f4] sm:$0xf]
        %v1350 = vld [vmem:[%s3 + $0x1f8] sm:$0xf]
        %v1351 = vld [vmem:[%s3 + $0x1fc] sm:$0xf]
        %v1368 = vunpack.c.l.b16 %v1224
        %v1369 = vunpack.c.l.b16 %v1225
        %v1370 = vunpack.c.l.b16 %v1226
        %v1371 = vunpack.c.l.b16 %v1227
        %v1372 = vunpack.c.l.b16 %v1228
        %v1373 = vunpack.c.l.b16 %v1229
        %v1374 = vunpack.c.l.b16 %v1230
        %v1375 = vunpack.c.l.b16 %v1231
        %v1376 = vunpack.c.l.b16 %v1232
        %v1377 = vunpack.c.l.b16 %v1233
        %v1378 = vunpack.c.l.b16 %v1234
        %v1379 = vunpack.c.l.b16 %v1235
        %v1380 = vunpack.c.l.b16 %v1236
        %v1381 = vunpack.c.l.b16 %v1237
        %v1382 = vunpack.c.l.b16 %v1238
        %v1383 = vunpack.c.l.b16 %v1239
        %v1384 = vpack.c.b16 %v1369, %v1368
        %v1385 = vpack.c.b16 %v1371, %v1370
        %v1386 = vpack.c.b16 %v1373, %v1372
        %v1387 = vpack.c.b16 %v1375, %v1374
        %v1388 = vpack.c.b16 %v1377, %v1376
        %v1389 = vpack.c.b16 %v1379, %v1378
        %v1390 = vpack.c.b16 %v1381, %v1380
        %v1391 = vpack.c.b16 %v1383, %v1382
        %1400 = vmatprep.subr.bf16.mxu0 0
        %1401 = vmatpush1.bf16.msra.mxu0 %v1391
        %1402 = vmatprep.subr.bf16.mxu0 0
        %1403 = vmatpush1.bf16.msra.mxu0 %v1390
        %1404 = vmatprep.subr.bf16.mxu0 0
        %1405 = vmatpush1.bf16.msra.mxu0 %v1389
        %1406 = vmatprep.subr.bf16.mxu0 0
        %1407 = vmatpush1.bf16.msra.mxu0 %v1388
        %1408 = vmatprep.subr.bf16.mxu0 0
        %1409 = vmatpush1.bf16.msra.mxu0 %v1387
        %1410 = vmatprep.subr.bf16.mxu0 0
        %1411 = vmatpush1.bf16.msra.mxu0 %v1386
        %1412 = vmatprep.subr.bf16.mxu0 0
        %1413 = vmatpush1.bf16.msra.mxu0 %v1385
        %1414 = vmatprep.subr.bf16.mxu0 0
        %1415 = vmatpush1.bf16.msra.mxu0 %v1384
        %1416 = vmatprep.subr.bf16.mxu0 0
        %1417 = vmatpush2.bf16.msra.mxu0 0
        %1418 = vmatprep.subr.bf16.mxu0 0
        %1419 = vmatpush2.bf16.msra.mxu0 0
        %1420 = vmatprep.subr.bf16.mxu0 0
        %1421 = vmatpush2.bf16.msra.mxu0 0
        %1422 = vmatprep.subr.bf16.mxu0 0
        %1423 = vmatpush2.bf16.msra.mxu0 0
        %1424 = vmatprep.subr.bf16.mxu0 0
        %1425 = vmatpush2.bf16.msra.mxu0 0
        %1426 = vmatprep.subr.bf16.mxu0 0
        %1427 = vmatpush2.bf16.msra.mxu0 0
        %1428 = vmatprep.subr.bf16.mxu0 0
        %1429 = vmatpush2.bf16.msra.mxu0 0
        %1430 = vmatprep.subr.bf16.mxu0 0
        %1431 = vmatpush2.bf16.msra.mxu0 0
        %1432 = vmatprep.mubr.bf16.mxu0 0
        %1433 = vmatmul.mubr.bf16.gmra.mxu0 %v1223
        %v1434 = vpop.f32.mrf.mxu0
        %v1435 = vadd.f32 0.0, %v1434
        %v1436 = vpop.f32.mrf.mxu0
        %v1437 = vpop.f32.mrf.mxu0
        %v1438 = vpop.f32.mrf.mxu0
        %1439 = vdwg.mxu0
        %v1456 = vunpack.c.l.b16 %v1240
        %v1457 = vunpack.c.l.b16 %v1241
        %v1458 = vunpack.c.l.b16 %v1242
        %v1459 = vunpack.c.l.b16 %v1243
        %v1460 = vunpack.c.l.b16 %v1244
        %v1461 = vunpack.c.l.b16 %v1245
        %v1462 = vunpack.c.l.b16 %v1246
        %v1463 = vunpack.c.l.b16 %v1247
        %v1464 = vunpack.c.l.b16 %v1248
        %v1465 = vunpack.c.l.b16 %v1249
        %v1466 = vunpack.c.l.b16 %v1250
        %v1467 = vunpack.c.l.b16 %v1251
        %v1468 = vunpack.c.l.b16 %v1252
        %v1469 = vunpack.c.l.b16 %v1253
        %v1470 = vunpack.c.l.b16 %v1254
        %v1471 = vunpack.c.l.b16 %v1255
        %v1472 = vpack.c.b16 %v1457, %v1456
        %v1473 = vpack.c.b16 %v1459, %v1458
        %v1474 = vpack.c.b16 %v1461, %v1460
        %v1475 = vpack.c.b16 %v1463, %v1462
        %v1476 = vpack.c.b16 %v1465, %v1464
        %v1477 = vpack.c.b16 %v1467, %v1466
        %v1478 = vpack.c.b16 %v1469, %v1468
        %v1479 = vpack.c.b16 %v1471, %v1470
        %1488 = vmatprep.subr.bf16.mxu0 0
        %1489 = vmatpush1.bf16.msra.mxu0 %v1479
        %1490 = vmatprep.subr.bf16.mxu0 0
        %1491 = vmatpush1.bf16.msra.mxu0 %v1478
        %1492 = vmatprep.subr.bf16.mxu0 0
        %1493 = vmatpush1.bf16.msra.mxu0 %v1477
        %1494 = vmatprep.subr.bf16.mxu0 0
        %1495 = vmatpush1.bf16.msra.mxu0 %v1476
        %1496 = vmatprep.subr.bf16.mxu0 0
        %1497 = vmatpush1.bf16.msra.mxu0 %v1475
        %1498 = vmatprep.subr.bf16.mxu0 0
        %1499 = vmatpush1.bf16.msra.mxu0 %v1474
        %1500 = vmatprep.subr.bf16.mxu0 0
        %1501 = vmatpush1.bf16.msra.mxu0 %v1473
        %1502 = vmatprep.subr.bf16.mxu0 0
        %1503 = vmatpush1.bf16.msra.mxu0 %v1472
        %1504 = vmatprep.subr.bf16.mxu0 0
        %1505 = vmatpush2.bf16.msra.mxu0 0
        %1506 = vmatprep.subr.bf16.mxu0 0
        %1507 = vmatpush2.bf16.msra.mxu0 0
        %1508 = vmatprep.subr.bf16.mxu0 0
        %1509 = vmatpush2.bf16.msra.mxu0 0
        %1510 = vmatprep.subr.bf16.mxu0 0
        %1511 = vmatpush2.bf16.msra.mxu0 0
        %1512 = vmatprep.subr.bf16.mxu0 0
        %1513 = vmatpush2.bf16.msra.mxu0 0
        %1514 = vmatprep.subr.bf16.mxu0 0
        %1515 = vmatpush2.bf16.msra.mxu0 0
        %1516 = vmatprep.subr.bf16.mxu0 0
        %1517 = vmatpush2.bf16.msra.mxu0 0
        %1518 = vmatprep.subr.bf16.mxu0 0
        %1519 = vmatpush2.bf16.msra.mxu0 0
        %1520 = vmatprep.mubr.bf16.mxu0 0
        %1521 = vmatmul.mubr.bf16.gmra.mxu0 %v1223
        %v1522 = vpop.f32.mrf.mxu0
        %v1523 = vadd.f32 0.0, %v1522
        %v1524 = vpop.f32.mrf.mxu0
        %v1525 = vpop.f32.mrf.mxu0
        %v1526 = vpop.f32.mrf.mxu0
        %1527 = vdwg.mxu0
        %v1544 = vunpack.c.l.b16 %v1256
        %v1545 = vunpack.c.l.b16 %v1257
        %v1546 = vunpack.c.l.b16 %v1258
        %v1547 = vunpack.c.l.b16 %v1259
        %v1548 = vunpack.c.l.b16 %v1260
        %v1549 = vunpack.c.l.b16 %v1261
        %v1550 = vunpack.c.l.b16 %v1262
        %v1551 = vunpack.c.l.b16 %v1263
        %v1552 = vunpack.c.l.b16 %v1264
        %v1553 = vunpack.c.l.b16 %v1265
        %v1554 = vunpack.c.l.b16 %v1266
        %v1555 = vunpack.c.l.b16 %v1267
        %v1556 = vunpack.c.l.b16 %v1268
        %v1557 = vunpack.c.l.b16 %v1269
        %v1558 = vunpack.c.l.b16 %v1270
        %v1559 = vunpack.c.l.b16 %v1271
        %v1560 = vpack.c.b16 %v1545, %v1544
        %v1561 = vpack.c.b16 %v1547, %v1546
        %v1562 = vpack.c.b16 %v1549, %v1548
        %v1563 = vpack.c.b16 %v1551, %v1550
        %v1564 = vpack.c.b16 %v1553, %v1552
        %v1565 = vpack.c.b16 %v1555, %v1554
        %v1566 = vpack.c.b16 %v1557, %v1556
        %v1567 = vpack.c.b16 %v1559, %v1558
        %1576 = vmatprep.subr.bf16.mxu0 0
        %1577 = vmatpush1.bf16.msra.mxu0 %v1567
        %1578 = vmatprep.subr.bf16.mxu0 0
        %1579 = vmatpush1.bf16.msra.mxu0 %v1566
        %1580 = vmatprep.subr.bf16.mxu0 0
        %1581 = vmatpush1.bf16.msra.mxu0 %v1565
        %1582 = vmatprep.subr.bf16.mxu0 0
        %1583 = vmatpush1.bf16.msra.mxu0 %v1564
        %1584 = vmatprep.subr.bf16.mxu0 0
        %1585 = vmatpush1.bf16.msra.mxu0 %v1563
        %1586 = vmatprep.subr.bf16.mxu0 0
        %1587 = vmatpush1.bf16.msra.mxu0 %v1562
        %1588 = vmatprep.subr.bf16.mxu0 0
        %1589 = vmatpush1.bf16.msra.mxu0 %v1561
        %1590 = vmatprep.subr.bf16.mxu0 0
        %1591 = vmatpush1.bf16.msra.mxu0 %v1560
        %1592 = vmatprep.subr.bf16.mxu0 0
        %1593 = vmatpush2.bf16.msra.mxu0 0
        %1594 = vmatprep.subr.bf16.mxu0 0
        %1595 = vmatpush2.bf16.msra.mxu0 0
        %1596 = vmatprep.subr.bf16.mxu0 0
        %1597 = vmatpush2.bf16.msra.mxu0 0
        %1598 = vmatprep.subr.bf16.mxu0 0
        %1599 = vmatpush2.bf16.msra.mxu0 0
        %1600 = vmatprep.subr.bf16.mxu0 0
        %1601 = vmatpush2.bf16.msra.mxu0 0
        %1602 = vmatprep.subr.bf16.mxu0 0
        %1603 = vmatpush2.bf16.msra.mxu0 0
        %1604 = vmatprep.subr.bf16.mxu0 0
        %1605 = vmatpush2.bf16.msra.mxu0 0
        %1606 = vmatprep.subr.bf16.mxu0 0
        %1607 = vmatpush2.bf16.msra.mxu0 0
        %1608 = vmatprep.mubr.bf16.mxu0 0
        %1609 = vmatmul.mubr.bf16.gmra.mxu0 %v1223
        %v1610 = vpop.f32.mrf.mxu0
        %v1611 = vadd.f32 0.0, %v1610
        %v1612 = vpop.f32.mrf.mxu0
        %v1613 = vpop.f32.mrf.mxu0
        %v1614 = vpop.f32.mrf.mxu0
        %1615 = vdwg.mxu0
        %v1632 = vunpack.c.l.b16 %v1272
        %v1633 = vunpack.c.l.b16 %v1273
        %v1634 = vunpack.c.l.b16 %v1274
        %v1635 = vunpack.c.l.b16 %v1275
        %v1636 = vunpack.c.l.b16 %v1276
        %v1637 = vunpack.c.l.b16 %v1277
        %v1638 = vunpack.c.l.b16 %v1278
        %v1639 = vunpack.c.l.b16 %v1279
        %v1640 = vunpack.c.l.b16 %v1280
        %v1641 = vunpack.c.l.b16 %v1281
        %v1642 = vunpack.c.l.b16 %v1282
        %v1643 = vunpack.c.l.b16 %v1283
        %v1644 = vunpack.c.l.b16 %v1284
        %v1645 = vunpack.c.l.b16 %v1285
        %v1646 = vunpack.c.l.b16 %v1286
        %v1647 = vunpack.c.l.b16 %v1287
        %v1648 = vpack.c.b16 %v1633, %v1632
        %v1649 = vpack.c.b16 %v1635, %v1634
        %v1650 = vpack.c.b16 %v1637, %v1636
        %v1651 = vpack.c.b16 %v1639, %v1638
        %v1652 = vpack.c.b16 %v1641, %v1640
        %v1653 = vpack.c.b16 %v1643, %v1642
        %v1654 = vpack.c.b16 %v1645, %v1644
        %v1655 = vpack.c.b16 %v1647, %v1646
        %1664 = vmatprep.subr.bf16.mxu0 0
        %1665 = vmatpush1.bf16.msra.mxu0 %v1655
        %1666 = vmatprep.subr.bf16.mxu0 0
        %1667 = vmatpush1.bf16.msra.mxu0 %v1654
        %1668 = vmatprep.subr.bf16.mxu0 0
        %1669 = vmatpush1.bf16.msra.mxu0 %v1653
        %1670 = vmatprep.subr.bf16.mxu0 0
        %1671 = vmatpush1.bf16.msra.mxu0 %v1652
        %1672 = vmatprep.subr.bf16.mxu0 0
        %1673 = vmatpush1.bf16.msra.mxu0 %v1651
        %1674 = vmatprep.subr.bf16.mxu0 0
        %1675 = vmatpush1.bf16.msra.mxu0 %v1650
        %1676 = vmatprep.subr.bf16.mxu0 0
        %1677 = vmatpush1.bf16.msra.mxu0 %v1649
        %1678 = vmatprep.subr.bf16.mxu0 0
        %1679 = vmatpush1.bf16.msra.mxu0 %v1648
        %1680 = vmatprep.subr.bf16.mxu0 0
        %1681 = vmatpush2.bf16.msra.mxu0 0
        %1682 = vmatprep.subr.bf16.mxu0 0
        %1683 = vmatpush2.bf16.msra.mxu0 0
        %1684 = vmatprep.subr.bf16.mxu0 0
        %1685 = vmatpush2.bf16.msra.mxu0 0
        %1686 = vmatprep.subr.bf16.mxu0 0
        %1687 = vmatpush2.bf16.msra.mxu0 0
        %1688 = vmatprep.subr.bf16.mxu0 0
        %1689 = vmatpush2.bf16.msra.mxu0 0
        %1690 = vmatprep.subr.bf16.mxu0 0
        %1691 = vmatpush2.bf16.msra.mxu0 0
        %1692 = vmatprep.subr.bf16.mxu0 0
        %1693 = vmatpush2.bf16.msra.mxu0 0
        %1694 = vmatprep.subr.bf16.mxu0 0
        %1695 = vmatpush2.bf16.msra.mxu0 0
        %1696 = vmatprep.mubr.bf16.mxu0 0
        %1697 = vmatmul.mubr.bf16.gmra.mxu0 %v1223
        %v1698 = vpop.f32.mrf.mxu0
        %v1699 = vadd.f32 0.0, %v1698
        %v1700 = vpop.f32.mrf.mxu0
        %v1701 = vpop.f32.mrf.mxu0
        %v1702 = vpop.f32.mrf.mxu0
        %1703 = vdwg.mxu0
        %v1720 = vunpack.c.l.b16 %v1288
        %v1721 = vunpack.c.l.b16 %v1289
        %v1722 = vunpack.c.l.b16 %v1290
        %v1723 = vunpack.c.l.b16 %v1291
        %v1724 = vunpack.c.l.b16 %v1292
        %v1725 = vunpack.c.l.b16 %v1293
        %v1726 = vunpack.c.l.b16 %v1294
        %v1727 = vunpack.c.l.b16 %v1295
        %v1728 = vunpack.c.l.b16 %v1296
        %v1729 = vunpack.c.l.b16 %v1297
        %v1730 = vunpack.c.l.b16 %v1298
        %v1731 = vunpack.c.l.b16 %v1299
        %v1732 = vunpack.c.l.b16 %v1300
        %v1733 = vunpack.c.l.b16 %v1301
        %v1734 = vunpack.c.l.b16 %v1302
        %v1735 = vunpack.c.l.b16 %v1303
        %v1736 = vpack.c.b16 %v1721, %v1720
        %v1737 = vpack.c.b16 %v1723, %v1722
        %v1738 = vpack.c.b16 %v1725, %v1724
        %v1739 = vpack.c.b16 %v1727, %v1726
        %v1740 = vpack.c.b16 %v1729, %v1728
        %v1741 = vpack.c.b16 %v1731, %v1730
        %v1742 = vpack.c.b16 %v1733, %v1732
        %v1743 = vpack.c.b16 %v1735, %v1734
        %1752 = vmatprep.subr.bf16.mxu0 0
        %1753 = vmatpush1.bf16.msra.mxu0 %v1743
        %1754 = vmatprep.subr.bf16.mxu0 0
        %1755 = vmatpush1.bf16.msra.mxu0 %v1742
        %1756 = vmatprep.subr.bf16.mxu0 0
        %1757 = vmatpush1.bf16.msra.mxu0 %v1741
        %1758 = vmatprep.subr.bf16.mxu0 0
        %1759 = vmatpush1.bf16.msra.mxu0 %v1740
        %1760 = vmatprep.subr.bf16.mxu0 0
        %1761 = vmatpush1.bf16.msra.mxu0 %v1739
        %1762 = vmatprep.subr.bf16.mxu0 0
        %1763 = vmatpush1.bf16.msra.mxu0 %v1738
        %1764 = vmatprep.subr.bf16.mxu0 0
        %1765 = vmatpush1.bf16.msra.mxu0 %v1737
        %1766 = vmatprep.subr.bf16.mxu0 0
        %1767 = vmatpush1.bf16.msra.mxu0 %v1736
        %1768 = vmatprep.subr.bf16.mxu0 0
        %1769 = vmatpush2.bf16.msra.mxu0 0
        %1770 = vmatprep.subr.bf16.mxu0 0
        %1771 = vmatpush2.bf16.msra.mxu0 0
        %1772 = vmatprep.subr.bf16.mxu0 0
        %1773 = vmatpush2.bf16.msra.mxu0 0
        %1774 = vmatprep.subr.bf16.mxu0 0
        %1775 = vmatpush2.bf16.msra.mxu0 0
        %1776 = vmatprep.subr.bf16.mxu0 0
        %1777 = vmatpush2.bf16.msra.mxu0 0
        %1778 = vmatprep.subr.bf16.mxu0 0
        %1779 = vmatpush2.bf16.msra.mxu0 0
        %1780 = vmatprep.subr.bf16.mxu0 0
        %1781 = vmatpush2.bf16.msra.mxu0 0
        %1782 = vmatprep.subr.bf16.mxu0 0
        %1783 = vmatpush2.bf16.msra.mxu0 0
        %1784 = vmatprep.mubr.bf16.mxu0 0
        %1785 = vmatmul.mubr.bf16.gmra.mxu0 %v1223
        %v1786 = vpop.f32.mrf.mxu0
        %v1787 = vadd.f32 0.0, %v1786
        %v1788 = vpop.f32.mrf.mxu0
        %v1789 = vpop.f32.mrf.mxu0
        %v1790 = vpop.f32.mrf.mxu0
        %1791 = vdwg.mxu0
        %v1808 = vunpack.c.l.b16 %v1304
        %v1809 = vunpack.c.l.b16 %v1305
        %v1810 = vunpack.c.l.b16 %v1306
        %v1811 = vunpack.c.l.b16 %v1307
        %v1812 = vunpack.c.l.b16 %v1308
        %v1813 = vunpack.c.l.b16 %v1309
        %v1814 = vunpack.c.l.b16 %v1310
        %v1815 = vunpack.c.l.b16 %v1311
        %v1816 = vunpack.c.l.b16 %v1312
        %v1817 = vunpack.c.l.b16 %v1313
        %v1818 = vunpack.c.l.b16 %v1314
        %v1819 = vunpack.c.l.b16 %v1315
        %v1820 = vunpack.c.l.b16 %v1316
        %v1821 = vunpack.c.l.b16 %v1317
        %v1822 = vunpack.c.l.b16 %v1318
        %v1823 = vunpack.c.l.b16 %v1319
        %v1824 = vpack.c.b16 %v1809, %v1808
        %v1825 = vpack.c.b16 %v1811, %v1810
        %v1826 = vpack.c.b16 %v1813, %v1812
        %v1827 = vpack.c.b16 %v1815, %v1814
        %v1828 = vpack.c.b16 %v1817, %v1816
        %v1829 = vpack.c.b16 %v1819, %v1818
        %v1830 = vpack.c.b16 %v1821, %v1820
        %v1831 = vpack.c.b16 %v1823, %v1822
        %1840 = vmatprep.subr.bf16.mxu0 0
        %1841 = vmatpush1.bf16.msra.mxu0 %v1831
        %1842 = vmatprep.subr.bf16.mxu0 0
        %1843 = vmatpush1.bf16.msra.mxu0 %v1830
        %1844 = vmatprep.subr.bf16.mxu0 0
        %1845 = vmatpush1.bf16.msra.mxu0 %v1829
        %1846 = vmatprep.subr.bf16.mxu0 0
        %1847 = vmatpush1.bf16.msra.mxu0 %v1828
        %1848 = vmatprep.subr.bf16.mxu0 0
        %1849 = vmatpush1.bf16.msra.mxu0 %v1827
        %1850 = vmatprep.subr.bf16.mxu0 0
        %1851 = vmatpush1.bf16.msra.mxu0 %v1826
        %1852 = vmatprep.subr.bf16.mxu0 0
        %1853 = vmatpush1.bf16.msra.mxu0 %v1825
        %1854 = vmatprep.subr.bf16.mxu0 0
        %1855 = vmatpush1.bf16.msra.mxu0 %v1824
        %1856 = vmatprep.subr.bf16.mxu0 0
        %1857 = vmatpush2.bf16.msra.mxu0 0
        %1858 = vmatprep.subr.bf16.mxu0 0
        %1859 = vmatpush2.bf16.msra.mxu0 0
        %1860 = vmatprep.subr.bf16.mxu0 0
        %1861 = vmatpush2.bf16.msra.mxu0 0
        %1862 = vmatprep.subr.bf16.mxu0 0
        %1863 = vmatpush2.bf16.msra.mxu0 0
        %1864 = vmatprep.subr.bf16.mxu0 0
        %1865 = vmatpush2.bf16.msra.mxu0 0
        %1866 = vmatprep.subr.bf16.mxu0 0
        %1867 = vmatpush2.bf16.msra.mxu0 0
        %1868 = vmatprep.subr.bf16.mxu0 0
        %1869 = vmatpush2.bf16.msra.mxu0 0
        %1870 = vmatprep.subr.bf16.mxu0 0
        %1871 = vmatpush2.bf16.msra.mxu0 0
        %1872 = vmatprep.mubr.bf16.mxu0 0
        %1873 = vmatmul.mubr.bf16.gmra.mxu0 %v1223
        %v1874 = vpop.f32.mrf.mxu0
        %v1875 = vadd.f32 0.0, %v1874
        %v1876 = vpop.f32.mrf.mxu0
        %v1877 = vpop.f32.mrf.mxu0
        %v1878 = vpop.f32.mrf.mxu0
        %1879 = vdwg.mxu0
        %v1896 = vunpack.c.l.b16 %v1320
        %v1897 = vunpack.c.l.b16 %v1321
        %v1898 = vunpack.c.l.b16 %v1322
        %v1899 = vunpack.c.l.b16 %v1323
        %v1900 = vunpack.c.l.b16 %v1324
        %v1901 = vunpack.c.l.b16 %v1325
        %v1902 = vunpack.c.l.b16 %v1326
        %v1903 = vunpack.c.l.b16 %v1327
        %v1904 = vunpack.c.l.b16 %v1328
        %v1905 = vunpack.c.l.b16 %v1329
        %v1906 = vunpack.c.l.b16 %v1330
        %v1907 = vunpack.c.l.b16 %v1331
        %v1908 = vunpack.c.l.b16 %v1332
        %v1909 = vunpack.c.l.b16 %v1333
        %v1910 = vunpack.c.l.b16 %v1334
        %v1911 = vunpack.c.l.b16 %v1335
        %v1912 = vpack.c.b16 %v1897, %v1896
        %v1913 = vpack.c.b16 %v1899, %v1898
        %v1914 = vpack.c.b16 %v1901, %v1900
        %v1915 = vpack.c.b16 %v1903, %v1902
        %v1916 = vpack.c.b16 %v1905, %v1904
        %v1917 = vpack.c.b16 %v1907, %v1906
        %v1918 = vpack.c.b16 %v1909, %v1908
        %v1919 = vpack.c.b16 %v1911, %v1910
        %1928 = vmatprep.subr.bf16.mxu0 0
        %1929 = vmatpush1.bf16.msra.mxu0 %v1919
        %1930 = vmatprep.subr.bf16.mxu0 0
        %1931 = vmatpush1.bf16.msra.mxu0 %v1918
        %1932 = vmatprep.subr.bf16.mxu0 0
        %1933 = vmatpush1.bf16.msra.mxu0 %v1917
        %1934 = vmatprep.subr.bf16.mxu0 0
        %1935 = vmatpush1.bf16.msra.mxu0 %v1916
        %1936 = vmatprep.subr.bf16.mxu0 0
        %1937 = vmatpush1.bf16.msra.mxu0 %v1915
        %1938 = vmatprep.subr.bf16.mxu0 0
        %1939 = vmatpush1.bf16.msra.mxu0 %v1914
        %1940 = vmatprep.subr.bf16.mxu0 0
        %1941 = vmatpush1.bf16.msra.mxu0 %v1913
        %1942 = vmatprep.subr.bf16.mxu0 0
        %1943 = vmatpush1.bf16.msra.mxu0 %v1912
        %1944 = vmatprep.subr.bf16.mxu0 0
        %1945 = vmatpush2.bf16.msra.mxu0 0
        %1946 = vmatprep.subr.bf16.mxu0 0
        %1947 = vmatpush2.bf16.msra.mxu0 0
        %1948 = vmatprep.subr.bf16.mxu0 0
        %1949 = vmatpush2.bf16.msra.mxu0 0
        %1950 = vmatprep.subr.bf16.mxu0 0
        %1951 = vmatpush2.bf16.msra.mxu0 0
        %1952 = vmatprep.subr.bf16.mxu0 0
        %1953 = vmatpush2.bf16.msra.mxu0 0
        %1954 = vmatprep.subr.bf16.mxu0 0
        %1955 = vmatpush2.bf16.msra.mxu0 0
        %1956 = vmatprep.subr.bf16.mxu0 0
        %1957 = vmatpush2.bf16.msra.mxu0 0
        %1958 = vmatprep.subr.bf16.mxu0 0
        %1959 = vmatpush2.bf16.msra.mxu0 0
        %1960 = vmatprep.mubr.bf16.mxu0 0
        %1961 = vmatmul.mubr.bf16.gmra.mxu0 %v1223
        %v1962 = vpop.f32.mrf.mxu0
        %v1963 = vadd.f32 0.0, %v1962
        %v1964 = vpop.f32.mrf.mxu0
        %v1965 = vpop.f32.mrf.mxu0
        %v1966 = vpop.f32.mrf.mxu0
        %1967 = vdwg.mxu0
        %v1984 = vunpack.c.l.b16 %v1336
        %v1985 = vunpack.c.l.b16 %v1337
        %v1986 = vunpack.c.l.b16 %v1338
        %v1987 = vunpack.c.l.b16 %v1339
        %v1988 = vunpack.c.l.b16 %v1340
        %v1989 = vunpack.c.l.b16 %v1341
        %v1990 = vunpack.c.l.b16 %v1342
        %v1991 = vunpack.c.l.b16 %v1343
        %v1992 = vunpack.c.l.b16 %v1344
        %v1993 = vunpack.c.l.b16 %v1345
        %v1994 = vunpack.c.l.b16 %v1346
        %v1995 = vunpack.c.l.b16 %v1347
        %v1996 = vunpack.c.l.b16 %v1348
        %v1997 = vunpack.c.l.b16 %v1349
        %v1998 = vunpack.c.l.b16 %v1350
        %v1999 = vunpack.c.l.b16 %v1351
        %v2000 = vpack.c.b16 %v1985, %v1984
        %v2001 = vpack.c.b16 %v1987, %v1986
        %v2002 = vpack.c.b16 %v1989, %v1988
        %v2003 = vpack.c.b16 %v1991, %v1990
        %v2004 = vpack.c.b16 %v1993, %v1992
        %v2005 = vpack.c.b16 %v1995, %v1994
        %v2006 = vpack.c.b16 %v1997, %v1996
        %v2007 = vpack.c.b16 %v1999, %v1998
        %2016 = vmatprep.subr.bf16.mxu0 0
        %2017 = vmatpush1.bf16.msra.mxu0 %v2007
        %2018 = vmatprep.subr.bf16.mxu0 0
        %2019 = vmatpush1.bf16.msra.mxu0 %v2006
        %2020 = vmatprep.subr.bf16.mxu0 0
        %2021 = vmatpush1.bf16.msra.mxu0 %v2005
        %2022 = vmatprep.subr.bf16.mxu0 0
        %2023 = vmatpush1.bf16.msra.mxu0 %v2004
        %2024 = vmatprep.subr.bf16.mxu0 0
        %2025 = vmatpush1.bf16.msra.mxu0 %v2003
        %2026 = vmatprep.subr.bf16.mxu0 0
        %2027 = vmatpush1.bf16.msra.mxu0 %v2002
        %2028 = vmatprep.subr.bf16.mxu0 0
        %2029 = vmatpush1.bf16.msra.mxu0 %v2001
        %2030 = vmatprep.subr.bf16.mxu0 0
        %2031 = vmatpush1.bf16.msra.mxu0 %v2000
        %2032 = vmatprep.subr.bf16.mxu0 0
        %2033 = vmatpush2.bf16.msra.mxu0 0
        %2034 = vmatprep.subr.bf16.mxu0 0
        %2035 = vmatpush2.bf16.msra.mxu0 0
        %2036 = vmatprep.subr.bf16.mxu0 0
        %2037 = vmatpush2.bf16.msra.mxu0 0
        %2038 = vmatprep.subr.bf16.mxu0 0
        %2039 = vmatpush2.bf16.msra.mxu0 0
        %2040 = vmatprep.subr.bf16.mxu0 0
        %2041 = vmatpush2.bf16.msra.mxu0 0
        %2042 = vmatprep.subr.bf16.mxu0 0
        %2043 = vmatpush2.bf16.msra.mxu0 0
        %2044 = vmatprep.subr.bf16.mxu0 0
        %2045 = vmatpush2.bf16.msra.mxu0 0
        %2046 = vmatprep.subr.bf16.mxu0 0
        %2047 = vmatpush2.bf16.msra.mxu0 0
        %2048 = vmatprep.mubr.bf16.mxu0 0
        %2049 = vmatmul.mubr.bf16.gmra.mxu0 %v1223
        %v2050 = vpop.f32.mrf.mxu0
        %v2051 = vadd.f32 0.0, %v2050
        %v2052 = vpop.f32.mrf.mxu0
        %v2053 = vpop.f32.mrf.mxu0
        %v2054 = vpop.f32.mrf.mxu0
        %2055 = vdwg.mxu0
        %v2056 = vpack.c.bf16 %v1435, %v1435
        %v2057 = vpack.c.bf16 %v1523, %v1523
        %v2058 = vpack.c.bf16 %v1611, %v1611
        %v2059 = vpack.c.bf16 %v1699, %v1699
        %v2060 = vpack.c.bf16 %v1787, %v1787
        %v2061 = vpack.c.bf16 %v1875, %v1875
        %v2062 = vpack.c.bf16 %v1963, %v1963
        %v2063 = vpack.c.bf16 %v2051, %v2051
        %v2064 = vld [vmem:[%s4] sm:$0xf]
        %v2065 = vld [vmem:[%s4 + $0x4] sm:$0xf]
        %v2066 = vld [vmem:[%s4 + $0x8] sm:$0xf]
        %v2067 = vld [vmem:[%s4 + $0xc] sm:$0xf]
        %v2068 = vld [vmem:[%s4 + $0x10] sm:$0xf]
        %v2069 = vld [vmem:[%s4 + $0x14] sm:$0xf]
        %v2070 = vld [vmem:[%s4 + $0x18] sm:$0xf]
        %v2071 = vld [vmem:[%s4 + $0x1c] sm:$0xf]
        %v2072 = vld [vmem:[%s4 + $0x20] sm:$0xf]
        %v2073 = vld [vmem:[%s4 + $0x24] sm:$0xf]
        %v2074 = vld [vmem:[%s4 + $0x28] sm:$0xf]
        %v2075 = vld [vmem:[%s4 + $0x2c] sm:$0xf]
        %v2076 = vld [vmem:[%s4 + $0x30] sm:$0xf]
        %v2077 = vld [vmem:[%s4 + $0x34] sm:$0xf]
        %v2078 = vld [vmem:[%s4 + $0x38] sm:$0xf]
        %v2079 = vld [vmem:[%s4 + $0x3c] sm:$0xf]
        %v2080 = vld [vmem:[%s4 + $0x40] sm:$0xf]
        %v2081 = vld [vmem:[%s4 + $0x44] sm:$0xf]
        %v2082 = vld [vmem:[%s4 + $0x48] sm:$0xf]
        %v2083 = vld [vmem:[%s4 + $0x4c] sm:$0xf]
        %v2084 = vld [vmem:[%s4 + $0x50] sm:$0xf]
        %v2085 = vld [vmem:[%s4 + $0x54] sm:$0xf]
        %v2086 = vld [vmem:[%s4 + $0x58] sm:$0xf]
        %v2087 = vld [vmem:[%s4 + $0x5c] sm:$0xf]
        %v2088 = vld [vmem:[%s4 + $0x60] sm:$0xf]
        %v2089 = vld [vmem:[%s4 + $0x64] sm:$0xf]
        %v2090 = vld [vmem:[%s4 + $0x68] sm:$0xf]
        %v2091 = vld [vmem:[%s4 + $0x6c] sm:$0xf]
        %v2092 = vld [vmem:[%s4 + $0x70] sm:$0xf]
        %v2093 = vld [vmem:[%s4 + $0x74] sm:$0xf]
        %v2094 = vld [vmem:[%s4 + $0x78] sm:$0xf]
        %v2095 = vld [vmem:[%s4 + $0x7c] sm:$0xf]
        %v2096 = vld [vmem:[%s4 + $0x80] sm:$0xf]
        %v2097 = vld [vmem:[%s4 + $0x84] sm:$0xf]
        %v2098 = vld [vmem:[%s4 + $0x88] sm:$0xf]
        %v2099 = vld [vmem:[%s4 + $0x8c] sm:$0xf]
        %v2100 = vld [vmem:[%s4 + $0x90] sm:$0xf]
        %v2101 = vld [vmem:[%s4 + $0x94] sm:$0xf]
        %v2102 = vld [vmem:[%s4 + $0x98] sm:$0xf]
        %v2103 = vld [vmem:[%s4 + $0x9c] sm:$0xf]
        %v2104 = vld [vmem:[%s4 + $0xa0] sm:$0xf]
        %v2105 = vld [vmem:[%s4 + $0xa4] sm:$0xf]
        %v2106 = vld [vmem:[%s4 + $0xa8] sm:$0xf]
        %v2107 = vld [vmem:[%s4 + $0xac] sm:$0xf]
        %v2108 = vld [vmem:[%s4 + $0xb0] sm:$0xf]
        %v2109 = vld [vmem:[%s4 + $0xb4] sm:$0xf]
        %v2110 = vld [vmem:[%s4 + $0xb8] sm:$0xf]
        %v2111 = vld [vmem:[%s4 + $0xbc] sm:$0xf]
        %v2112 = vld [vmem:[%s4 + $0xc0] sm:$0xf]
        %v2113 = vld [vmem:[%s4 + $0xc4] sm:$0xf]
        %v2114 = vld [vmem:[%s4 + $0xc8] sm:$0xf]
        %v2115 = vld [vmem:[%s4 + $0xcc] sm:$0xf]
        %v2116 = vld [vmem:[%s4 + $0xd0] sm:$0xf]
        %v2117 = vld [vmem:[%s4 + $0xd4] sm:$0xf]
        %v2118 = vld [vmem:[%s4 + $0xd8] sm:$0xf]
        %v2119 = vld [vmem:[%s4 + $0xdc] sm:$0xf]
        %v2120 = vld [vmem:[%s4 + $0xe0] sm:$0xf]
        %v2121 = vld [vmem:[%s4 + $0xe4] sm:$0xf]
        %v2122 = vld [vmem:[%s4 + $0xe8] sm:$0xf]
        %v2123 = vld [vmem:[%s4 + $0xec] sm:$0xf]
        %v2124 = vld [vmem:[%s4 + $0xf0] sm:$0xf]
        %v2125 = vld [vmem:[%s4 + $0xf4] sm:$0xf]
        %v2126 = vld [vmem:[%s4 + $0xf8] sm:$0xf]
        %v2127 = vld [vmem:[%s4 + $0xfc] sm:$0xf]
        %v2128 = vld [vmem:[%s4 + $0x100] sm:$0xf]
        %v2129 = vld [vmem:[%s4 + $0x104] sm:$0xf]
        %v2130 = vld [vmem:[%s4 + $0x108] sm:$0xf]
        %v2131 = vld [vmem:[%s4 + $0x10c] sm:$0xf]
        %v2132 = vld [vmem:[%s4 + $0x110] sm:$0xf]
        %v2133 = vld [vmem:[%s4 + $0x114] sm:$0xf]
        %v2134 = vld [vmem:[%s4 + $0x118] sm:$0xf]
        %v2135 = vld [vmem:[%s4 + $0x11c] sm:$0xf]
        %v2136 = vld [vmem:[%s4 + $0x120] sm:$0xf]
        %v2137 = vld [vmem:[%s4 + $0x124] sm:$0xf]
        %v2138 = vld [vmem:[%s4 + $0x128] sm:$0xf]
        %v2139 = vld [vmem:[%s4 + $0x12c] sm:$0xf]
        %v2140 = vld [vmem:[%s4 + $0x130] sm:$0xf]
        %v2141 = vld [vmem:[%s4 + $0x134] sm:$0xf]
        %v2142 = vld [vmem:[%s4 + $0x138] sm:$0xf]
        %v2143 = vld [vmem:[%s4 + $0x13c] sm:$0xf]
        %v2144 = vld [vmem:[%s4 + $0x140] sm:$0xf]
        %v2145 = vld [vmem:[%s4 + $0x144] sm:$0xf]
        %v2146 = vld [vmem:[%s4 + $0x148] sm:$0xf]
        %v2147 = vld [vmem:[%s4 + $0x14c] sm:$0xf]
        %v2148 = vld [vmem:[%s4 + $0x150] sm:$0xf]
        %v2149 = vld [vmem:[%s4 + $0x154] sm:$0xf]
        %v2150 = vld [vmem:[%s4 + $0x158] sm:$0xf]
        %v2151 = vld [vmem:[%s4 + $0x15c] sm:$0xf]
        %v2152 = vld [vmem:[%s4 + $0x160] sm:$0xf]
        %v2153 = vld [vmem:[%s4 + $0x164] sm:$0xf]
        %v2154 = vld [vmem:[%s4 + $0x168] sm:$0xf]
        %v2155 = vld [vmem:[%s4 + $0x16c] sm:$0xf]
        %v2156 = vld [vmem:[%s4 + $0x170] sm:$0xf]
        %v2157 = vld [vmem:[%s4 + $0x174] sm:$0xf]
        %v2158 = vld [vmem:[%s4 + $0x178] sm:$0xf]
        %v2159 = vld [vmem:[%s4 + $0x17c] sm:$0xf]
        %v2160 = vld [vmem:[%s4 + $0x180] sm:$0xf]
        %v2161 = vld [vmem:[%s4 + $0x184] sm:$0xf]
        %v2162 = vld [vmem:[%s4 + $0x188] sm:$0xf]
        %v2163 = vld [vmem:[%s4 + $0x18c] sm:$0xf]
        %v2164 = vld [vmem:[%s4 + $0x190] sm:$0xf]
        %v2165 = vld [vmem:[%s4 + $0x194] sm:$0xf]
        %v2166 = vld [vmem:[%s4 + $0x198] sm:$0xf]
        %v2167 = vld [vmem:[%s4 + $0x19c] sm:$0xf]
        %v2168 = vld [vmem:[%s4 + $0x1a0] sm:$0xf]
        %v2169 = vld [vmem:[%s4 + $0x1a4] sm:$0xf]
        %v2170 = vld [vmem:[%s4 + $0x1a8] sm:$0xf]
        %v2171 = vld [vmem:[%s4 + $0x1ac] sm:$0xf]
        %v2172 = vld [vmem:[%s4 + $0x1b0] sm:$0xf]
        %v2173 = vld [vmem:[%s4 + $0x1b4] sm:$0xf]
        %v2174 = vld [vmem:[%s4 + $0x1b8] sm:$0xf]
        %v2175 = vld [vmem:[%s4 + $0x1bc] sm:$0xf]
        %v2176 = vld [vmem:[%s4 + $0x1c0] sm:$0xf]
        %v2177 = vld [vmem:[%s4 + $0x1c4] sm:$0xf]
        %v2178 = vld [vmem:[%s4 + $0x1c8] sm:$0xf]
        %v2179 = vld [vmem:[%s4 + $0x1cc] sm:$0xf]
        %v2180 = vld [vmem:[%s4 + $0x1d0] sm:$0xf]
        %v2181 = vld [vmem:[%s4 + $0x1d4] sm:$0xf]
        %v2182 = vld [vmem:[%s4 + $0x1d8] sm:$0xf]
        %v2183 = vld [vmem:[%s4 + $0x1dc] sm:$0xf]
        %v2184 = vld [vmem:[%s4 + $0x1e0] sm:$0xf]
        %v2185 = vld [vmem:[%s4 + $0x1e4] sm:$0xf]
        %v2186 = vld [vmem:[%s4 + $0x1e8] sm:$0xf]
        %v2187 = vld [vmem:[%s4 + $0x1ec] sm:$0xf]
        %v2188 = vld [vmem:[%s4 + $0x1f0] sm:$0xf]
        %v2189 = vld [vmem:[%s4 + $0x1f4] sm:$0xf]
        %v2190 = vld [vmem:[%s4 + $0x1f8] sm:$0xf]
        %v2191 = vld [vmem:[%s4 + $0x1fc] sm:$0xf]
        %v2208 = vunpack.c.l.b16 %v2064
        %v2209 = vunpack.c.l.b16 %v2065
        %v2210 = vunpack.c.l.b16 %v2066
        %v2211 = vunpack.c.l.b16 %v2067
        %v2212 = vunpack.c.l.b16 %v2068
        %v2213 = vunpack.c.l.b16 %v2069
        %v2214 = vunpack.c.l.b16 %v2070
        %v2215 = vunpack.c.l.b16 %v2071
        %v2216 = vunpack.c.l.b16 %v2072
        %v2217 = vunpack.c.l.b16 %v2073
        %v2218 = vunpack.c.l.b16 %v2074
        %v2219 = vunpack.c.l.b16 %v2075
        %v2220 = vunpack.c.l.b16 %v2076
        %v2221 = vunpack.c.l.b16 %v2077
        %v2222 = vunpack.c.l.b16 %v2078
        %v2223 = vunpack.c.l.b16 %v2079
        %v2224 = vpack.c.b16 %v2209, %v2208
        %v2225 = vpack.c.b16 %v2211, %v2210
        %v2226 = vpack.c.b16 %v2213, %v2212
        %v2227 = vpack.c.b16 %v2215, %v2214
        %v2228 = vpack.c.b16 %v2217, %v2216
        %v2229 = vpack.c.b16 %v2219, %v2218
        %v2230 = vpack.c.b16 %v2221, %v2220
        %v2231 = vpack.c.b16 %v2223, %v2222
        %2240 = vmatprep.subr.bf16.mxu0 0
        %2241 = vmatpush1.bf16.msra.mxu0 %v2231
        %2242 = vmatprep.subr.bf16.mxu0 0
        %2243 = vmatpush1.bf16.msra.mxu0 %v2230
        %2244 = vmatprep.subr.bf16.mxu0 0
        %2245 = vmatpush1.bf16.msra.mxu0 %v2229
        %2246 = vmatprep.subr.bf16.mxu0 0
        %2247 = vmatpush1.bf16.msra.mxu0 %v2228
        %2248 = vmatprep.subr.bf16.mxu0 0
        %2249 = vmatpush1.bf16.msra.mxu0 %v2227
        %2250 = vmatprep.subr.bf16.mxu0 0
        %2251 = vmatpush1.bf16.msra.mxu0 %v2226
        %2252 = vmatprep.subr.bf16.mxu0 0
        %2253 = vmatpush1.bf16.msra.mxu0 %v2225
        %2254 = vmatprep.subr.bf16.mxu0 0
        %2255 = vmatpush1.bf16.msra.mxu0 %v2224
        %2256 = vmatprep.subr.bf16.mxu0 0
        %2257 = vmatpush2.bf16.msra.mxu0 0
        %2258 = vmatprep.subr.bf16.mxu0 0
        %2259 = vmatpush2.bf16.msra.mxu0 0
        %2260 = vmatprep.subr.bf16.mxu0 0
        %2261 = vmatpush2.bf16.msra.mxu0 0
        %2262 = vmatprep.subr.bf16.mxu0 0
        %2263 = vmatpush2.bf16.msra.mxu0 0
        %2264 = vmatprep.subr.bf16.mxu0 0
        %2265 = vmatpush2.bf16.msra.mxu0 0
        %2266 = vmatprep.subr.bf16.mxu0 0
        %2267 = vmatpush2.bf16.msra.mxu0 0
        %2268 = vmatprep.subr.bf16.mxu0 0
        %2269 = vmatpush2.bf16.msra.mxu0 0
        %2270 = vmatprep.subr.bf16.mxu0 0
        %2271 = vmatpush2.bf16.msra.mxu0 0
        %2272 = vmatprep.mubr.bf16.mxu0 0
        %2273 = vmatmul.mubr.bf16.gmra.mxu0 %v1223
        %v2274 = vpop.f32.mrf.mxu0
        %v2275 = vadd.f32 0.0, %v2274
        %v2276 = vpop.f32.mrf.mxu0
        %v2277 = vpop.f32.mrf.mxu0
        %v2278 = vpop.f32.mrf.mxu0
        %2279 = vdwg.mxu0
        %v2296 = vunpack.c.l.b16 %v2080
        %v2297 = vunpack.c.l.b16 %v2081
        %v2298 = vunpack.c.l.b16 %v2082
        %v2299 = vunpack.c.l.b16 %v2083
        %v2300 = vunpack.c.l.b16 %v2084
        %v2301 = vunpack.c.l.b16 %v2085
        %v2302 = vunpack.c.l.b16 %v2086
        %v2303 = vunpack.c.l.b16 %v2087
        %v2304 = vunpack.c.l.b16 %v2088
        %v2305 = vunpack.c.l.b16 %v2089
        %v2306 = vunpack.c.l.b16 %v2090
        %v2307 = vunpack.c.l.b16 %v2091
        %v2308 = vunpack.c.l.b16 %v2092
        %v2309 = vunpack.c.l.b16 %v2093
        %v2310 = vunpack.c.l.b16 %v2094
        %v2311 = vunpack.c.l.b16 %v2095
        %v2312 = vpack.c.b16 %v2297, %v2296
        %v2313 = vpack.c.b16 %v2299, %v2298
        %v2314 = vpack.c.b16 %v2301, %v2300
        %v2315 = vpack.c.b16 %v2303, %v2302
        %v2316 = vpack.c.b16 %v2305, %v2304
        %v2317 = vpack.c.b16 %v2307, %v2306
        %v2318 = vpack.c.b16 %v2309, %v2308
        %v2319 = vpack.c.b16 %v2311, %v2310
        %2328 = vmatprep.subr.bf16.mxu0 0
        %2329 = vmatpush1.bf16.msra.mxu0 %v2319
        %2330 = vmatprep.subr.bf16.mxu0 0
        %2331 = vmatpush1.bf16.msra.mxu0 %v2318
        %2332 = vmatprep.subr.bf16.mxu0 0
        %2333 = vmatpush1.bf16.msra.mxu0 %v2317
        %2334 = vmatprep.subr.bf16.mxu0 0
        %2335 = vmatpush1.bf16.msra.mxu0 %v2316
        %2336 = vmatprep.subr.bf16.mxu0 0
        %2337 = vmatpush1.bf16.msra.mxu0 %v2315
        %2338 = vmatprep.subr.bf16.mxu0 0
        %2339 = vmatpush1.bf16.msra.mxu0 %v2314
        %2340 = vmatprep.subr.bf16.mxu0 0
        %2341 = vmatpush1.bf16.msra.mxu0 %v2313
        %2342 = vmatprep.subr.bf16.mxu0 0
        %2343 = vmatpush1.bf16.msra.mxu0 %v2312
        %2344 = vmatprep.subr.bf16.mxu0 0
        %2345 = vmatpush2.bf16.msra.mxu0 0
        %2346 = vmatprep.subr.bf16.mxu0 0
        %2347 = vmatpush2.bf16.msra.mxu0 0
        %2348 = vmatprep.subr.bf16.mxu0 0
        %2349 = vmatpush2.bf16.msra.mxu0 0
        %2350 = vmatprep.subr.bf16.mxu0 0
        %2351 = vmatpush2.bf16.msra.mxu0 0
        %2352 = vmatprep.subr.bf16.mxu0 0
        %2353 = vmatpush2.bf16.msra.mxu0 0
        %2354 = vmatprep.subr.bf16.mxu0 0
        %2355 = vmatpush2.bf16.msra.mxu0 0
        %2356 = vmatprep.subr.bf16.mxu0 0
        %2357 = vmatpush2.bf16.msra.mxu0 0
        %2358 = vmatprep.subr.bf16.mxu0 0
        %2359 = vmatpush2.bf16.msra.mxu0 0
        %2360 = vmatprep.mubr.bf16.mxu0 0
        %2361 = vmatmul.mubr.bf16.gmra.mxu0 %v1223
        %v2362 = vpop.f32.mrf.mxu0
        %v2363 = vadd.f32 0.0, %v2362
        %v2364 = vpop.f32.mrf.mxu0
        %v2365 = vpop.f32.mrf.mxu0
        %v2366 = vpop.f32.mrf.mxu0
        %2367 = vdwg.mxu0
        %v2384 = vunpack.c.l.b16 %v2096
        %v2385 = vunpack.c.l.b16 %v2097
        %v2386 = vunpack.c.l.b16 %v2098
        %v2387 = vunpack.c.l.b16 %v2099
        %v2388 = vunpack.c.l.b16 %v2100
        %v2389 = vunpack.c.l.b16 %v2101
        %v2390 = vunpack.c.l.b16 %v2102
        %v2391 = vunpack.c.l.b16 %v2103
        %v2392 = vunpack.c.l.b16 %v2104
        %v2393 = vunpack.c.l.b16 %v2105
        %v2394 = vunpack.c.l.b16 %v2106
        %v2395 = vunpack.c.l.b16 %v2107
        %v2396 = vunpack.c.l.b16 %v2108
        %v2397 = vunpack.c.l.b16 %v2109
        %v2398 = vunpack.c.l.b16 %v2110
        %v2399 = vunpack.c.l.b16 %v2111
        %v2400 = vpack.c.b16 %v2385, %v2384
        %v2401 = vpack.c.b16 %v2387, %v2386
        %v2402 = vpack.c.b16 %v2389, %v2388
        %v2403 = vpack.c.b16 %v2391, %v2390
        %v2404 = vpack.c.b16 %v2393, %v2392
        %v2405 = vpack.c.b16 %v2395, %v2394
        %v2406 = vpack.c.b16 %v2397, %v2396
        %v2407 = vpack.c.b16 %v2399, %v2398
        %2416 = vmatprep.subr.bf16.mxu0 0
        %2417 = vmatpush1.bf16.msra.mxu0 %v2407
        %2418 = vmatprep.subr.bf16.mxu0 0
        %2419 = vmatpush1.bf16.msra.mxu0 %v2406
        %2420 = vmatprep.subr.bf16.mxu0 0
        %2421 = vmatpush1.bf16.msra.mxu0 %v2405
        %2422 = vmatprep.subr.bf16.mxu0 0
        %2423 = vmatpush1.bf16.msra.mxu0 %v2404
        %2424 = vmatprep.subr.bf16.mxu0 0
        %2425 = vmatpush1.bf16.msra.mxu0 %v2403
        %2426 = vmatprep.subr.bf16.mxu0 0
        %2427 = vmatpush1.bf16.msra.mxu0 %v2402
        %2428 = vmatprep.subr.bf16.mxu0 0
        %2429 = vmatpush1.bf16.msra.mxu0 %v2401
        %2430 = vmatprep.subr.bf16.mxu0 0
        %2431 = vmatpush1.bf16.msra.mxu0 %v2400
        %2432 = vmatprep.subr.bf16.mxu0 0
        %2433 = vmatpush2.bf16.msra.mxu0 0
        %2434 = vmatprep.subr.bf16.mxu0 0
        %2435 = vmatpush2.bf16.msra.mxu0 0
        %2436 = vmatprep.subr.bf16.mxu0 0
        %2437 = vmatpush2.bf16.msra.mxu0 0
        %2438 = vmatprep.subr.bf16.mxu0 0
        %2439 = vmatpush2.bf16.msra.mxu0 0
        %2440 = vmatprep.subr.bf16.mxu0 0
        %2441 = vmatpush2.bf16.msra.mxu0 0
        %2442 = vmatprep.subr.bf16.mxu0 0
        %2443 = vmatpush2.bf16.msra.mxu0 0
        %2444 = vmatprep.subr.bf16.mxu0 0
        %2445 = vmatpush2.bf16.msra.mxu0 0
        %2446 = vmatprep.subr.bf16.mxu0 0
        %2447 = vmatpush2.bf16.msra.mxu0 0
        %2448 = vmatprep.mubr.bf16.mxu0 0
        %2449 = vmatmul.mubr.bf16.gmra.mxu0 %v1223
        %v2450 = vpop.f32.mrf.mxu0
        %v2451 = vadd.f32 0.0, %v2450
        %v2452 = vpop.f32.mrf.mxu0
        %v2453 = vpop.f32.mrf.mxu0
        %v2454 = vpop.f32.mrf.mxu0
        %2455 = vdwg.mxu0
        %v2472 = vunpack.c.l.b16 %v2112
        %v2473 = vunpack.c.l.b16 %v2113
        %v2474 = vunpack.c.l.b16 %v2114
        %v2475 = vunpack.c.l.b16 %v2115
        %v2476 = vunpack.c.l.b16 %v2116
        %v2477 = vunpack.c.l.b16 %v2117
        %v2478 = vunpack.c.l.b16 %v2118
        %v2479 = vunpack.c.l.b16 %v2119
        %v2480 = vunpack.c.l.b16 %v2120
        %v2481 = vunpack.c.l.b16 %v2121
        %v2482 = vunpack.c.l.b16 %v2122
        %v2483 = vunpack.c.l.b16 %v2123
        %v2484 = vunpack.c.l.b16 %v2124
        %v2485 = vunpack.c.l.b16 %v2125
        %v2486 = vunpack.c.l.b16 %v2126
        %v2487 = vunpack.c.l.b16 %v2127
        %v2488 = vpack.c.b16 %v2473, %v2472
        %v2489 = vpack.c.b16 %v2475, %v2474
        %v2490 = vpack.c.b16 %v2477, %v2476
        %v2491 = vpack.c.b16 %v2479, %v2478
        %v2492 = vpack.c.b16 %v2481, %v2480
        %v2493 = vpack.c.b16 %v2483, %v2482
        %v2494 = vpack.c.b16 %v2485, %v2484
        %v2495 = vpack.c.b16 %v2487, %v2486
        %2504 = vmatprep.subr.bf16.mxu0 0
        %2505 = vmatpush1.bf16.msra.mxu0 %v2495
        %2506 = vmatprep.subr.bf16.mxu0 0
        %2507 = vmatpush1.bf16.msra.mxu0 %v2494
        %2508 = vmatprep.subr.bf16.mxu0 0
        %2509 = vmatpush1.bf16.msra.mxu0 %v2493
        %2510 = vmatprep.subr.bf16.mxu0 0
        %2511 = vmatpush1.bf16.msra.mxu0 %v2492
        %2512 = vmatprep.subr.bf16.mxu0 0
        %2513 = vmatpush1.bf16.msra.mxu0 %v2491
        %2514 = vmatprep.subr.bf16.mxu0 0
        %2515 = vmatpush1.bf16.msra.mxu0 %v2490
        %2516 = vmatprep.subr.bf16.mxu0 0
        %2517 = vmatpush1.bf16.msra.mxu0 %v2489
        %2518 = vmatprep.subr.bf16.mxu0 0
        %2519 = vmatpush1.bf16.msra.mxu0 %v2488
        %2520 = vmatprep.subr.bf16.mxu0 0
        %2521 = vmatpush2.bf16.msra.mxu0 0
        %2522 = vmatprep.subr.bf16.mxu0 0
        %2523 = vmatpush2.bf16.msra.mxu0 0
        %2524 = vmatprep.subr.bf16.mxu0 0
        %2525 = vmatpush2.bf16.msra.mxu0 0
        %2526 = vmatprep.subr.bf16.mxu0 0
        %2527 = vmatpush2.bf16.msra.mxu0 0
        %2528 = vmatprep.subr.bf16.mxu0 0
        %2529 = vmatpush2.bf16.msra.mxu0 0
        %2530 = vmatprep.subr.bf16.mxu0 0
        %2531 = vmatpush2.bf16.msra.mxu0 0
        %2532 = vmatprep.subr.bf16.mxu0 0
        %2533 = vmatpush2.bf16.msra.mxu0 0
        %2534 = vmatprep.subr.bf16.mxu0 0
        %2535 = vmatpush2.bf16.msra.mxu0 0
        %2536 = vmatprep.mubr.bf16.mxu0 0
        %2537 = vmatmul.mubr.bf16.gmra.mxu0 %v1223
        %v2538 = vpop.f32.mrf.mxu0
        %v2539 = vadd.f32 0.0, %v2538
        %v2540 = vpop.f32.mrf.mxu0
        %v2541 = vpop.f32.mrf.mxu0
        %v2542 = vpop.f32.mrf.mxu0
        %2543 = vdwg.mxu0
        %v2560 = vunpack.c.l.b16 %v2128
        %v2561 = vunpack.c.l.b16 %v2129
        %v2562 = vunpack.c.l.b16 %v2130
        %v2563 = vunpack.c.l.b16 %v2131
        %v2564 = vunpack.c.l.b16 %v2132
        %v2565 = vunpack.c.l.b16 %v2133
        %v2566 = vunpack.c.l.b16 %v2134
        %v2567 = vunpack.c.l.b16 %v2135
        %v2568 = vunpack.c.l.b16 %v2136
        %v2569 = vunpack.c.l.b16 %v2137
        %v2570 = vunpack.c.l.b16 %v2138
        %v2571 = vunpack.c.l.b16 %v2139
        %v2572 = vunpack.c.l.b16 %v2140
        %v2573 = vunpack.c.l.b16 %v2141
        %v2574 = vunpack.c.l.b16 %v2142
        %v2575 = vunpack.c.l.b16 %v2143
        %v2576 = vpack.c.b16 %v2561, %v2560
        %v2577 = vpack.c.b16 %v2563, %v2562
        %v2578 = vpack.c.b16 %v2565, %v2564
        %v2579 = vpack.c.b16 %v2567, %v2566
        %v2580 = vpack.c.b16 %v2569, %v2568
        %v2581 = vpack.c.b16 %v2571, %v2570
        %v2582 = vpack.c.b16 %v2573, %v2572
        %v2583 = vpack.c.b16 %v2575, %v2574
        %2592 = vmatprep.subr.bf16.mxu0 0
        %2593 = vmatpush1.bf16.msra.mxu0 %v2583
        %2594 = vmatprep.subr.bf16.mxu0 0
        %2595 = vmatpush1.bf16.msra.mxu0 %v2582
        %2596 = vmatprep.subr.bf16.mxu0 0
        %2597 = vmatpush1.bf16.msra.mxu0 %v2581
        %2598 = vmatprep.subr.bf16.mxu0 0
        %2599 = vmatpush1.bf16.msra.mxu0 %v2580
        %2600 = vmatprep.subr.bf16.mxu0 0
        %2601 = vmatpush1.bf16.msra.mxu0 %v2579
        %2602 = vmatprep.subr.bf16.mxu0 0
        %2603 = vmatpush1.bf16.msra.mxu0 %v2578
        %2604 = vmatprep.subr.bf16.mxu0 0
        %2605 = vmatpush1.bf16.msra.mxu0 %v2577
        %2606 = vmatprep.subr.bf16.mxu0 0
        %2607 = vmatpush1.bf16.msra.mxu0 %v2576
        %2608 = vmatprep.subr.bf16.mxu0 0
        %2609 = vmatpush2.bf16.msra.mxu0 0
        %2610 = vmatprep.subr.bf16.mxu0 0
        %2611 = vmatpush2.bf16.msra.mxu0 0
        %2612 = vmatprep.subr.bf16.mxu0 0
        %2613 = vmatpush2.bf16.msra.mxu0 0
        %2614 = vmatprep.subr.bf16.mxu0 0
        %2615 = vmatpush2.bf16.msra.mxu0 0
        %2616 = vmatprep.subr.bf16.mxu0 0
        %2617 = vmatpush2.bf16.msra.mxu0 0
        %2618 = vmatprep.subr.bf16.mxu0 0
        %2619 = vmatpush2.bf16.msra.mxu0 0
        %2620 = vmatprep.subr.bf16.mxu0 0
        %2621 = vmatpush2.bf16.msra.mxu0 0
        %2622 = vmatprep.subr.bf16.mxu0 0
        %2623 = vmatpush2.bf16.msra.mxu0 0
        %2624 = vmatprep.mubr.bf16.mxu0 0
        %2625 = vmatmul.mubr.bf16.gmra.mxu0 %v1223
        %v2626 = vpop.f32.mrf.mxu0
        %v2627 = vadd.f32 0.0, %v2626
        %v2628 = vpop.f32.mrf.mxu0
        %v2629 = vpop.f32.mrf.mxu0
        %v2630 = vpop.f32.mrf.mxu0
        %2631 = vdwg.mxu0
        %v2648 = vunpack.c.l.b16 %v2144
        %v2649 = vunpack.c.l.b16 %v2145
        %v2650 = vunpack.c.l.b16 %v2146
        %v2651 = vunpack.c.l.b16 %v2147
        %v2652 = vunpack.c.l.b16 %v2148
        %v2653 = vunpack.c.l.b16 %v2149
        %v2654 = vunpack.c.l.b16 %v2150
        %v2655 = vunpack.c.l.b16 %v2151
        %v2656 = vunpack.c.l.b16 %v2152
        %v2657 = vunpack.c.l.b16 %v2153
        %v2658 = vunpack.c.l.b16 %v2154
        %v2659 = vunpack.c.l.b16 %v2155
        %v2660 = vunpack.c.l.b16 %v2156
        %v2661 = vunpack.c.l.b16 %v2157
        %v2662 = vunpack.c.l.b16 %v2158
        %v2663 = vunpack.c.l.b16 %v2159
        %v2664 = vpack.c.b16 %v2649, %v2648
        %v2665 = vpack.c.b16 %v2651, %v2650
        %v2666 = vpack.c.b16 %v2653, %v2652
        %v2667 = vpack.c.b16 %v2655, %v2654
        %v2668 = vpack.c.b16 %v2657, %v2656
        %v2669 = vpack.c.b16 %v2659, %v2658
        %v2670 = vpack.c.b16 %v2661, %v2660
        %v2671 = vpack.c.b16 %v2663, %v2662
        %2680 = vmatprep.subr.bf16.mxu0 0
        %2681 = vmatpush1.bf16.msra.mxu0 %v2671
        %2682 = vmatprep.subr.bf16.mxu0 0
        %2683 = vmatpush1.bf16.msra.mxu0 %v2670
        %2684 = vmatprep.subr.bf16.mxu0 0
        %2685 = vmatpush1.bf16.msra.mxu0 %v2669
        %2686 = vmatprep.subr.bf16.mxu0 0
        %2687 = vmatpush1.bf16.msra.mxu0 %v2668
        %2688 = vmatprep.subr.bf16.mxu0 0
        %2689 = vmatpush1.bf16.msra.mxu0 %v2667
        %2690 = vmatprep.subr.bf16.mxu0 0
        %2691 = vmatpush1.bf16.msra.mxu0 %v2666
        %2692 = vmatprep.subr.bf16.mxu0 0
        %2693 = vmatpush1.bf16.msra.mxu0 %v2665
        %2694 = vmatprep.subr.bf16.mxu0 0
        %2695 = vmatpush1.bf16.msra.mxu0 %v2664
        %2696 = vmatprep.subr.bf16.mxu0 0
        %2697 = vmatpush2.bf16.msra.mxu0 0
        %2698 = vmatprep.subr.bf16.mxu0 0
        %2699 = vmatpush2.bf16.msra.mxu0 0
        %2700 = vmatprep.subr.bf16.mxu0 0
        %2701 = vmatpush2.bf16.msra.mxu0 0
        %2702 = vmatprep.subr.bf16.mxu0 0
        %2703 = vmatpush2.bf16.msra.mxu0 0
        %2704 = vmatprep.subr.bf16.mxu0 0
        %2705 = vmatpush2.bf16.msra.mxu0 0
        %2706 = vmatprep.subr.bf16.mxu0 0
        %2707 = vmatpush2.bf16.msra.mxu0 0
        %2708 = vmatprep.subr.bf16.mxu0 0
        %2709 = vmatpush2.bf16.msra.mxu0 0
        %2710 = vmatprep.subr.bf16.mxu0 0
        %2711 = vmatpush2.bf16.msra.mxu0 0
        %2712 = vmatprep.mubr.bf16.mxu0 0
        %2713 = vmatmul.mubr.bf16.gmra.mxu0 %v1223
        %v2714 = vpop.f32.mrf.mxu0
        %v2715 = vadd.f32 0.0, %v2714
        %v2716 = vpop.f32.mrf.mxu0
        %v2717 = vpop.f32.mrf.mxu0
        %v2718 = vpop.f32.mrf.mxu0
        %2719 = vdwg.mxu0
        %v2736 = vunpack.c.l.b16 %v2160
        %v2737 = vunpack.c.l.b16 %v2161
        %v2738 = vunpack.c.l.b16 %v2162
        %v2739 = vunpack.c.l.b16 %v2163
        %v2740 = vunpack.c.l.b16 %v2164
        %v2741 = vunpack.c.l.b16 %v2165
        %v2742 = vunpack.c.l.b16 %v2166
        %v2743 = vunpack.c.l.b16 %v2167
        %v2744 = vunpack.c.l.b16 %v2168
        %v2745 = vunpack.c.l.b16 %v2169
        %v2746 = vunpack.c.l.b16 %v2170
        %v2747 = vunpack.c.l.b16 %v2171
        %v2748 = vunpack.c.l.b16 %v2172
        %v2749 = vunpack.c.l.b16 %v2173
        %v2750 = vunpack.c.l.b16 %v2174
        %v2751 = vunpack.c.l.b16 %v2175
        %v2752 = vpack.c.b16 %v2737, %v2736
        %v2753 = vpack.c.b16 %v2739, %v2738
        %v2754 = vpack.c.b16 %v2741, %v2740
        %v2755 = vpack.c.b16 %v2743, %v2742
        %v2756 = vpack.c.b16 %v2745, %v2744
        %v2757 = vpack.c.b16 %v2747, %v2746
        %v2758 = vpack.c.b16 %v2749, %v2748
        %v2759 = vpack.c.b16 %v2751, %v2750
        %2768 = vmatprep.subr.bf16.mxu0 0
        %2769 = vmatpush1.bf16.msra.mxu0 %v2759
        %2770 = vmatprep.subr.bf16.mxu0 0
        %2771 = vmatpush1.bf16.msra.mxu0 %v2758
        %2772 = vmatprep.subr.bf16.mxu0 0
        %2773 = vmatpush1.bf16.msra.mxu0 %v2757
        %2774 = vmatprep.subr.bf16.mxu0 0
        %2775 = vmatpush1.bf16.msra.mxu0 %v2756
        %2776 = vmatprep.subr.bf16.mxu0 0
        %2777 = vmatpush1.bf16.msra.mxu0 %v2755
        %2778 = vmatprep.subr.bf16.mxu0 0
        %2779 = vmatpush1.bf16.msra.mxu0 %v2754
        %2780 = vmatprep.subr.bf16.mxu0 0
        %2781 = vmatpush1.bf16.msra.mxu0 %v2753
        %2782 = vmatprep.subr.bf16.mxu0 0
        %2783 = vmatpush1.bf16.msra.mxu0 %v2752
        %2784 = vmatprep.subr.bf16.mxu0 0
        %2785 = vmatpush2.bf16.msra.mxu0 0
        %2786 = vmatprep.subr.bf16.mxu0 0
        %2787 = vmatpush2.bf16.msra.mxu0 0
        %2788 = vmatprep.subr.bf16.mxu0 0
        %2789 = vmatpush2.bf16.msra.mxu0 0
        %2790 = vmatprep.subr.bf16.mxu0 0
        %2791 = vmatpush2.bf16.msra.mxu0 0
        %2792 = vmatprep.subr.bf16.mxu0 0
        %2793 = vmatpush2.bf16.msra.mxu0 0
        %2794 = vmatprep.subr.bf16.mxu0 0
        %2795 = vmatpush2.bf16.msra.mxu0 0
        %2796 = vmatprep.subr.bf16.mxu0 0
        %2797 = vmatpush2.bf16.msra.mxu0 0
        %2798 = vmatprep.subr.bf16.mxu0 0
        %2799 = vmatpush2.bf16.msra.mxu0 0
        %2800 = vmatprep.mubr.bf16.mxu0 0
        %2801 = vmatmul.mubr.bf16.gmra.mxu0 %v1223
        %v2802 = vpop.f32.mrf.mxu0
        %v2803 = vadd.f32 0.0, %v2802
        %v2804 = vpop.f32.mrf.mxu0
        %v2805 = vpop.f32.mrf.mxu0
        %v2806 = vpop.f32.mrf.mxu0
        %2807 = vdwg.mxu0
        %v2824 = vunpack.c.l.b16 %v2176
        %v2825 = vunpack.c.l.b16 %v2177
        %v2826 = vunpack.c.l.b16 %v2178
        %v2827 = vunpack.c.l.b16 %v2179
        %v2828 = vunpack.c.l.b16 %v2180
        %v2829 = vunpack.c.l.b16 %v2181
        %v2830 = vunpack.c.l.b16 %v2182
        %v2831 = vunpack.c.l.b16 %v2183
        %v2832 = vunpack.c.l.b16 %v2184
        %v2833 = vunpack.c.l.b16 %v2185
        %v2834 = vunpack.c.l.b16 %v2186
        %v2835 = vunpack.c.l.b16 %v2187
        %v2836 = vunpack.c.l.b16 %v2188
        %v2837 = vunpack.c.l.b16 %v2189
        %v2838 = vunpack.c.l.b16 %v2190
        %v2839 = vunpack.c.l.b16 %v2191
        %v2840 = vpack.c.b16 %v2825, %v2824
        %v2841 = vpack.c.b16 %v2827, %v2826
        %v2842 = vpack.c.b16 %v2829, %v2828
        %v2843 = vpack.c.b16 %v2831, %v2830
        %v2844 = vpack.c.b16 %v2833, %v2832
        %v2845 = vpack.c.b16 %v2835, %v2834
        %v2846 = vpack.c.b16 %v2837, %v2836
        %v2847 = vpack.c.b16 %v2839, %v2838
        %2856 = vmatprep.subr.bf16.mxu0 0
        %2857 = vmatpush1.bf16.msra.mxu0 %v2847
        %2858 = vmatprep.subr.bf16.mxu0 0
        %2859 = vmatpush1.bf16.msra.mxu0 %v2846
        %2860 = vmatprep.subr.bf16.mxu0 0
        %2861 = vmatpush1.bf16.msra.mxu0 %v2845
        %2862 = vmatprep.subr.bf16.mxu0 0
        %2863 = vmatpush1.bf16.msra.mxu0 %v2844
        %2864 = vmatprep.subr.bf16.mxu0 0
        %2865 = vmatpush1.bf16.msra.mxu0 %v2843
        %2866 = vmatprep.subr.bf16.mxu0 0
        %2867 = vmatpush1.bf16.msra.mxu0 %v2842
        %2868 = vmatprep.subr.bf16.mxu0 0
        %2869 = vmatpush1.bf16.msra.mxu0 %v2841
        %2870 = vmatprep.subr.bf16.mxu0 0
        %2871 = vmatpush1.bf16.msra.mxu0 %v2840
        %2872 = vmatprep.subr.bf16.mxu0 0
        %2873 = vmatpush2.bf16.msra.mxu0 0
        %2874 = vmatprep.subr.bf16.mxu0 0
        %2875 = vmatpush2.bf16.msra.mxu0 0
        %2876 = vmatprep.subr.bf16.mxu0 0
        %2877 = vmatpush2.bf16.msra.mxu0 0
        %2878 = vmatprep.subr.bf16.mxu0 0
        %2879 = vmatpush2.bf16.msra.mxu0 0
        %2880 = vmatprep.subr.bf16.mxu0 0
        %2881 = vmatpush2.bf16.msra.mxu0 0
        %2882 = vmatprep.subr.bf16.mxu0 0
        %2883 = vmatpush2.bf16.msra.mxu0 0
        %2884 = vmatprep.subr.bf16.mxu0 0
        %2885 = vmatpush2.bf16.msra.mxu0 0
        %2886 = vmatprep.subr.bf16.mxu0 0
        %2887 = vmatpush2.bf16.msra.mxu0 0
        %2888 = vmatprep.mubr.bf16.mxu0 0
        %2889 = vmatmul.mubr.bf16.gmra.mxu0 %v1223
        %v2890 = vpop.f32.mrf.mxu0
        %v2891 = vadd.f32 0.0, %v2890
        %v2892 = vpop.f32.mrf.mxu0
        %v2893 = vpop.f32.mrf.mxu0
        %v2894 = vpop.f32.mrf.mxu0
        %2895 = vdwg.mxu0
        %v2896 = vpack.c.bf16 %v2275, %v2275
        %v2897 = vpack.c.bf16 %v2363, %v2363
        %v2898 = vpack.c.bf16 %v2451, %v2451
        %v2899 = vpack.c.bf16 %v2539, %v2539
        %v2900 = vpack.c.bf16 %v2627, %v2627
        %v2901 = vpack.c.bf16 %v2715, %v2715
        %v2902 = vpack.c.bf16 %v2803, %v2803
        %v2903 = vpack.c.bf16 %v2891, %v2891
        %v2904 = vld [vmem:[#allocation2] sm:$0xf]
        %v2905 = vld [vmem:[#allocation2 + $0x4] sm:$0xf]
        %v2906 = vld [vmem:[#allocation2 + $0x8] sm:$0xf]
        %v2907 = vld [vmem:[#allocation2 + $0xc] sm:$0xf]
        %v2908 = vld [vmem:[#allocation2 + $0x10] sm:$0xf]
        %v2909 = vld [vmem:[#allocation2 + $0x14] sm:$0xf]
        %v2910 = vld [vmem:[#allocation2 + $0x18] sm:$0xf]
        %v2911 = vld [vmem:[#allocation2 + $0x1c] sm:$0xf]
        %vm2912 = vcmask 130048
        %v2914 = vsel %vm2912, %v2904, 0
        %v2917 = vsel %vm2912, %v2056, 0
        %2919 = vmatprep.subr.bf16.mxu0 0
        %2920 = vmatpush1.bf16.xpose.msra.mxu0 0
        %2921 = vmatprep.subr.bf16.mxu0 0
        %2922 = vmatpush1.bf16.xpose.msra.mxu0 0
        %2923 = vmatprep.subr.bf16.mxu0 0
        %2924 = vmatpush1.bf16.xpose.msra.mxu0 0
        %2925 = vmatprep.subr.bf16.mxu0 0
        %2926 = vmatpush1.bf16.xpose.msra.mxu0 0
        %2927 = vmatprep.subr.bf16.mxu0 0
        %2928 = vmatpush1.bf16.xpose.msra.mxu0 0
        %2929 = vmatprep.subr.bf16.mxu0 0
        %2930 = vmatpush1.bf16.xpose.msra.mxu0 0
        %2931 = vmatprep.subr.bf16.mxu0 0
        %2932 = vmatpush1.bf16.xpose.msra.mxu0 0
        %2933 = vmatprep.subr.bf16.mxu0 0
        %2934 = vmatpush1.bf16.xpose.msra.mxu0 %v2917
        %2935 = vmatprep.subr.bf16.mxu0 0
        %2936 = vmatpush2.bf16.xpose.msra.mxu0 0
        %2937 = vmatprep.subr.bf16.mxu0 0
        %2938 = vmatpush2.bf16.xpose.msra.mxu0 0
        %2939 = vmatprep.subr.bf16.mxu0 0
        %2940 = vmatpush2.bf16.xpose.msra.mxu0 0
        %2941 = vmatprep.subr.bf16.mxu0 0
        %2942 = vmatpush2.bf16.xpose.msra.mxu0 0
        %2943 = vmatprep.subr.bf16.mxu0 0
        %2944 = vmatpush2.bf16.xpose.msra.mxu0 0
        %2945 = vmatprep.subr.bf16.mxu0 0
        %2946 = vmatpush2.bf16.xpose.msra.mxu0 0
        %2947 = vmatprep.subr.bf16.mxu0 0
        %2948 = vmatpush2.bf16.xpose.msra.mxu0 0
        %2949 = vmatprep.subr.bf16.mxu0 0
        %2950 = vmatpush2.bf16.xpose.msra.mxu0 0
        %2951 = vmatprep.mubr.bf16.mxu0 0
        %2952 = vmatmul.mubr.bf16.gmra.mxu0 %v2914
        %v2953 = vpop.f32.mrf.mxu0
        %v2954 = vadd.f32 0.0, %v2953
        %v2955 = vpop.f32.mrf.mxu0
        %v2956 = vpop.f32.mrf.mxu0
        %v2957 = vpop.f32.mrf.mxu0
        %2958 = vdwg.mxu0
        %v2960 = vsel %vm2912, %v2905, 0
        %v2963 = vsel %vm2912, %v2057, 0
        %2965 = vmatprep.subr.bf16.mxu0 0
        %2966 = vmatpush1.bf16.xpose.msra.mxu0 0
        %2967 = vmatprep.subr.bf16.mxu0 0
        %2968 = vmatpush1.bf16.xpose.msra.mxu0 0
        %2969 = vmatprep.subr.bf16.mxu0 0
        %2970 = vmatpush1.bf16.xpose.msra.mxu0 0
        %2971 = vmatprep.subr.bf16.mxu0 0
        %2972 = vmatpush1.bf16.xpose.msra.mxu0 0
        %2973 = vmatprep.subr.bf16.mxu0 0
        %2974 = vmatpush1.bf16.xpose.msra.mxu0 0
        %2975 = vmatprep.subr.bf16.mxu0 0
        %2976 = vmatpush1.bf16.xpose.msra.mxu0 0
        %2977 = vmatprep.subr.bf16.mxu0 0
        %2978 = vmatpush1.bf16.xpose.msra.mxu0 0
        %2979 = vmatprep.subr.bf16.mxu0 0
        %2980 = vmatpush1.bf16.xpose.msra.mxu0 %v2963
        %2981 = vmatprep.subr.bf16.mxu0 0
        %2982 = vmatpush2.bf16.xpose.msra.mxu0 0
        %2983 = vmatprep.subr.bf16.mxu0 0
        %2984 = vmatpush2.bf16.xpose.msra.mxu0 0
        %2985 = vmatprep.subr.bf16.mxu0 0
        %2986 = vmatpush2.bf16.xpose.msra.mxu0 0
        %2987 = vmatprep.subr.bf16.mxu0 0
        %2988 = vmatpush2.bf16.xpose.msra.mxu0 0
        %2989 = vmatprep.subr.bf16.mxu0 0
        %2990 = vmatpush2.bf16.xpose.msra.mxu0 0
        %2991 = vmatprep.subr.bf16.mxu0 0
        %2992 = vmatpush2.bf16.xpose.msra.mxu0 0
        %2993 = vmatprep.subr.bf16.mxu0 0
        %2994 = vmatpush2.bf16.xpose.msra.mxu0 0
        %2995 = vmatprep.subr.bf16.mxu0 0
        %2996 = vmatpush2.bf16.xpose.msra.mxu0 0
        %2997 = vmatprep.mubr.bf16.mxu0 0
        %2998 = vmatmul.mubr.bf16.gmra.mxu0 %v2960
        %v2999 = vpop.f32.mrf.mxu0
        %v3000 = vadd.f32 0.0, %v2999
        %v3001 = vpop.f32.mrf.mxu0
        %v3002 = vpop.f32.mrf.mxu0
        %v3003 = vpop.f32.mrf.mxu0
        %3004 = vdwg.mxu0
        %v3006 = vsel %vm2912, %v2906, 0
        %v3009 = vsel %vm2912, %v2058, 0
        %3011 = vmatprep.subr.bf16.mxu0 0
        %3012 = vmatpush1.bf16.xpose.msra.mxu0 0
        %3013 = vmatprep.subr.bf16.mxu0 0
        %3014 = vmatpush1.bf16.xpose.msra.mxu0 0
        %3015 = vmatprep.subr.bf16.mxu0 0
        %3016 = vmatpush1.bf16.xpose.msra.mxu0 0
        %3017 = vmatprep.subr.bf16.mxu0 0
        %3018 = vmatpush1.bf16.xpose.msra.mxu0 0
        %3019 = vmatprep.subr.bf16.mxu0 0
        %3020 = vmatpush1.bf16.xpose.msra.mxu0 0
        %3021 = vmatprep.subr.bf16.mxu0 0
        %3022 = vmatpush1.bf16.xpose.msra.mxu0 0
        %3023 = vmatprep.subr.bf16.mxu0 0
        %3024 = vmatpush1.bf16.xpose.msra.mxu0 0
        %3025 = vmatprep.subr.bf16.mxu0 0
        %3026 = vmatpush1.bf16.xpose.msra.mxu0 %v3009
        %3027 = vmatprep.subr.bf16.mxu0 0
        %3028 = vmatpush2.bf16.xpose.msra.mxu0 0
        %3029 = vmatprep.subr.bf16.mxu0 0
        %3030 = vmatpush2.bf16.xpose.msra.mxu0 0
        %3031 = vmatprep.subr.bf16.mxu0 0
        %3032 = vmatpush2.bf16.xpose.msra.mxu0 0
        %3033 = vmatprep.subr.bf16.mxu0 0
        %3034 = vmatpush2.bf16.xpose.msra.mxu0 0
        %3035 = vmatprep.subr.bf16.mxu0 0
        %3036 = vmatpush2.bf16.xpose.msra.mxu0 0
        %3037 = vmatprep.subr.bf16.mxu0 0
        %3038 = vmatpush2.bf16.xpose.msra.mxu0 0
        %3039 = vmatprep.subr.bf16.mxu0 0
        %3040 = vmatpush2.bf16.xpose.msra.mxu0 0
        %3041 = vmatprep.subr.bf16.mxu0 0
        %3042 = vmatpush2.bf16.xpose.msra.mxu0 0
        %3043 = vmatprep.mubr.bf16.mxu0 0
        %3044 = vmatmul.mubr.bf16.gmra.mxu0 %v3006
        %v3045 = vpop.f32.mrf.mxu0
        %v3046 = vadd.f32 0.0, %v3045
        %v3047 = vpop.f32.mrf.mxu0
        %v3048 = vpop.f32.mrf.mxu0
        %v3049 = vpop.f32.mrf.mxu0
        %3050 = vdwg.mxu0
        %v3052 = vsel %vm2912, %v2907, 0
        %v3055 = vsel %vm2912, %v2059, 0
        %3057 = vmatprep.subr.bf16.mxu0 0
        %3058 = vmatpush1.bf16.xpose.msra.mxu0 0
        %3059 = vmatprep.subr.bf16.mxu0 0
        %3060 = vmatpush1.bf16.xpose.msra.mxu0 0
        %3061 = vmatprep.subr.bf16.mxu0 0
        %3062 = vmatpush1.bf16.xpose.msra.mxu0 0
        %3063 = vmatprep.subr.bf16.mxu0 0
        %3064 = vmatpush1.bf16.xpose.msra.mxu0 0
        %3065 = vmatprep.subr.bf16.mxu0 0
        %3066 = vmatpush1.bf16.xpose.msra.mxu0 0
        %3067 = vmatprep.subr.bf16.mxu0 0
        %3068 = vmatpush1.bf16.xpose.msra.mxu0 0
        %3069 = vmatprep.subr.bf16.mxu0 0
        %3070 = vmatpush1.bf16.xpose.msra.mxu0 0
        %3071 = vmatprep.subr.bf16.mxu0 0
        %3072 = vmatpush1.bf16.xpose.msra.mxu0 %v3055
        %3073 = vmatprep.subr.bf16.mxu0 0
        %3074 = vmatpush2.bf16.xpose.msra.mxu0 0
        %3075 = vmatprep.subr.bf16.mxu0 0
        %3076 = vmatpush2.bf16.xpose.msra.mxu0 0
        %3077 = vmatprep.subr.bf16.mxu0 0
        %3078 = vmatpush2.bf16.xpose.msra.mxu0 0
        %3079 = vmatprep.subr.bf16.mxu0 0
        %3080 = vmatpush2.bf16.xpose.msra.mxu0 0
        %3081 = vmatprep.subr.bf16.mxu0 0
        %3082 = vmatpush2.bf16.xpose.msra.mxu0 0
        %3083 = vmatprep.subr.bf16.mxu0 0
        %3084 = vmatpush2.bf16.xpose.msra.mxu0 0
        %3085 = vmatprep.subr.bf16.mxu0 0
        %3086 = vmatpush2.bf16.xpose.msra.mxu0 0
        %3087 = vmatprep.subr.bf16.mxu0 0
        %3088 = vmatpush2.bf16.xpose.msra.mxu0 0
        %3089 = vmatprep.mubr.bf16.mxu0 0
        %3090 = vmatmul.mubr.bf16.gmra.mxu0 %v3052
        %v3091 = vpop.f32.mrf.mxu0
        %v3092 = vadd.f32 0.0, %v3091
        %v3093 = vpop.f32.mrf.mxu0
        %v3094 = vpop.f32.mrf.mxu0
        %v3095 = vpop.f32.mrf.mxu0
        %3096 = vdwg.mxu0
        %v3098 = vsel %vm2912, %v2908, 0
        %v3101 = vsel %vm2912, %v2060, 0
        %3103 = vmatprep.subr.bf16.mxu0 0
        %3104 = vmatpush1.bf16.xpose.msra.mxu0 0
        %3105 = vmatprep.subr.bf16.mxu0 0
        %3106 = vmatpush1.bf16.xpose.msra.mxu0 0
        %3107 = vmatprep.subr.bf16.mxu0 0
        %3108 = vmatpush1.bf16.xpose.msra.mxu0 0
        %3109 = vmatprep.subr.bf16.mxu0 0
        %3110 = vmatpush1.bf16.xpose.msra.mxu0 0
        %3111 = vmatprep.subr.bf16.mxu0 0
        %3112 = vmatpush1.bf16.xpose.msra.mxu0 0
        %3113 = vmatprep.subr.bf16.mxu0 0
        %3114 = vmatpush1.bf16.xpose.msra.mxu0 0
        %3115 = vmatprep.subr.bf16.mxu0 0
        %3116 = vmatpush1.bf16.xpose.msra.mxu0 0
        %3117 = vmatprep.subr.bf16.mxu0 0
        %3118 = vmatpush1.bf16.xpose.msra.mxu0 %v3101
        %3119 = vmatprep.subr.bf16.mxu0 0
        %3120 = vmatpush2.bf16.xpose.msra.mxu0 0
        %3121 = vmatprep.subr.bf16.mxu0 0
        %3122 = vmatpush2.bf16.xpose.msra.mxu0 0
        %3123 = vmatprep.subr.bf16.mxu0 0
        %3124 = vmatpush2.bf16.xpose.msra.mxu0 0
        %3125 = vmatprep.subr.bf16.mxu0 0
        %3126 = vmatpush2.bf16.xpose.msra.mxu0 0
        %3127 = vmatprep.subr.bf16.mxu0 0
        %3128 = vmatpush2.bf16.xpose.msra.mxu0 0
        %3129 = vmatprep.subr.bf16.mxu0 0
        %3130 = vmatpush2.bf16.xpose.msra.mxu0 0
        %3131 = vmatprep.subr.bf16.mxu0 0
        %3132 = vmatpush2.bf16.xpose.msra.mxu0 0
        %3133 = vmatprep.subr.bf16.mxu0 0
        %3134 = vmatpush2.bf16.xpose.msra.mxu0 0
        %3135 = vmatprep.mubr.bf16.mxu0 0
        %3136 = vmatmul.mubr.bf16.gmra.mxu0 %v3098
        %v3137 = vpop.f32.mrf.mxu0
        %v3138 = vadd.f32 0.0, %v3137
        %v3139 = vpop.f32.mrf.mxu0
        %v3140 = vpop.f32.mrf.mxu0
        %v3141 = vpop.f32.mrf.mxu0
        %3142 = vdwg.mxu0
        %v3144 = vsel %vm2912, %v2909, 0
        %v3147 = vsel %vm2912, %v2061, 0
        %3149 = vmatprep.subr.bf16.mxu0 0
        %3150 = vmatpush1.bf16.xpose.msra.mxu0 0
        %3151 = vmatprep.subr.bf16.mxu0 0
        %3152 = vmatpush1.bf16.xpose.msra.mxu0 0
        %3153 = vmatprep.subr.bf16.mxu0 0
        %3154 = vmatpush1.bf16.xpose.msra.mxu0 0
        %3155 = vmatprep.subr.bf16.mxu0 0
        %3156 = vmatpush1.bf16.xpose.msra.mxu0 0
        %3157 = vmatprep.subr.bf16.mxu0 0
        %3158 = vmatpush1.bf16.xpose.msra.mxu0 0
        %3159 = vmatprep.subr.bf16.mxu0 0
        %3160 = vmatpush1.bf16.xpose.msra.mxu0 0
        %3161 = vmatprep.subr.bf16.mxu0 0
        %3162 = vmatpush1.bf16.xpose.msra.mxu0 0
        %3163 = vmatprep.subr.bf16.mxu0 0
        %3164 = vmatpush1.bf16.xpose.msra.mxu0 %v3147
        %3165 = vmatprep.subr.bf16.mxu0 0
        %3166 = vmatpush2.bf16.xpose.msra.mxu0 0
        %3167 = vmatprep.subr.bf16.mxu0 0
        %3168 = vmatpush2.bf16.xpose.msra.mxu0 0
        %3169 = vmatprep.subr.bf16.mxu0 0
        %3170 = vmatpush2.bf16.xpose.msra.mxu0 0
        %3171 = vmatprep.subr.bf16.mxu0 0
        %3172 = vmatpush2.bf16.xpose.msra.mxu0 0
        %3173 = vmatprep.subr.bf16.mxu0 0
        %3174 = vmatpush2.bf16.xpose.msra.mxu0 0
        %3175 = vmatprep.subr.bf16.mxu0 0
        %3176 = vmatpush2.bf16.xpose.msra.mxu0 0
        %3177 = vmatprep.subr.bf16.mxu0 0
        %3178 = vmatpush2.bf16.xpose.msra.mxu0 0
        %3179 = vmatprep.subr.bf16.mxu0 0
        %3180 = vmatpush2.bf16.xpose.msra.mxu0 0
        %3181 = vmatprep.mubr.bf16.mxu0 0
        %3182 = vmatmul.mubr.bf16.gmra.mxu0 %v3144
        %v3183 = vpop.f32.mrf.mxu0
        %v3184 = vadd.f32 0.0, %v3183
        %v3185 = vpop.f32.mrf.mxu0
        %v3186 = vpop.f32.mrf.mxu0
        %v3187 = vpop.f32.mrf.mxu0
        %3188 = vdwg.mxu0
        %v3190 = vsel %vm2912, %v2910, 0
        %v3193 = vsel %vm2912, %v2062, 0
        %3195 = vmatprep.subr.bf16.mxu0 0
        %3196 = vmatpush1.bf16.xpose.msra.mxu0 0
        %3197 = vmatprep.subr.bf16.mxu0 0
        %3198 = vmatpush1.bf16.xpose.msra.mxu0 0
        %3199 = vmatprep.subr.bf16.mxu0 0
        %3200 = vmatpush1.bf16.xpose.msra.mxu0 0
        %3201 = vmatprep.subr.bf16.mxu0 0
        %3202 = vmatpush1.bf16.xpose.msra.mxu0 0
        %3203 = vmatprep.subr.bf16.mxu0 0
        %3204 = vmatpush1.bf16.xpose.msra.mxu0 0
        %3205 = vmatprep.subr.bf16.mxu0 0
        %3206 = vmatpush1.bf16.xpose.msra.mxu0 0
        %3207 = vmatprep.subr.bf16.mxu0 0
        %3208 = vmatpush1.bf16.xpose.msra.mxu0 0
        %3209 = vmatprep.subr.bf16.mxu0 0
        %3210 = vmatpush1.bf16.xpose.msra.mxu0 %v3193
        %3211 = vmatprep.subr.bf16.mxu0 0
        %3212 = vmatpush2.bf16.xpose.msra.mxu0 0
        %3213 = vmatprep.subr.bf16.mxu0 0
        %3214 = vmatpush2.bf16.xpose.msra.mxu0 0
        %3215 = vmatprep.subr.bf16.mxu0 0
        %3216 = vmatpush2.bf16.xpose.msra.mxu0 0
        %3217 = vmatprep.subr.bf16.mxu0 0
        %3218 = vmatpush2.bf16.xpose.msra.mxu0 0
        %3219 = vmatprep.subr.bf16.mxu0 0
        %3220 = vmatpush2.bf16.xpose.msra.mxu0 0
        %3221 = vmatprep.subr.bf16.mxu0 0
        %3222 = vmatpush2.bf16.xpose.msra.mxu0 0
        %3223 = vmatprep.subr.bf16.mxu0 0
        %3224 = vmatpush2.bf16.xpose.msra.mxu0 0
        %3225 = vmatprep.subr.bf16.mxu0 0
        %3226 = vmatpush2.bf16.xpose.msra.mxu0 0
        %3227 = vmatprep.mubr.bf16.mxu0 0
        %3228 = vmatmul.mubr.bf16.gmra.mxu0 %v3190
        %v3229 = vpop.f32.mrf.mxu0
        %v3230 = vadd.f32 0.0, %v3229
        %v3231 = vpop.f32.mrf.mxu0
        %v3232 = vpop.f32.mrf.mxu0
        %v3233 = vpop.f32.mrf.mxu0
        %3234 = vdwg.mxu0
        %v3236 = vsel %vm2912, %v2911, 0
        %v3239 = vsel %vm2912, %v2063, 0
        %3241 = vmatprep.subr.bf16.mxu0 0
        %3242 = vmatpush1.bf16.xpose.msra.mxu0 0
        %3243 = vmatprep.subr.bf16.mxu0 0
        %3244 = vmatpush1.bf16.xpose.msra.mxu0 0
        %3245 = vmatprep.subr.bf16.mxu0 0
        %3246 = vmatpush1.bf16.xpose.msra.mxu0 0
        %3247 = vmatprep.subr.bf16.mxu0 0
        %3248 = vmatpush1.bf16.xpose.msra.mxu0 0
        %3249 = vmatprep.subr.bf16.mxu0 0
        %3250 = vmatpush1.bf16.xpose.msra.mxu0 0
        %3251 = vmatprep.subr.bf16.mxu0 0
        %3252 = vmatpush1.bf16.xpose.msra.mxu0 0
        %3253 = vmatprep.subr.bf16.mxu0 0
        %3254 = vmatpush1.bf16.xpose.msra.mxu0 0
        %3255 = vmatprep.subr.bf16.mxu0 0
        %3256 = vmatpush1.bf16.xpose.msra.mxu0 %v3239
        %3257 = vmatprep.subr.bf16.mxu0 0
        %3258 = vmatpush2.bf16.xpose.msra.mxu0 0
        %3259 = vmatprep.subr.bf16.mxu0 0
        %3260 = vmatpush2.bf16.xpose.msra.mxu0 0
        %3261 = vmatprep.subr.bf16.mxu0 0
        %3262 = vmatpush2.bf16.xpose.msra.mxu0 0
        %3263 = vmatprep.subr.bf16.mxu0 0
        %3264 = vmatpush2.bf16.xpose.msra.mxu0 0
        %3265 = vmatprep.subr.bf16.mxu0 0
        %3266 = vmatpush2.bf16.xpose.msra.mxu0 0
        %3267 = vmatprep.subr.bf16.mxu0 0
        %3268 = vmatpush2.bf16.xpose.msra.mxu0 0
        %3269 = vmatprep.subr.bf16.mxu0 0
        %3270 = vmatpush2.bf16.xpose.msra.mxu0 0
        %3271 = vmatprep.subr.bf16.mxu0 0
        %3272 = vmatpush2.bf16.xpose.msra.mxu0 0
        %3273 = vmatprep.mubr.bf16.mxu0 0
        %3274 = vmatmul.mubr.bf16.gmra.mxu0 %v3236
        %v3275 = vpop.f32.mrf.mxu0
        %v3276 = vadd.f32 0.0, %v3275
        %v3277 = vpop.f32.mrf.mxu0
        %v3278 = vpop.f32.mrf.mxu0
        %v3279 = vpop.f32.mrf.mxu0
        %3280 = vdwg.mxu0
        %v3281 = vld [vmem:[#allocation3] sm:$0xff]
        %v3282 = vld [vmem:[#allocation3 + $0x8] sm:$0xff]
        %v3283 = vld [vmem:[#allocation3 + $0x10] sm:$0xff]
        %v3284 = vld [vmem:[#allocation3 + $0x18] sm:$0xff]
        %v3285 = vld [vmem:[#allocation3 + $0x20] sm:$0xff]
        %v3286 = vld [vmem:[#allocation3 + $0x28] sm:$0xff]
        %v3287 = vld [vmem:[#allocation3 + $0x30] sm:$0xff]
        %v3288 = vld [vmem:[#allocation3 + $0x38] sm:$0xff]
        %vm3289 = vcmask 64512
        %v3290 = vsel %vm3289, %v2954, -inf
        %3291 = vmax.xlane.f32.xlu0 %v3290
        %v3292 = vpop.xlane.xlu0 %3291
        %v3293 = vsel %vm3289, %v3000, -inf
        %3294 = vmax.xlane.f32.xlu0 %v3293
        %v3295 = vpop.xlane.xlu0 %3294
        %v3296 = vsel %vm3289, %v3046, -inf
        %3297 = vmax.xlane.f32.xlu0 %v3296
        %v3298 = vpop.xlane.xlu0 %3297
        %v3299 = vsel %vm3289, %v3092, -inf
        %3300 = vmax.xlane.f32.xlu0 %v3299
        %v3301 = vpop.xlane.xlu0 %3300
        %v3302 = vsel %vm3289, %v3138, -inf
        %3303 = vmax.xlane.f32.xlu0 %v3302
        %v3304 = vpop.xlane.xlu0 %3303
        %v3305 = vsel %vm3289, %v3184, -inf
        %3306 = vmax.xlane.f32.xlu0 %v3305
        %v3307 = vpop.xlane.xlu0 %3306
        %v3308 = vsel %vm3289, %v3230, -inf
        %3309 = vmax.xlane.f32.xlu0 %v3308
        %v3310 = vpop.xlane.xlu0 %3309
        %v3311 = vsel %vm3289, %v3276, -inf
        %3312 = vmax.xlane.f32.xlu0 %v3311
        %v3313 = vpop.xlane.xlu0 %3312
        %v3314 = vmax.f32 %v3281, %v3292
        %v3315 = vmax.f32 %v3282, %v3295
        %v3316 = vmax.f32 %v3283, %v3298
        %v3317 = vmax.f32 %v3284, %v3301
        %v3318 = vmax.f32 %v3285, %v3304
        %v3319 = vmax.f32 %v3286, %v3307
        %v3320 = vmax.f32 %v3287, %v3310
        %v3321 = vmax.f32 %v3288, %v3313
        %v3322 = vsub.f32 %v3281, %v3314
        %v3323 = vsub.f32 %v3282, %v3315
        %v3324 = vsub.f32 %v3283, %v3316
        %v3325 = vsub.f32 %v3284, %v3317
        %v3326 = vsub.f32 %v3285, %v3318
        %v3327 = vsub.f32 %v3286, %v3319
        %v3328 = vsub.f32 %v3287, %v3320
        %v3329 = vsub.f32 %v3288, %v3321
        %v3330 = vmul.f32 %v3322, 1.442695
        %v3331 = vpow.pop %v3330
        %v3332 = vmul.f32 %v3323, 1.442695
        %v3333 = vpow.pop %v3332
        %v3334 = vmul.f32 %v3324, 1.442695
        %v3335 = vpow.pop %v3334
        %v3336 = vmul.f32 %v3325, 1.442695
        %v3337 = vpow.pop %v3336
        %v3338 = vmul.f32 %v3326, 1.442695
        %v3339 = vpow.pop %v3338
        %v3340 = vmul.f32 %v3327, 1.442695
        %v3341 = vpow.pop %v3340
        %v3342 = vmul.f32 %v3328, 1.442695
        %v3343 = vpow.pop %v3342
        %v3344 = vmul.f32 %v3329, 1.442695
        %v3345 = vpow.pop %v3344
        %3347 = vset.pattern.permute.xlu0 0
        %3348 = vperm.xlu0 %3347, %v3314
        %v3349 = vpop.permute.xlu0 %3348
        %3352 = vset.pattern.permute.xlu0 0
        %3353 = vperm.xlu0 %3352, %v3315
        %v3354 = vpop.permute.xlu0 %3353
        %3357 = vset.pattern.permute.xlu0 0
        %3358 = vperm.xlu0 %3357, %v3316
        %v3359 = vpop.permute.xlu0 %3358
        %3362 = vset.pattern.permute.xlu0 0
        %3363 = vperm.xlu0 %3362, %v3317
        %v3364 = vpop.permute.xlu0 %3363
        %3367 = vset.pattern.permute.xlu0 0
        %3368 = vperm.xlu0 %3367, %v3318
        %v3369 = vpop.permute.xlu0 %3368
        %3372 = vset.pattern.permute.xlu0 0
        %3373 = vperm.xlu0 %3372, %v3319
        %v3374 = vpop.permute.xlu0 %3373
        %3377 = vset.pattern.permute.xlu0 0
        %3378 = vperm.xlu0 %3377, %v3320
        %v3379 = vpop.permute.xlu0 %3378
        %3382 = vset.pattern.permute.xlu0 0
        %3383 = vperm.xlu0 %3382, %v3321
        %v3384 = vpop.permute.xlu0 %3383
        %v3386 = vsub.f32 %v2954, %v3349
        %v3387 = vsub.f32 %v3000, %v3354
        %v3388 = vsub.f32 %v3046, %v3359
        %v3389 = vsub.f32 %v3092, %v3364
        %v3390 = vsub.f32 %v3138, %v3369
        %v3391 = vsub.f32 %v3184, %v3374
        %v3392 = vsub.f32 %v3230, %v3379
        %v3393 = vsub.f32 %v3276, %v3384
        %v3394 = vmul.f32 %v3386, 1.442695
        %v3395 = vpow.pop %v3394
        %v3396 = vmul.f32 %v3387, 1.442695
        %v3397 = vpow.pop %v3396
        %v3398 = vmul.f32 %v3388, 1.442695
        %v3399 = vpow.pop %v3398
        %v3400 = vmul.f32 %v3389, 1.442695
        %v3401 = vpow.pop %v3400
        %v3402 = vmul.f32 %v3390, 1.442695
        %v3403 = vpow.pop %v3402
        %v3404 = vmul.f32 %v3391, 1.442695
        %v3405 = vpow.pop %v3404
        %v3406 = vmul.f32 %v3392, 1.442695
        %v3407 = vpow.pop %v3406
        %v3408 = vmul.f32 %v3393, 1.442695
        %v3409 = vpow.pop %v3408
        %v3410 = vld [vmem:[#allocation4] sm:$0xff]
        %v3411 = vld [vmem:[#allocation4 + $0x8] sm:$0xff]
        %v3412 = vld [vmem:[#allocation4 + $0x10] sm:$0xff]
        %v3413 = vld [vmem:[#allocation4 + $0x18] sm:$0xff]
        %v3414 = vld [vmem:[#allocation4 + $0x20] sm:$0xff]
        %v3415 = vld [vmem:[#allocation4 + $0x28] sm:$0xff]
        %v3416 = vld [vmem:[#allocation4 + $0x30] sm:$0xff]
        %v3417 = vld [vmem:[#allocation4 + $0x38] sm:$0xff]
        %v3418 = vmul.f32 %v3331, %v3410
        %v3419 = vmul.f32 %v3333, %v3411
        %v3420 = vmul.f32 %v3335, %v3412
        %v3421 = vmul.f32 %v3337, %v3413
        %v3422 = vmul.f32 %v3339, %v3414
        %v3423 = vmul.f32 %v3341, %v3415
        %v3424 = vmul.f32 %v3343, %v3416
        %v3425 = vmul.f32 %v3345, %v3417
        %v3426 = vsel %vm3289, %v3395, 0.0
        %3427 = vadd.xlane.f32.xlu0 %v3426
        %v3428 = vpop.xlane.xlu0 %3427
        %v3429 = vsel %vm3289, %v3397, 0.0
        %3430 = vadd.xlane.f32.xlu0 %v3429
        %v3431 = vpop.xlane.xlu0 %3430
        %v3432 = vsel %vm3289, %v3399, 0.0
        %3433 = vadd.xlane.f32.xlu0 %v3432
        %v3434 = vpop.xlane.xlu0 %3433
        %v3435 = vsel %vm3289, %v3401, 0.0
        %3436 = vadd.xlane.f32.xlu0 %v3435
        %v3437 = vpop.xlane.xlu0 %3436
        %v3438 = vsel %vm3289, %v3403, 0.0
        %3439 = vadd.xlane.f32.xlu0 %v3438
        %v3440 = vpop.xlane.xlu0 %3439
        %v3441 = vsel %vm3289, %v3405, 0.0
        %3442 = vadd.xlane.f32.xlu0 %v3441
        %v3443 = vpop.xlane.xlu0 %3442
        %v3444 = vsel %vm3289, %v3407, 0.0
        %3445 = vadd.xlane.f32.xlu0 %v3444
        %v3446 = vpop.xlane.xlu0 %3445
        %v3447 = vsel %vm3289, %v3409, 0.0
        %3448 = vadd.xlane.f32.xlu0 %v3447
        %v3449 = vpop.xlane.xlu0 %3448
        %v3450 = vadd.f32 %v3418, %v3428
        %v3451 = vadd.f32 %v3419, %v3431
        %v3452 = vadd.f32 %v3420, %v3434
        %v3453 = vadd.f32 %v3421, %v3437
        %v3454 = vadd.f32 %v3422, %v3440
        %v3455 = vadd.f32 %v3423, %v3443
        %v3456 = vadd.f32 %v3424, %v3446
        %v3457 = vadd.f32 %v3425, %v3449
        %vm3458 = vcmask 7168
        %3459 = vst.msk [vmem:[#allocation4] sm:$0xff] %vm3458, %v3450
        %3460 = vst.msk [vmem:[#allocation4 + $0x8] sm:$0xff] %vm3458, %v3451
        %3461 = vst.msk [vmem:[#allocation4 + $0x10] sm:$0xff] %vm3458, %v3452
        %3462 = vst.msk [vmem:[#allocation4 + $0x18] sm:$0xff] %vm3458, %v3453
        %3463 = vst.msk [vmem:[#allocation4 + $0x20] sm:$0xff] %vm3458, %v3454
        %3464 = vst.msk [vmem:[#allocation4 + $0x28] sm:$0xff] %vm3458, %v3455
        %3465 = vst.msk [vmem:[#allocation4 + $0x30] sm:$0xff] %vm3458, %v3456
        %3466 = vst.msk [vmem:[#allocation4 + $0x38] sm:$0xff] %vm3458, %v3457
        %v3467 = vld [vmem:[#allocation5] sm:$0xff]
        %v3468 = vld [vmem:[#allocation5 + $0x8] sm:$0xff]
        %v3469 = vld [vmem:[#allocation5 + $0x10] sm:$0xff]
        %v3470 = vld [vmem:[#allocation5 + $0x18] sm:$0xff]
        %v3471 = vld [vmem:[#allocation5 + $0x20] sm:$0xff]
        %v3472 = vld [vmem:[#allocation5 + $0x28] sm:$0xff]
        %v3473 = vld [vmem:[#allocation5 + $0x30] sm:$0xff]
        %v3474 = vld [vmem:[#allocation5 + $0x38] sm:$0xff]
        %3476 = vset.pattern.permute.xlu0 0
        %3477 = vperm.xlu0 %3476, %v3331
        %v3478 = vpop.permute.xlu0 %3477
        %3481 = vset.pattern.permute.xlu0 0
        %3482 = vperm.xlu0 %3481, %v3333
        %v3483 = vpop.permute.xlu0 %3482
        %3486 = vset.pattern.permute.xlu0 0
        %3487 = vperm.xlu0 %3486, %v3335
        %v3488 = vpop.permute.xlu0 %3487
        %3491 = vset.pattern.permute.xlu0 0
        %3492 = vperm.xlu0 %3491, %v3337
        %v3493 = vpop.permute.xlu0 %3492
        %3496 = vset.pattern.permute.xlu0 0
        %3497 = vperm.xlu0 %3496, %v3339
        %v3498 = vpop.permute.xlu0 %3497
        %3501 = vset.pattern.permute.xlu0 0
        %3502 = vperm.xlu0 %3501, %v3341
        %v3503 = vpop.permute.xlu0 %3502
        %3506 = vset.pattern.permute.xlu0 0
        %3507 = vperm.xlu0 %3506, %v3343
        %v3508 = vpop.permute.xlu0 %3507
        %3511 = vset.pattern.permute.xlu0 0
        %3512 = vperm.xlu0 %3511, %v3345
        %v3513 = vpop.permute.xlu0 %3512
        %v3515 = vmul.f32 %v3478, %v3467
        %v3516 = vmul.f32 %v3483, %v3468
        %v3517 = vmul.f32 %v3488, %v3469
        %v3518 = vmul.f32 %v3493, %v3470
        %v3519 = vmul.f32 %v3498, %v3471
        %v3520 = vmul.f32 %v3503, %v3472
        %v3521 = vmul.f32 %v3508, %v3473
        %v3522 = vmul.f32 %v3513, %v3474
        %v3523 = vpack.c.bf16 %v3395, %v3395
        %v3524 = vpack.c.bf16 %v3397, %v3397
        %v3525 = vpack.c.bf16 %v3399, %v3399
        %v3526 = vpack.c.bf16 %v3401, %v3401
        %v3527 = vpack.c.bf16 %v3403, %v3403
        %v3528 = vpack.c.bf16 %v3405, %v3405
        %v3529 = vpack.c.bf16 %v3407, %v3407
        %v3530 = vpack.c.bf16 %v3409, %v3409
        %v3532 = vsel %vm3289, %v3523, 0
        %vm3534 = vcmask 1043456
        %v3536 = vsel %vm3534, %v2896, 0
        %3538 = vmatprep.subr.bf16.mxu0 0
        %3539 = vmatpush1.bf16.msra.mxu0 0
        %3540 = vmatprep.subr.bf16.mxu0 0
        %3541 = vmatpush1.bf16.msra.mxu0 0
        %3542 = vmatprep.subr.bf16.mxu0 0
        %3543 = vmatpush1.bf16.msra.mxu0 0
        %3544 = vmatprep.subr.bf16.mxu0 0
        %3545 = vmatpush1.bf16.msra.mxu0 0
        %3546 = vmatprep.subr.bf16.mxu0 0
        %3547 = vmatpush1.bf16.msra.mxu0 0
        %3548 = vmatprep.subr.bf16.mxu0 0
        %3549 = vmatpush1.bf16.msra.mxu0 0
        %3550 = vmatprep.subr.bf16.mxu0 0
        %3551 = vmatpush1.bf16.msra.mxu0 0
        %3552 = vmatprep.subr.bf16.mxu0 0
        %3553 = vmatpush1.bf16.msra.mxu0 %v3536
        %3554 = vmatprep.subr.bf16.mxu0 0
        %3555 = vmatpush2.bf16.msra.mxu0 0
        %3556 = vmatprep.subr.bf16.mxu0 0
        %3557 = vmatpush2.bf16.msra.mxu0 0
        %3558 = vmatprep.subr.bf16.mxu0 0
        %3559 = vmatpush2.bf16.msra.mxu0 0
        %3560 = vmatprep.subr.bf16.mxu0 0
        %3561 = vmatpush2.bf16.msra.mxu0 0
        %3562 = vmatprep.subr.bf16.mxu0 0
        %3563 = vmatpush2.bf16.msra.mxu0 0
        %3564 = vmatprep.subr.bf16.mxu0 0
        %3565 = vmatpush2.bf16.msra.mxu0 0
        %3566 = vmatprep.subr.bf16.mxu0 0
        %3567 = vmatpush2.bf16.msra.mxu0 0
        %3568 = vmatprep.subr.bf16.mxu0 0
        %3569 = vmatpush2.bf16.msra.mxu0 0
        %3570 = vmatprep.mubr.bf16.mxu0 0
        %3571 = vmatmul.mubr.bf16.gmra.mxu0 %v3532
        %v3572 = vpop.f32.mrf.mxu0
        %v3573 = vadd.f32 0.0, %v3572
        %v3574 = vpop.f32.mrf.mxu0
        %v3575 = vpop.f32.mrf.mxu0
        %v3576 = vpop.f32.mrf.mxu0
        %3577 = vdwg.mxu0
        %v3579 = vsel %vm3289, %v3524, 0
        %v3582 = vsel %vm3534, %v2897, 0
        %3584 = vmatprep.subr.bf16.mxu0 0
        %3585 = vmatpush1.bf16.msra.mxu0 0
        %3586 = vmatprep.subr.bf16.mxu0 0
        %3587 = vmatpush1.bf16.msra.mxu0 0
        %3588 = vmatprep.subr.bf16.mxu0 0
        %3589 = vmatpush1.bf16.msra.mxu0 0
        %3590 = vmatprep.subr.bf16.mxu0 0
        %3591 = vmatpush1.bf16.msra.mxu0 0
        %3592 = vmatprep.subr.bf16.mxu0 0
        %3593 = vmatpush1.bf16.msra.mxu0 0
        %3594 = vmatprep.subr.bf16.mxu0 0
        %3595 = vmatpush1.bf16.msra.mxu0 0
        %3596 = vmatprep.subr.bf16.mxu0 0
        %3597 = vmatpush1.bf16.msra.mxu0 0
        %3598 = vmatprep.subr.bf16.mxu0 0
        %3599 = vmatpush1.bf16.msra.mxu0 %v3582
        %3600 = vmatprep.subr.bf16.mxu0 0
        %3601 = vmatpush2.bf16.msra.mxu0 0
        %3602 = vmatprep.subr.bf16.mxu0 0
        %3603 = vmatpush2.bf16.msra.mxu0 0
        %3604 = vmatprep.subr.bf16.mxu0 0
        %3605 = vmatpush2.bf16.msra.mxu0 0
        %3606 = vmatprep.subr.bf16.mxu0 0
        %3607 = vmatpush2.bf16.msra.mxu0 0
        %3608 = vmatprep.subr.bf16.mxu0 0
        %3609 = vmatpush2.bf16.msra.mxu0 0
        %3610 = vmatprep.subr.bf16.mxu0 0
        %3611 = vmatpush2.bf16.msra.mxu0 0
        %3612 = vmatprep.subr.bf16.mxu0 0
        %3613 = vmatpush2.bf16.msra.mxu0 0
        %3614 = vmatprep.subr.bf16.mxu0 0
        %3615 = vmatpush2.bf16.msra.mxu0 0
        %3616 = vmatprep.mubr.bf16.mxu0 0
        %3617 = vmatmul.mubr.bf16.gmra.mxu0 %v3579
        %v3618 = vpop.f32.mrf.mxu0
        %v3619 = vadd.f32 0.0, %v3618
        %v3620 = vpop.f32.mrf.mxu0
        %v3621 = vpop.f32.mrf.mxu0
        %v3622 = vpop.f32.mrf.mxu0
        %3623 = vdwg.mxu0
        %v3625 = vsel %vm3289, %v3525, 0
        %v3628 = vsel %vm3534, %v2898, 0
        %3630 = vmatprep.subr.bf16.mxu0 0
        %3631 = vmatpush1.bf16.msra.mxu0 0
        %3632 = vmatprep.subr.bf16.mxu0 0
        %3633 = vmatpush1.bf16.msra.mxu0 0
        %3634 = vmatprep.subr.bf16.mxu0 0
        %3635 = vmatpush1.bf16.msra.mxu0 0
        %3636 = vmatprep.subr.bf16.mxu0 0
        %3637 = vmatpush1.bf16.msra.mxu0 0
        %3638 = vmatprep.subr.bf16.mxu0 0
        %3639 = vmatpush1.bf16.msra.mxu0 0
        %3640 = vmatprep.subr.bf16.mxu0 0
        %3641 = vmatpush1.bf16.msra.mxu0 0
        %3642 = vmatprep.subr.bf16.mxu0 0
        %3643 = vmatpush1.bf16.msra.mxu0 0
        %3644 = vmatprep.subr.bf16.mxu0 0
        %3645 = vmatpush1.bf16.msra.mxu0 %v3628
        %3646 = vmatprep.subr.bf16.mxu0 0
        %3647 = vmatpush2.bf16.msra.mxu0 0
        %3648 = vmatprep.subr.bf16.mxu0 0
        %3649 = vmatpush2.bf16.msra.mxu0 0
        %3650 = vmatprep.subr.bf16.mxu0 0
        %3651 = vmatpush2.bf16.msra.mxu0 0
        %3652 = vmatprep.subr.bf16.mxu0 0
        %3653 = vmatpush2.bf16.msra.mxu0 0
        %3654 = vmatprep.subr.bf16.mxu0 0
        %3655 = vmatpush2.bf16.msra.mxu0 0
        %3656 = vmatprep.subr.bf16.mxu0 0
        %3657 = vmatpush2.bf16.msra.mxu0 0
        %3658 = vmatprep.subr.bf16.mxu0 0
        %3659 = vmatpush2.bf16.msra.mxu0 0
        %3660 = vmatprep.subr.bf16.mxu0 0
        %3661 = vmatpush2.bf16.msra.mxu0 0
        %3662 = vmatprep.mubr.bf16.mxu0 0
        %3663 = vmatmul.mubr.bf16.gmra.mxu0 %v3625
        %v3664 = vpop.f32.mrf.mxu0
        %v3665 = vadd.f32 0.0, %v3664
        %v3666 = vpop.f32.mrf.mxu0
        %v3667 = vpop.f32.mrf.mxu0
        %v3668 = vpop.f32.mrf.mxu0
        %3669 = vdwg.mxu0
        %v3671 = vsel %vm3289, %v3526, 0
        %v3674 = vsel %vm3534, %v2899, 0
        %3676 = vmatprep.subr.bf16.mxu0 0
        %3677 = vmatpush1.bf16.msra.mxu0 0
        %3678 = vmatprep.subr.bf16.mxu0 0
        %3679 = vmatpush1.bf16.msra.mxu0 0
        %3680 = vmatprep.subr.bf16.mxu0 0
        %3681 = vmatpush1.bf16.msra.mxu0 0
        %3682 = vmatprep.subr.bf16.mxu0 0
        %3683 = vmatpush1.bf16.msra.mxu0 0
        %3684 = vmatprep.subr.bf16.mxu0 0
        %3685 = vmatpush1.bf16.msra.mxu0 0
        %3686 = vmatprep.subr.bf16.mxu0 0
        %3687 = vmatpush1.bf16.msra.mxu0 0
        %3688 = vmatprep.subr.bf16.mxu0 0
        %3689 = vmatpush1.bf16.msra.mxu0 0
        %3690 = vmatprep.subr.bf16.mxu0 0
        %3691 = vmatpush1.bf16.msra.mxu0 %v3674
        %3692 = vmatprep.subr.bf16.mxu0 0
        %3693 = vmatpush2.bf16.msra.mxu0 0
        %3694 = vmatprep.subr.bf16.mxu0 0
        %3695 = vmatpush2.bf16.msra.mxu0 0
        %3696 = vmatprep.subr.bf16.mxu0 0
        %3697 = vmatpush2.bf16.msra.mxu0 0
        %3698 = vmatprep.subr.bf16.mxu0 0
        %3699 = vmatpush2.bf16.msra.mxu0 0
        %3700 = vmatprep.subr.bf16.mxu0 0
        %3701 = vmatpush2.bf16.msra.mxu0 0
        %3702 = vmatprep.subr.bf16.mxu0 0
        %3703 = vmatpush2.bf16.msra.mxu0 0
        %3704 = vmatprep.subr.bf16.mxu0 0
        %3705 = vmatpush2.bf16.msra.mxu0 0
        %3706 = vmatprep.subr.bf16.mxu0 0
        %3707 = vmatpush2.bf16.msra.mxu0 0
        %3708 = vmatprep.mubr.bf16.mxu0 0
        %3709 = vmatmul.mubr.bf16.gmra.mxu0 %v3671
        %v3710 = vpop.f32.mrf.mxu0
        %v3711 = vadd.f32 0.0, %v3710
        %v3712 = vpop.f32.mrf.mxu0
        %v3713 = vpop.f32.mrf.mxu0
        %v3714 = vpop.f32.mrf.mxu0
        %3715 = vdwg.mxu0
        %v3717 = vsel %vm3289, %v3527, 0
        %v3720 = vsel %vm3534, %v2900, 0
        %3722 = vmatprep.subr.bf16.mxu0 0
        %3723 = vmatpush1.bf16.msra.mxu0 0
        %3724 = vmatprep.subr.bf16.mxu0 0
        %3725 = vmatpush1.bf16.msra.mxu0 0
        %3726 = vmatprep.subr.bf16.mxu0 0
        %3727 = vmatpush1.bf16.msra.mxu0 0
        %3728 = vmatprep.subr.bf16.mxu0 0
        %3729 = vmatpush1.bf16.msra.mxu0 0
        %3730 = vmatprep.subr.bf16.mxu0 0
        %3731 = vmatpush1.bf16.msra.mxu0 0
        %3732 = vmatprep.subr.bf16.mxu0 0
        %3733 = vmatpush1.bf16.msra.mxu0 0
        %3734 = vmatprep.subr.bf16.mxu0 0
        %3735 = vmatpush1.bf16.msra.mxu0 0
        %3736 = vmatprep.subr.bf16.mxu0 0
        %3737 = vmatpush1.bf16.msra.mxu0 %v3720
        %3738 = vmatprep.subr.bf16.mxu0 0
        %3739 = vmatpush2.bf16.msra.mxu0 0
        %3740 = vmatprep.subr.bf16.mxu0 0
        %3741 = vmatpush2.bf16.msra.mxu0 0
        %3742 = vmatprep.subr.bf16.mxu0 0
        %3743 = vmatpush2.bf16.msra.mxu0 0
        %3744 = vmatprep.subr.bf16.mxu0 0
        %3745 = vmatpush2.bf16.msra.mxu0 0
        %3746 = vmatprep.subr.bf16.mxu0 0
        %3747 = vmatpush2.bf16.msra.mxu0 0
        %3748 = vmatprep.subr.bf16.mxu0 0
        %3749 = vmatpush2.bf16.msra.mxu0 0
        %3750 = vmatprep.subr.bf16.mxu0 0
        %3751 = vmatpush2.bf16.msra.mxu0 0
        %3752 = vmatprep.subr.bf16.mxu0 0
        %3753 = vmatpush2.bf16.msra.mxu0 0
        %3754 = vmatprep.mubr.bf16.mxu0 0
        %3755 = vmatmul.mubr.bf16.gmra.mxu0 %v3717
        %v3756 = vpop.f32.mrf.mxu0
        %v3757 = vadd.f32 0.0, %v3756
        %v3758 = vpop.f32.mrf.mxu0
        %v3759 = vpop.f32.mrf.mxu0
        %v3760 = vpop.f32.mrf.mxu0
        %3761 = vdwg.mxu0
        %v3763 = vsel %vm3289, %v3528, 0
        %v3766 = vsel %vm3534, %v2901, 0
        %3768 = vmatprep.subr.bf16.mxu0 0
        %3769 = vmatpush1.bf16.msra.mxu0 0
        %3770 = vmatprep.subr.bf16.mxu0 0
        %3771 = vmatpush1.bf16.msra.mxu0 0
        %3772 = vmatprep.subr.bf16.mxu0 0
        %3773 = vmatpush1.bf16.msra.mxu0 0
        %3774 = vmatprep.subr.bf16.mxu0 0
        %3775 = vmatpush1.bf16.msra.mxu0 0
        %3776 = vmatprep.subr.bf16.mxu0 0
        %3777 = vmatpush1.bf16.msra.mxu0 0
        %3778 = vmatprep.subr.bf16.mxu0 0
        %3779 = vmatpush1.bf16.msra.mxu0 0
        %3780 = vmatprep.subr.bf16.mxu0 0
        %3781 = vmatpush1.bf16.msra.mxu0 0
        %3782 = vmatprep.subr.bf16.mxu0 0
        %3783 = vmatpush1.bf16.msra.mxu0 %v3766
        %3784 = vmatprep.subr.bf16.mxu0 0
        %3785 = vmatpush2.bf16.msra.mxu0 0
        %3786 = vmatprep.subr.bf16.mxu0 0
        %3787 = vmatpush2.bf16.msra.mxu0 0
        %3788 = vmatprep.subr.bf16.mxu0 0
        %3789 = vmatpush2.bf16.msra.mxu0 0
        %3790 = vmatprep.subr.bf16.mxu0 0
        %3791 = vmatpush2.bf16.msra.mxu0 0
        %3792 = vmatprep.subr.bf16.mxu0 0
        %3793 = vmatpush2.bf16.msra.mxu0 0
        %3794 = vmatprep.subr.bf16.mxu0 0
        %3795 = vmatpush2.bf16.msra.mxu0 0
        %3796 = vmatprep.subr.bf16.mxu0 0
        %3797 = vmatpush2.bf16.msra.mxu0 0
        %3798 = vmatprep.subr.bf16.mxu0 0
        %3799 = vmatpush2.bf16.msra.mxu0 0
        %3800 = vmatprep.mubr.bf16.mxu0 0
        %3801 = vmatmul.mubr.bf16.gmra.mxu0 %v3763
        %v3802 = vpop.f32.mrf.mxu0
        %v3803 = vadd.f32 0.0, %v3802
        %v3804 = vpop.f32.mrf.mxu0
        %v3805 = vpop.f32.mrf.mxu0
        %v3806 = vpop.f32.mrf.mxu0
        %3807 = vdwg.mxu0
        %v3809 = vsel %vm3289, %v3529, 0
        %v3812 = vsel %vm3534, %v2902, 0
        %3814 = vmatprep.subr.bf16.mxu0 0
        %3815 = vmatpush1.bf16.msra.mxu0 0
        %3816 = vmatprep.subr.bf16.mxu0 0
        %3817 = vmatpush1.bf16.msra.mxu0 0
        %3818 = vmatprep.subr.bf16.mxu0 0
        %3819 = vmatpush1.bf16.msra.mxu0 0
        %3820 = vmatprep.subr.bf16.mxu0 0
        %3821 = vmatpush1.bf16.msra.mxu0 0
        %3822 = vmatprep.subr.bf16.mxu0 0
        %3823 = vmatpush1.bf16.msra.mxu0 0
        %3824 = vmatprep.subr.bf16.mxu0 0
        %3825 = vmatpush1.bf16.msra.mxu0 0
        %3826 = vmatprep.subr.bf16.mxu0 0
        %3827 = vmatpush1.bf16.msra.mxu0 0
        %3828 = vmatprep.subr.bf16.mxu0 0
        %3829 = vmatpush1.bf16.msra.mxu0 %v3812
        %3830 = vmatprep.subr.bf16.mxu0 0
        %3831 = vmatpush2.bf16.msra.mxu0 0
        %3832 = vmatprep.subr.bf16.mxu0 0
        %3833 = vmatpush2.bf16.msra.mxu0 0
        %3834 = vmatprep.subr.bf16.mxu0 0
        %3835 = vmatpush2.bf16.msra.mxu0 0
        %3836 = vmatprep.subr.bf16.mxu0 0
        %3837 = vmatpush2.bf16.msra.mxu0 0
        %3838 = vmatprep.subr.bf16.mxu0 0
        %3839 = vmatpush2.bf16.msra.mxu0 0
        %3840 = vmatprep.subr.bf16.mxu0 0
        %3841 = vmatpush2.bf16.msra.mxu0 0
        %3842 = vmatprep.subr.bf16.mxu0 0
        %3843 = vmatpush2.bf16.msra.mxu0 0
        %3844 = vmatprep.subr.bf16.mxu0 0
        %3845 = vmatpush2.bf16.msra.mxu0 0
        %3846 = vmatprep.mubr.bf16.mxu0 0
        %3847 = vmatmul.mubr.bf16.gmra.mxu0 %v3809
        %v3848 = vpop.f32.mrf.mxu0
        %v3849 = vadd.f32 0.0, %v3848
        %v3850 = vpop.f32.mrf.mxu0
        %v3851 = vpop.f32.mrf.mxu0
        %v3852 = vpop.f32.mrf.mxu0
        %3853 = vdwg.mxu0
        %v3855 = vsel %vm3289, %v3530, 0
        %v3858 = vsel %vm3534, %v2903, 0
        %3860 = vmatprep.subr.bf16.mxu0 0
        %3861 = vmatpush1.bf16.msra.mxu0 0
        %3862 = vmatprep.subr.bf16.mxu0 0
        %3863 = vmatpush1.bf16.msra.mxu0 0
        %3864 = vmatprep.subr.bf16.mxu0 0
        %3865 = vmatpush1.bf16.msra.mxu0 0
        %3866 = vmatprep.subr.bf16.mxu0 0
        %3867 = vmatpush1.bf16.msra.mxu0 0
        %3868 = vmatprep.subr.bf16.mxu0 0
        %3869 = vmatpush1.bf16.msra.mxu0 0
        %3870 = vmatprep.subr.bf16.mxu0 0
        %3871 = vmatpush1.bf16.msra.mxu0 0
        %3872 = vmatprep.subr.bf16.mxu0 0
        %3873 = vmatpush1.bf16.msra.mxu0 0
        %3874 = vmatprep.subr.bf16.mxu0 0
        %3875 = vmatpush1.bf16.msra.mxu0 %v3858
        %3876 = vmatprep.subr.bf16.mxu0 0
        %3877 = vmatpush2.bf16.msra.mxu0 0
        %3878 = vmatprep.subr.bf16.mxu0 0
        %3879 = vmatpush2.bf16.msra.mxu0 0
        %3880 = vmatprep.subr.bf16.mxu0 0
        %3881 = vmatpush2.bf16.msra.mxu0 0
        %3882 = vmatprep.subr.bf16.mxu0 0
        %3883 = vmatpush2.bf16.msra.mxu0 0
        %3884 = vmatprep.subr.bf16.mxu0 0
        %3885 = vmatpush2.bf16.msra.mxu0 0
        %3886 = vmatprep.subr.bf16.mxu0 0
        %3887 = vmatpush2.bf16.msra.mxu0 0
        %3888 = vmatprep.subr.bf16.mxu0 0
        %3889 = vmatpush2.bf16.msra.mxu0 0
        %3890 = vmatprep.subr.bf16.mxu0 0
        %3891 = vmatpush2.bf16.msra.mxu0 0
        %3892 = vmatprep.mubr.bf16.mxu0 0
        %3893 = vmatmul.mubr.bf16.gmra.mxu0 %v3855
        %v3894 = vpop.f32.mrf.mxu0
        %v3895 = vadd.f32 0.0, %v3894
        %v3896 = vpop.f32.mrf.mxu0
        %v3897 = vpop.f32.mrf.mxu0
        %v3898 = vpop.f32.mrf.mxu0
        %3899 = vdwg.mxu0
        %v3900 = vadd.f32 %v3515, %v3573
        %v3901 = vadd.f32 %v3516, %v3619
        %v3902 = vadd.f32 %v3517, %v3665
        %v3903 = vadd.f32 %v3518, %v3711
        %v3904 = vadd.f32 %v3519, %v3757
        %v3905 = vadd.f32 %v3520, %v3803
        %v3906 = vadd.f32 %v3521, %v3849
        %v3907 = vadd.f32 %v3522, %v3895
        %3908 = vst.msk [vmem:[#allocation5] sm:$0xff] %vm2912, %v3900
        %3909 = vst.msk [vmem:[#allocation5 + $0x8] sm:$0xff] %vm2912, %v3901
        %3910 = vst.msk [vmem:[#allocation5 + $0x10] sm:$0xff] %vm2912, %v3902
        %3911 = vst.msk [vmem:[#allocation5 + $0x18] sm:$0xff] %vm2912, %v3903
        %3912 = vst.msk [vmem:[#allocation5 + $0x20] sm:$0xff] %vm2912, %v3904
        %3913 = vst.msk [vmem:[#allocation5 + $0x28] sm:$0xff] %vm2912, %v3905
        %3914 = vst.msk [vmem:[#allocation5 + $0x30] sm:$0xff] %vm2912, %v3906
        %3915 = vst.msk [vmem:[#allocation5 + $0x38] sm:$0xff] %vm2912, %v3907
        %3916 = vst.msk [vmem:[#allocation3] sm:$0xff] %vm3458, %v3314
        %3917 = vst.msk [vmem:[#allocation3 + $0x8] sm:$0xff] %vm3458, %v3315
        %3918 = vst.msk [vmem:[#allocation3 + $0x10] sm:$0xff] %vm3458, %v3316
        %3919 = vst.msk [vmem:[#allocation3 + $0x18] sm:$0xff] %vm3458, %v3317
        %3920 = vst.msk [vmem:[#allocation3 + $0x20] sm:$0xff] %vm3458, %v3318
        %3921 = vst.msk [vmem:[#allocation3 + $0x28] sm:$0xff] %vm3458, %v3319
        %3922 = vst.msk [vmem:[#allocation3 + $0x30] sm:$0xff] %vm3458, %v3320
        %3923 = vst.msk [vmem:[#allocation3 + $0x38] sm:$0xff] %vm3458, %v3321
        %p3924 = scmp.eq.s32.totalorder %s28, 1
        // Predicated region
        $region53: #{tpu_custom_call.1} parent=47 // pred_check
          %p3925 = pneg %p3924
        $region54: #{tpu_custom_call.1} parent=47 // pred_check_branch
          %3927 = sbr.rel (%p3925) target = $region56
        $region55: #{tpu_custom_call.1} parent=47 // pred_region
          %v3928 = vld [vmem:[#allocation5] sm:$0xff]
          %v3929 = vld [vmem:[#allocation5 + $0x8] sm:$0xff]
          %v3930 = vld [vmem:[#allocation5 + $0x10] sm:$0xff]
          %v3931 = vld [vmem:[#allocation5 + $0x18] sm:$0xff]
          %v3932 = vld [vmem:[#allocation5 + $0x20] sm:$0xff]
          %v3933 = vld [vmem:[#allocation5 + $0x28] sm:$0xff]
          %v3934 = vld [vmem:[#allocation5 + $0x30] sm:$0xff]
          %v3935 = vld [vmem:[#allocation5 + $0x38] sm:$0xff]
          %v3936 = vld [vmem:[#allocation4] sm:$0xff]
          %v3937 = vld [vmem:[#allocation4 + $0x8] sm:$0xff]
          %v3938 = vld [vmem:[#allocation4 + $0x10] sm:$0xff]
          %v3939 = vld [vmem:[#allocation4 + $0x18] sm:$0xff]
          %v3940 = vld [vmem:[#allocation4 + $0x20] sm:$0xff]
          %v3941 = vld [vmem:[#allocation4 + $0x28] sm:$0xff]
          %v3942 = vld [vmem:[#allocation4 + $0x30] sm:$0xff]
          %v3943 = vld [vmem:[#allocation4 + $0x38] sm:$0xff]
          %v3944 = vrcp.pop %v3936
          %v3945 = vrcp.pop %v3937
          %v3946 = vrcp.pop %v3938
          %v3947 = vrcp.pop %v3939
          %v3948 = vrcp.pop %v3940
          %v3949 = vrcp.pop %v3941
          %v3950 = vrcp.pop %v3942
          %v3951 = vrcp.pop %v3943
          %3953 = vset.pattern.permute.xlu0 0
          %3954 = vperm.xlu0 %3953, %v3944
          %v3955 = vpop.permute.xlu0 %3954
          %3958 = vset.pattern.permute.xlu0 0
          %3959 = vperm.xlu0 %3958, %v3945
          %v3960 = vpop.permute.xlu0 %3959
          %3963 = vset.pattern.permute.xlu0 0
          %3964 = vperm.xlu0 %3963, %v3946
          %v3965 = vpop.permute.xlu0 %3964
          %3968 = vset.pattern.permute.xlu0 0
          %3969 = vperm.xlu0 %3968, %v3947
          %v3970 = vpop.permute.xlu0 %3969
          %3973 = vset.pattern.permute.xlu0 0
          %3974 = vperm.xlu0 %3973, %v3948
          %v3975 = vpop.permute.xlu0 %3974
          %3978 = vset.pattern.permute.xlu0 0
          %3979 = vperm.xlu0 %3978, %v3949
          %v3980 = vpop.permute.xlu0 %3979
          %3983 = vset.pattern.permute.xlu0 0
          %3984 = vperm.xlu0 %3983, %v3950
          %v3985 = vpop.permute.xlu0 %3984
          %3988 = vset.pattern.permute.xlu0 0
          %3989 = vperm.xlu0 %3988, %v3951
          %v3990 = vpop.permute.xlu0 %3989
          %v3992 = vmul.f32 %v3928, %v3955
          %v3993 = vmul.f32 %v3929, %v3960
          %v3994 = vmul.f32 %v3930, %v3965
          %v3995 = vmul.f32 %v3931, %v3970
          %v3996 = vmul.f32 %v3932, %v3975
          %v3997 = vmul.f32 %v3933, %v3980
          %v3998 = vmul.f32 %v3934, %v3985
          %v3999 = vmul.f32 %v3935, %v3990
          %v4000 = vpack.c.bf16 %v3992, %v3992
          %v4001 = vpack.c.bf16 %v3993, %v3993
          %v4002 = vpack.c.bf16 %v3994, %v3994
          %v4003 = vpack.c.bf16 %v3995, %v3995
          %v4004 = vpack.c.bf16 %v3996, %v3996
          %v4005 = vpack.c.bf16 %v3997, %v3997
          %v4006 = vpack.c.bf16 %v3998, %v3998
          %v4007 = vpack.c.bf16 %v3999, %v3999
          %v4008 = vld [vmem:[%s5] sm:$0xf]
          %v4009 = vld [vmem:[%s5 + $0x4] sm:$0xf]
          %v4010 = vld [vmem:[%s5 + $0x8] sm:$0xf]
          %v4011 = vld [vmem:[%s5 + $0xc] sm:$0xf]
          %v4012 = vld [vmem:[%s5 + $0x10] sm:$0xf]
          %v4013 = vld [vmem:[%s5 + $0x14] sm:$0xf]
          %v4014 = vld [vmem:[%s5 + $0x18] sm:$0xf]
          %v4015 = vld [vmem:[%s5 + $0x1c] sm:$0xf]
          %v4016 = vld [vmem:[%s5 + $0x20] sm:$0xf]
          %v4017 = vld [vmem:[%s5 + $0x24] sm:$0xf]
          %v4018 = vld [vmem:[%s5 + $0x28] sm:$0xf]
          %v4019 = vld [vmem:[%s5 + $0x2c] sm:$0xf]
          %v4020 = vld [vmem:[%s5 + $0x30] sm:$0xf]
          %v4021 = vld [vmem:[%s5 + $0x34] sm:$0xf]
          %v4022 = vld [vmem:[%s5 + $0x38] sm:$0xf]
          %v4023 = vld [vmem:[%s5 + $0x3c] sm:$0xf]
          %v4026 = vunpack.c.l.b16 %v4008
          %v4027 = vunpack.c.l.b16 %v4009
          %v4028 = vpack.c.b16 %v4027, %v4026
          %v4031 = vsel %vm2912, %v4000, 0
          %4033 = vmatprep.subr.bf16.mxu0 0
          %4034 = vmatpush1.bf16.msra.mxu0 0
          %4035 = vmatprep.subr.bf16.mxu0 0
          %4036 = vmatpush1.bf16.msra.mxu0 0
          %4037 = vmatprep.subr.bf16.mxu0 0
          %4038 = vmatpush1.bf16.msra.mxu0 0
          %4039 = vmatprep.subr.bf16.mxu0 0
          %4040 = vmatpush1.bf16.msra.mxu0 0
          %4041 = vmatprep.subr.bf16.mxu0 0
          %4042 = vmatpush1.bf16.msra.mxu0 0
          %4043 = vmatprep.subr.bf16.mxu0 0
          %4044 = vmatpush1.bf16.msra.mxu0 0
          %4045 = vmatprep.subr.bf16.mxu0 0
          %4046 = vmatpush1.bf16.msra.mxu0 0
          %4047 = vmatprep.subr.bf16.mxu0 0
          %4048 = vmatpush1.bf16.msra.mxu0 %v4028
          %4049 = vmatprep.subr.bf16.mxu0 0
          %4050 = vmatpush2.bf16.msra.mxu0 0
          %4051 = vmatprep.subr.bf16.mxu0 0
          %4052 = vmatpush2.bf16.msra.mxu0 0
          %4053 = vmatprep.subr.bf16.mxu0 0
          %4054 = vmatpush2.bf16.msra.mxu0 0
          %4055 = vmatprep.subr.bf16.mxu0 0
          %4056 = vmatpush2.bf16.msra.mxu0 0
          %4057 = vmatprep.subr.bf16.mxu0 0
          %4058 = vmatpush2.bf16.msra.mxu0 0
          %4059 = vmatprep.subr.bf16.mxu0 0
          %4060 = vmatpush2.bf16.msra.mxu0 0
          %4061 = vmatprep.subr.bf16.mxu0 0
          %4062 = vmatpush2.bf16.msra.mxu0 0
          %4063 = vmatprep.subr.bf16.mxu0 0
          %4064 = vmatpush2.bf16.msra.mxu0 0
          %4065 = vmatprep.mubr.bf16.mxu0 0
          %4066 = vmatmul.mubr.bf16.gmra.mxu0 %v4031
          %v4067 = vpop.f32.mrf.mxu0
          %v4068 = vadd.f32 0.0, %v4067
          %v4069 = vpop.f32.mrf.mxu0
          %v4070 = vpop.f32.mrf.mxu0
          %v4071 = vpop.f32.mrf.mxu0
          %4072 = vdwg.mxu0
          %v4075 = vunpack.c.l.b16 %v4010
          %v4076 = vunpack.c.l.b16 %v4011
          %v4077 = vpack.c.b16 %v4076, %v4075
          %v4080 = vsel %vm2912, %v4001, 0
          %4082 = vmatprep.subr.bf16.mxu0 0
          %4083 = vmatpush1.bf16.msra.mxu0 0
          %4084 = vmatprep.subr.bf16.mxu0 0
          %4085 = vmatpush1.bf16.msra.mxu0 0
          %4086 = vmatprep.subr.bf16.mxu0 0
          %4087 = vmatpush1.bf16.msra.mxu0 0
          %4088 = vmatprep.subr.bf16.mxu0 0
          %4089 = vmatpush1.bf16.msra.mxu0 0
          %4090 = vmatprep.subr.bf16.mxu0 0
          %4091 = vmatpush1.bf16.msra.mxu0 0
          %4092 = vmatprep.subr.bf16.mxu0 0
          %4093 = vmatpush1.bf16.msra.mxu0 0
          %4094 = vmatprep.subr.bf16.mxu0 0
          %4095 = vmatpush1.bf16.msra.mxu0 0
          %4096 = vmatprep.subr.bf16.mxu0 0
          %4097 = vmatpush1.bf16.msra.mxu0 %v4077
          %4098 = vmatprep.subr.bf16.mxu0 0
          %4099 = vmatpush2.bf16.msra.mxu0 0
          %4100 = vmatprep.subr.bf16.mxu0 0
          %4101 = vmatpush2.bf16.msra.mxu0 0
          %4102 = vmatprep.subr.bf16.mxu0 0
          %4103 = vmatpush2.bf16.msra.mxu0 0
          %4104 = vmatprep.subr.bf16.mxu0 0
          %4105 = vmatpush2.bf16.msra.mxu0 0
          %4106 = vmatprep.subr.bf16.mxu0 0
          %4107 = vmatpush2.bf16.msra.mxu0 0
          %4108 = vmatprep.subr.bf16.mxu0 0
          %4109 = vmatpush2.bf16.msra.mxu0 0
          %4110 = vmatprep.subr.bf16.mxu0 0
          %4111 = vmatpush2.bf16.msra.mxu0 0
          %4112 = vmatprep.subr.bf16.mxu0 0
          %4113 = vmatpush2.bf16.msra.mxu0 0
          %4114 = vmatprep.mubr.bf16.mxu0 0
          %4115 = vmatmul.mubr.bf16.gmra.mxu0 %v4080
          %v4116 = vpop.f32.mrf.mxu0
          %v4117 = vadd.f32 0.0, %v4116
          %v4118 = vpop.f32.mrf.mxu0
          %v4119 = vpop.f32.mrf.mxu0
          %v4120 = vpop.f32.mrf.mxu0
          %4121 = vdwg.mxu0
          %v4124 = vunpack.c.l.b16 %v4012
          %v4125 = vunpack.c.l.b16 %v4013
          %v4126 = vpack.c.b16 %v4125, %v4124
          %v4129 = vsel %vm2912, %v4002, 0
          %4131 = vmatprep.subr.bf16.mxu0 0
          %4132 = vmatpush1.bf16.msra.mxu0 0
          %4133 = vmatprep.subr.bf16.mxu0 0
          %4134 = vmatpush1.bf16.msra.mxu0 0
          %4135 = vmatprep.subr.bf16.mxu0 0
          %4136 = vmatpush1.bf16.msra.mxu0 0
          %4137 = vmatprep.subr.bf16.mxu0 0
          %4138 = vmatpush1.bf16.msra.mxu0 0
          %4139 = vmatprep.subr.bf16.mxu0 0
          %4140 = vmatpush1.bf16.msra.mxu0 0
          %4141 = vmatprep.subr.bf16.mxu0 0
          %4142 = vmatpush1.bf16.msra.mxu0 0
          %4143 = vmatprep.subr.bf16.mxu0 0
          %4144 = vmatpush1.bf16.msra.mxu0 0
          %4145 = vmatprep.subr.bf16.mxu0 0
          %4146 = vmatpush1.bf16.msra.mxu0 %v4126
          %4147 = vmatprep.subr.bf16.mxu0 0
          %4148 = vmatpush2.bf16.msra.mxu0 0
          %4149 = vmatprep.subr.bf16.mxu0 0
          %4150 = vmatpush2.bf16.msra.mxu0 0
          %4151 = vmatprep.subr.bf16.mxu0 0
          %4152 = vmatpush2.bf16.msra.mxu0 0
          %4153 = vmatprep.subr.bf16.mxu0 0
          %4154 = vmatpush2.bf16.msra.mxu0 0
          %4155 = vmatprep.subr.bf16.mxu0 0
          %4156 = vmatpush2.bf16.msra.mxu0 0
          %4157 = vmatprep.subr.bf16.mxu0 0
          %4158 = vmatpush2.bf16.msra.mxu0 0
          %4159 = vmatprep.subr.bf16.mxu0 0
          %4160 = vmatpush2.bf16.msra.mxu0 0
          %4161 = vmatprep.subr.bf16.mxu0 0
          %4162 = vmatpush2.bf16.msra.mxu0 0
          %4163 = vmatprep.mubr.bf16.mxu0 0
          %4164 = vmatmul.mubr.bf16.gmra.mxu0 %v4129
          %v4165 = vpop.f32.mrf.mxu0
          %v4166 = vadd.f32 0.0, %v4165
          %v4167 = vpop.f32.mrf.mxu0
          %v4168 = vpop.f32.mrf.mxu0
          %v4169 = vpop.f32.mrf.mxu0
          %4170 = vdwg.mxu0
          %v4173 = vunpack.c.l.b16 %v4014
          %v4174 = vunpack.c.l.b16 %v4015
          %v4175 = vpack.c.b16 %v4174, %v4173
          %v4178 = vsel %vm2912, %v4003, 0
          %4180 = vmatprep.subr.bf16.mxu0 0
          %4181 = vmatpush1.bf16.msra.mxu0 0
          %4182 = vmatprep.subr.bf16.mxu0 0
          %4183 = vmatpush1.bf16.msra.mxu0 0
          %4184 = vmatprep.subr.bf16.mxu0 0
          %4185 = vmatpush1.bf16.msra.mxu0 0
          %4186 = vmatprep.subr.bf16.mxu0 0
          %4187 = vmatpush1.bf16.msra.mxu0 0
          %4188 = vmatprep.subr.bf16.mxu0 0
          %4189 = vmatpush1.bf16.msra.mxu0 0
          %4190 = vmatprep.subr.bf16.mxu0 0
          %4191 = vmatpush1.bf16.msra.mxu0 0
          %4192 = vmatprep.subr.bf16.mxu0 0
          %4193 = vmatpush1.bf16.msra.mxu0 0
          %4194 = vmatprep.subr.bf16.mxu0 0
          %4195 = vmatpush1.bf16.msra.mxu0 %v4175
          %4196 = vmatprep.subr.bf16.mxu0 0
          %4197 = vmatpush2.bf16.msra.mxu0 0
          %4198 = vmatprep.subr.bf16.mxu0 0
          %4199 = vmatpush2.bf16.msra.mxu0 0
          %4200 = vmatprep.subr.bf16.mxu0 0
          %4201 = vmatpush2.bf16.msra.mxu0 0
          %4202 = vmatprep.subr.bf16.mxu0 0
          %4203 = vmatpush2.bf16.msra.mxu0 0
          %4204 = vmatprep.subr.bf16.mxu0 0
          %4205 = vmatpush2.bf16.msra.mxu0 0
          %4206 = vmatprep.subr.bf16.mxu0 0
          %4207 = vmatpush2.bf16.msra.mxu0 0
          %4208 = vmatprep.subr.bf16.mxu0 0
          %4209 = vmatpush2.bf16.msra.mxu0 0
          %4210 = vmatprep.subr.bf16.mxu0 0
          %4211 = vmatpush2.bf16.msra.mxu0 0
          %4212 = vmatprep.mubr.bf16.mxu0 0
          %4213 = vmatmul.mubr.bf16.gmra.mxu0 %v4178
          %v4214 = vpop.f32.mrf.mxu0
          %v4215 = vadd.f32 0.0, %v4214
          %v4216 = vpop.f32.mrf.mxu0
          %v4217 = vpop.f32.mrf.mxu0
          %v4218 = vpop.f32.mrf.mxu0
          %4219 = vdwg.mxu0
          %v4222 = vunpack.c.l.b16 %v4016
          %v4223 = vunpack.c.l.b16 %v4017
          %v4224 = vpack.c.b16 %v4223, %v4222
          %v4227 = vsel %vm2912, %v4004, 0
          %4229 = vmatprep.subr.bf16.mxu0 0
          %4230 = vmatpush1.bf16.msra.mxu0 0
          %4231 = vmatprep.subr.bf16.mxu0 0
          %4232 = vmatpush1.bf16.msra.mxu0 0
          %4233 = vmatprep.subr.bf16.mxu0 0
          %4234 = vmatpush1.bf16.msra.mxu0 0
          %4235 = vmatprep.subr.bf16.mxu0 0
          %4236 = vmatpush1.bf16.msra.mxu0 0
          %4237 = vmatprep.subr.bf16.mxu0 0
          %4238 = vmatpush1.bf16.msra.mxu0 0
          %4239 = vmatprep.subr.bf16.mxu0 0
          %4240 = vmatpush1.bf16.msra.mxu0 0
          %4241 = vmatprep.subr.bf16.mxu0 0
          %4242 = vmatpush1.bf16.msra.mxu0 0
          %4243 = vmatprep.subr.bf16.mxu0 0
          %4244 = vmatpush1.bf16.msra.mxu0 %v4224
          %4245 = vmatprep.subr.bf16.mxu0 0
          %4246 = vmatpush2.bf16.msra.mxu0 0
          %4247 = vmatprep.subr.bf16.mxu0 0
          %4248 = vmatpush2.bf16.msra.mxu0 0
          %4249 = vmatprep.subr.bf16.mxu0 0
          %4250 = vmatpush2.bf16.msra.mxu0 0
          %4251 = vmatprep.subr.bf16.mxu0 0
          %4252 = vmatpush2.bf16.msra.mxu0 0
          %4253 = vmatprep.subr.bf16.mxu0 0
          %4254 = vmatpush2.bf16.msra.mxu0 0
          %4255 = vmatprep.subr.bf16.mxu0 0
          %4256 = vmatpush2.bf16.msra.mxu0 0
          %4257 = vmatprep.subr.bf16.mxu0 0
          %4258 = vmatpush2.bf16.msra.mxu0 0
          %4259 = vmatprep.subr.bf16.mxu0 0
          %4260 = vmatpush2.bf16.msra.mxu0 0
          %4261 = vmatprep.mubr.bf16.mxu0 0
          %4262 = vmatmul.mubr.bf16.gmra.mxu0 %v4227
          %v4263 = vpop.f32.mrf.mxu0
          %v4264 = vadd.f32 0.0, %v4263
          %v4265 = vpop.f32.mrf.mxu0
          %v4266 = vpop.f32.mrf.mxu0
          %v4267 = vpop.f32.mrf.mxu0
          %4268 = vdwg.mxu0
          %v4271 = vunpack.c.l.b16 %v4018
          %v4272 = vunpack.c.l.b16 %v4019
          %v4273 = vpack.c.b16 %v4272, %v4271
          %v4276 = vsel %vm2912, %v4005, 0
          %4278 = vmatprep.subr.bf16.mxu0 0
          %4279 = vmatpush1.bf16.msra.mxu0 0
          %4280 = vmatprep.subr.bf16.mxu0 0
          %4281 = vmatpush1.bf16.msra.mxu0 0
          %4282 = vmatprep.subr.bf16.mxu0 0
          %4283 = vmatpush1.bf16.msra.mxu0 0
          %4284 = vmatprep.subr.bf16.mxu0 0
          %4285 = vmatpush1.bf16.msra.mxu0 0
          %4286 = vmatprep.subr.bf16.mxu0 0
          %4287 = vmatpush1.bf16.msra.mxu0 0
          %4288 = vmatprep.subr.bf16.mxu0 0
          %4289 = vmatpush1.bf16.msra.mxu0 0
          %4290 = vmatprep.subr.bf16.mxu0 0
          %4291 = vmatpush1.bf16.msra.mxu0 0
          %4292 = vmatprep.subr.bf16.mxu0 0
          %4293 = vmatpush1.bf16.msra.mxu0 %v4273
          %4294 = vmatprep.subr.bf16.mxu0 0
          %4295 = vmatpush2.bf16.msra.mxu0 0
          %4296 = vmatprep.subr.bf16.mxu0 0
          %4297 = vmatpush2.bf16.msra.mxu0 0
          %4298 = vmatprep.subr.bf16.mxu0 0
          %4299 = vmatpush2.bf16.msra.mxu0 0
          %4300 = vmatprep.subr.bf16.mxu0 0
          %4301 = vmatpush2.bf16.msra.mxu0 0
          %4302 = vmatprep.subr.bf16.mxu0 0
          %4303 = vmatpush2.bf16.msra.mxu0 0
          %4304 = vmatprep.subr.bf16.mxu0 0
          %4305 = vmatpush2.bf16.msra.mxu0 0
          %4306 = vmatprep.subr.bf16.mxu0 0
          %4307 = vmatpush2.bf16.msra.mxu0 0
          %4308 = vmatprep.subr.bf16.mxu0 0
          %4309 = vmatpush2.bf16.msra.mxu0 0
          %4310 = vmatprep.mubr.bf16.mxu0 0
          %4311 = vmatmul.mubr.bf16.gmra.mxu0 %v4276
          %v4312 = vpop.f32.mrf.mxu0
          %v4313 = vadd.f32 0.0, %v4312
          %v4314 = vpop.f32.mrf.mxu0
          %v4315 = vpop.f32.mrf.mxu0
          %v4316 = vpop.f32.mrf.mxu0
          %4317 = vdwg.mxu0
          %v4320 = vunpack.c.l.b16 %v4020
          %v4321 = vunpack.c.l.b16 %v4021
          %v4322 = vpack.c.b16 %v4321, %v4320
          %v4325 = vsel %vm2912, %v4006, 0
          %4327 = vmatprep.subr.bf16.mxu0 0
          %4328 = vmatpush1.bf16.msra.mxu0 0
          %4329 = vmatprep.subr.bf16.mxu0 0
          %4330 = vmatpush1.bf16.msra.mxu0 0
          %4331 = vmatprep.subr.bf16.mxu0 0
          %4332 = vmatpush1.bf16.msra.mxu0 0
          %4333 = vmatprep.subr.bf16.mxu0 0
          %4334 = vmatpush1.bf16.msra.mxu0 0
          %4335 = vmatprep.subr.bf16.mxu0 0
          %4336 = vmatpush1.bf16.msra.mxu0 0
          %4337 = vmatprep.subr.bf16.mxu0 0
          %4338 = vmatpush1.bf16.msra.mxu0 0
          %4339 = vmatprep.subr.bf16.mxu0 0
          %4340 = vmatpush1.bf16.msra.mxu0 0
          %4341 = vmatprep.subr.bf16.mxu0 0
          %4342 = vmatpush1.bf16.msra.mxu0 %v4322
          %4343 = vmatprep.subr.bf16.mxu0 0
          %4344 = vmatpush2.bf16.msra.mxu0 0
          %4345 = vmatprep.subr.bf16.mxu0 0
          %4346 = vmatpush2.bf16.msra.mxu0 0
          %4347 = vmatprep.subr.bf16.mxu0 0
          %4348 = vmatpush2.bf16.msra.mxu0 0
          %4349 = vmatprep.subr.bf16.mxu0 0
          %4350 = vmatpush2.bf16.msra.mxu0 0
          %4351 = vmatprep.subr.bf16.mxu0 0
          %4352 = vmatpush2.bf16.msra.mxu0 0
          %4353 = vmatprep.subr.bf16.mxu0 0
          %4354 = vmatpush2.bf16.msra.mxu0 0
          %4355 = vmatprep.subr.bf16.mxu0 0
          %4356 = vmatpush2.bf16.msra.mxu0 0
          %4357 = vmatprep.subr.bf16.mxu0 0
          %4358 = vmatpush2.bf16.msra.mxu0 0
          %4359 = vmatprep.mubr.bf16.mxu0 0
          %4360 = vmatmul.mubr.bf16.gmra.mxu0 %v4325
          %v4361 = vpop.f32.mrf.mxu0
          %v4362 = vadd.f32 0.0, %v4361
          %v4363 = vpop.f32.mrf.mxu0
          %v4364 = vpop.f32.mrf.mxu0
          %v4365 = vpop.f32.mrf.mxu0
          %4366 = vdwg.mxu0
          %v4369 = vunpack.c.l.b16 %v4022
          %v4370 = vunpack.c.l.b16 %v4023
          %v4371 = vpack.c.b16 %v4370, %v4369
          %v4374 = vsel %vm2912, %v4007, 0
          %4376 = vmatprep.subr.bf16.mxu0 0
          %4377 = vmatpush1.bf16.msra.mxu0 0
          %4378 = vmatprep.subr.bf16.mxu0 0
          %4379 = vmatpush1.bf16.msra.mxu0 0
          %4380 = vmatprep.subr.bf16.mxu0 0
          %4381 = vmatpush1.bf16.msra.mxu0 0
          %4382 = vmatprep.subr.bf16.mxu0 0
          %4383 = vmatpush1.bf16.msra.mxu0 0
          %4384 = vmatprep.subr.bf16.mxu0 0
          %4385 = vmatpush1.bf16.msra.mxu0 0
          %4386 = vmatprep.subr.bf16.mxu0 0
          %4387 = vmatpush1.bf16.msra.mxu0 0
          %4388 = vmatprep.subr.bf16.mxu0 0
          %4389 = vmatpush1.bf16.msra.mxu0 0
          %4390 = vmatprep.subr.bf16.mxu0 0
          %4391 = vmatpush1.bf16.msra.mxu0 %v4371
          %4392 = vmatprep.subr.bf16.mxu0 0
          %4393 = vmatpush2.bf16.msra.mxu0 0
          %4394 = vmatprep.subr.bf16.mxu0 0
          %4395 = vmatpush2.bf16.msra.mxu0 0
          %4396 = vmatprep.subr.bf16.mxu0 0
          %4397 = vmatpush2.bf16.msra.mxu0 0
          %4398 = vmatprep.subr.bf16.mxu0 0
          %4399 = vmatpush2.bf16.msra.mxu0 0
          %4400 = vmatprep.subr.bf16.mxu0 0
          %4401 = vmatpush2.bf16.msra.mxu0 0
          %4402 = vmatprep.subr.bf16.mxu0 0
          %4403 = vmatpush2.bf16.msra.mxu0 0
          %4404 = vmatprep.subr.bf16.mxu0 0
          %4405 = vmatpush2.bf16.msra.mxu0 0
          %4406 = vmatprep.subr.bf16.mxu0 0
          %4407 = vmatpush2.bf16.msra.mxu0 0
          %4408 = vmatprep.mubr.bf16.mxu0 0
          %4409 = vmatmul.mubr.bf16.gmra.mxu0 %v4374
          %v4410 = vpop.f32.mrf.mxu0
          %v4411 = vadd.f32 0.0, %v4410
          %v4412 = vpop.f32.mrf.mxu0
          %v4413 = vpop.f32.mrf.mxu0
          %v4414 = vpop.f32.mrf.mxu0
          %4415 = vdwg.mxu0
          %v4416 = vadd.f32 %v4068, %v4117
          %v4417 = vadd.f32 %v4416, %v4166
          %v4418 = vadd.f32 %v4417, %v4215
          %v4419 = vadd.f32 %v4418, %v4264
          %v4420 = vadd.f32 %v4419, %v4313
          %v4421 = vadd.f32 %v4420, %v4362
          %v4422 = vadd.f32 %v4421, %v4411
          %v4423 = vld [vmem:[%s6] sm:$0x1]
          %v4425 = vlaneseq
          %v4426 = vshrl.u32 %v4425, 7
          %v4427 = vsub.s32 0, %v4426
          %v4428 = vrot.slane %v4423, %v4427
          %v4430 = vadd.f32 %v4422, %v4428
          %4431 = vst [vmem:[%s323] sm:$0xff] %v4430
        $region56: #{tpu_custom_call.1} parent=47 // pred_fallthru
          _
        %s4432 = sand.u32 %s211, 1
        %s4433 = scalar_lea.sflag [#allocation7], %s4432
        %s4434 = sand.u32 %s211, 1
        %s4435 = smul.addr %s4434, 8
        %s4436 = scalar_lea.vmem [#allocation6], %s4435
        // Predicated region
        $region57: #{tpu_custom_call.1} parent=47 // pred_check
          %p4437 = pneg %p221
        $region58: #{tpu_custom_call.1} parent=47 // pred_check_branch
          %4439 = sbr.rel (%p4437) target = $region60
        $region59: #{tpu_custom_call.1} parent=47 // pred_region
          %s4441 = ssub.s32 128, 128
          %4442 = vsyncadd %s4433, %s4441
          %s4443 = smul.addr %s26, 2
          %s4444 = sadd.s32 %s27, %s4443
          %s4445 = smul.addr %s4444, 128
          %s4446 = scalar_lea.hbm %s7, %s4445
          %s4448 = sshll.u32 %s4436, 4
          %s4449 = int_to_ptr.vmem [resolvable:$true] %s4448
          %4451 = dma.vmem_to_hbm [thread:$0]  %s4449, 128, %s4446, %s4433
        $region60: #{tpu_custom_call.1} parent=47 // pred_fallthru
          _
      $region48: #{tpu_custom_call.1} parent=5 // pred_fallthru
        _
      %p4452 = scmp.le.s32.totalorder 2, %s16
      // Predicated region
      $region61: #{tpu_custom_call.1} parent=5 // pred_check
        %p4453 = pneg %p4452
      $region62: #{tpu_custom_call.1} parent=5 // pred_check_branch
        %4455 = sbr.rel (%p4453) target = $region64
      $region63: #{tpu_custom_call.1} parent=5 // pred_region
        %s4456 = ssub.s32 %s16, 2
        // Predicated region
        $region65: #{tpu_custom_call.1} parent=63 // pred_check
          %p4457 = pneg %p227
        $region66: #{tpu_custom_call.1} parent=63 // pred_check_branch
          %4459 = sbr.rel (%p4457) target = $region68
        $region67: #{tpu_custom_call.1} parent=63 // pred_region
          %s4460 = sand.u32 %s212, 1
          %s4461 = scalar_lea.sflag [#allocation7], %s4460
          %s4462 = sand.u32 %s212, 1
          %s4463 = smul.addr %s4462, 8
          %s4464 = scalar_lea.vmem [#allocation6], %s4463
          %4465 = dma.done %s4461, 128
        $region68: #{tpu_custom_call.1} parent=63 // pred_fallthru
          _
      $region64: #{tpu_custom_call.1} parent=5 // pred_fallthru
        _
    $region6: #{tpu_custom_call.1} parent=1 // loop_footer
      %s20 = sadd.s32 1, %s16
    $region7: #{tpu_custom_call.1} parent=1 // loop_footer_branch
      %15 = sbr.rel target = $region3
    $region8: #{tpu_custom_call.1} parent=1 // loop_exit
      _
    %4466 = vsyncpa [#allocation7], 1
    %s4467 = scalar_lea.sflag [#allocation7], 1
    %4468 = vsyncpa %s4467, 1

</llo_original>
